<compile_context>
chip_gen: v6e
topology: v6e:2x2x1
jax: 0.10.0
libtpu: 0.0.40
codegen_flags: <defaults>
</compile_context>

<pallas_src>
import functools

import jax
import jax.numpy as jnp
from jax.experimental import pallas as pl
from jax.experimental.pallas import tpu as pltpu


# ----------------------------- VMEM budget ---------------------------------- #

def _vmem_limit_bytes():
    # v5e/v6e: 128 MiB physical -> allow ~96 MiB.  v7x: 64 MiB -> stay <= 48 MiB.
    try:
        phys = int(pltpu.get_tpu_info().vmem_capacity_bytes)
    except Exception:
        phys = 64 * 1024 * 1024
    return int(min(max(phys - 16 * 1024 * 1024, 32 * 1024 * 1024),
                   96 * 1024 * 1024))


_VMEM_LIMIT = _vmem_limit_bytes()


# ----------------------------- Pallas kernels ------------------------------- #

def _upsample_phase_kernel(x_ref, w_ref, b_ref, o_ref, *, h1, w1, c):
    """ConvTranspose2d(3, padding=1, stride=2) via sub-pixel phases, fully fused.

    x_ref: (1, h1+1, w1+1, cin)  bottom/right-padded low-res input.
    w_ref: (4*cin, 4*c)          phase-packed weights, b_ref: (1, 4*c).
    o_ref: (1, h1+1, 2, w1+1, 2*c) -- row-major identical to the zero-padded
           upsampled map (1, 2*h1+2, 2*w1+2, c): pixel-shuffle, the crop to
           2*h1-1, the F.pad and the 3x3-conv halo all happen in this store.
    """
    x = x_ref[0]                                               # (h1+1, w1+1, cin)
    pieces = [x[dy:dy + h1, dx:dx + w1, :] for dy in (0, 1) for dx in (0, 1)]
    p = jnp.concatenate(pieces, axis=-1)                       # (h1, w1, 4*cin)
    acc = jnp.dot(p.reshape(h1 * w1, p.shape[-1]), w_ref[...],
                  preferred_element_type=jnp.float32)          # (h1*w1, 4*c)
    acc = (acc + b_ref[...]).astype(o_ref.dtype)

    o_ref[...] = jnp.zeros(o_ref.shape, o_ref.dtype)           # halo + pad zeros
    # Phase (py, px) at low-res pixel (i, j) lands at padded-output coordinates
    # y = 2*i + py + 1 = 2*a + b_row,  x = 2*j + px + 1 = 2*aj + b_col.
    for py in (0, 1):
        a0, nr, b_row = (0, h1, 1) if py == 0 else (1, h1 - 1, 0)
        for px in (0, 1):
            j0, ncl, b_col = (0, w1, 1) if px == 0 else (1, w1 - 1, 0)
            if nr <= 0 or ncl <= 0:
                continue
            ph = acc[:, (2 * py + px) * c:(2 * py + px + 1) * c]
            ph = ph.reshape(h1, w1, c)[:nr, :ncl, :]
            o_ref[0, pl.ds(a0, nr), b_row,
                  pl.ds(j0, ncl), pl.ds(b_col * c, c)] = ph


def _tap_conv_kernel(*refs, taps, out_h, out_w, relu, pad_out):
    """out = [ReLU](concat_over_taps(inputs) @ W + b), one fused MXU matmul.

    refs = (*x_refs, w_ref, b_ref, o_ref).  x_refs[i] is a (1, Hp, Wp, C_i)
    zero-padded activation block read from HBM exactly once; taps[i] is its
    static list of (kh, kw) offsets (row AND column shifts done here in VMEM).
    If pad_out, the result is stored with its own 1-pixel zero halo so the
    next conv needs no XLA-side pad.
    """
    n_in = len(taps)
    x_refs, (w_ref, b_ref, o_ref) = refs[:n_in], refs[n_in:]

    pieces = []
    for r, tt in zip(x_refs, taps):
        x = r[0]                                               # (Hp, Wp, C)
        for kh, kw in tt:
            pieces.append(x[kh:kh + out_h, kw:kw + out_w, :])
    p = jnp.concatenate(pieces, axis=-1) if len(pieces) > 1 else pieces[0]

    acc = jnp.dot(p.reshape(out_h * out_w, p.shape[-1]), w_ref[...],
                  preferred_element_type=jnp.float32)          # fp32 accumulate
    acc = acc + b_ref[...]
    if relu:
        acc = jnp.maximum(acc, 0.0)
    y = acc.reshape(out_h, out_w, acc.shape[-1]).astype(o_ref.dtype)

    if pad_out:
        o_ref[...] = jnp.zeros(o_ref.shape, o_ref.dtype)
        o_ref[0, pl.ds(1, out_h), pl.ds(1, out_w), :] = y
    else:
        o_ref[0] = y


# --------------------------- pallas_call builders --------------------------- #

def _upsample_call(x1p, w_ph, b_ph, *, h1, w1, c, out_dtype):
    n, _, _, cin = x1p.shape
    kern = functools.partial(_upsample_phase_kernel, h1=h1, w1=w1, c=c)
    flops = 2 * n * h1 * w1 * (4 * cin) * (4 * c)
    out_bytes = n * (h1 + 1) * 2 * (w1 + 1) * 2 * c * jnp.dtype(out_dtype).itemsize
    bytes_accessed = int(x1p.size * x1p.dtype.itemsize +
                         w_ph.size * w_ph.dtype.itemsize + b_ph.size * 4 +
                         out_bytes)

    out5 = pl.pallas_call(
        kern,
        out_shape=jax.ShapeDtypeStruct((n, h1 + 1, 2, w1 + 1, 2 * c), out_dtype),
        grid=(n,),
        in_specs=[pl.BlockSpec((1, h1 + 1, w1 + 1, cin), lambda i: (i, 0, 0, 0)),
                  pl.BlockSpec(w_ph.shape, lambda i: (0, 0)),   # resident weights
                  pl.BlockSpec(b_ph.shape, lambda i: (0, 0))],
        out_specs=pl.BlockSpec((1, h1 + 1, 2, w1 + 1, 2 * c),
                               lambda i: (i, 0, 0, 0, 0)),
        compiler_params=pltpu.CompilerParams(
            dimension_semantics=("parallel",),
            vmem_limit_bytes=_VMEM_LIMIT),
        cost_estimate=pl.CostEstimate(flops=flops, transcendentals=0,
                                      bytes_accessed=bytes_accessed),
    )(x1p, w_ph, b_ph)
    # Row-major (n, h1+1, 2, w1+1, 2, c) == (n, 2h1+2, 2w1+2, c): free reshape.
    return out5.reshape(n, 2 * h1 + 2, 2 * w1 + 2, c)


def _tap_conv_call(inputs, taps, w, b, *, out_h, out_w, out_c, relu, pad_out,
                   out_dtype):
    n = inputs[0].shape[0]
    oshape = (n, out_h + 2, out_w + 2, out_c) if pad_out else (n, out_h, out_w, out_c)

    in_specs = [pl.BlockSpec((1,) + tuple(a.shape[1:]), lambda i: (i, 0, 0, 0))
                for a in inputs]
    in_specs += [pl.BlockSpec(w.shape, lambda i: (0, 0)),       # resident weights
                 pl.BlockSpec(b.shape, lambda i: (0, 0))]       # resident bias
    out_specs = pl.BlockSpec((1,) + oshape[1:], lambda i: (i, 0, 0, 0))

    k_total = sum(a.shape[3] * len(t) for a, t in zip(inputs, taps))
    flops = 2 * n * out_h * out_w * k_total * out_c
    bytes_accessed = int(sum(a.size * a.dtype.itemsize for a in inputs) +
                         w.size * w.dtype.itemsize + b.size * 4 +
                         oshape[0] * oshape[1] * oshape[2] * oshape[3] *
                         jnp.dtype(out_dtype).itemsize)

    kern = functools.partial(
        _tap_conv_kernel,
        taps=tuple(tuple(tuple(kk) for kk in t) for t in taps),
        out_h=out_h, out_w=out_w, relu=relu, pad_out=pad_out)
    return pl.pallas_call(
        kern,
        out_shape=jax.ShapeDtypeStruct(oshape, out_dtype),
        grid=(n,),
        in_specs=in_specs,
        out_specs=out_specs,
        compiler_params=pltpu.CompilerParams(
            dimension_semantics=("parallel",),
            vmem_limit_bytes=_VMEM_LIMIT),
        cost_estimate=pl.CostEstimate(flops=flops, transcendentals=0,
                                      bytes_accessed=bytes_accessed),
    )(*inputs, w, b)


# ------------------------------- forward ------------------------------------ #

_TAPS9 = tuple((kh, kw) for kh in range(3) for kw in range(3))


def unet_upsample_forward(params, x1_nchw, x2_nchw, scale_factor=2):
    assert scale_factor == 2  # TODO(synk): phase table only derived for stride 2.
    f32, cdt = jnp.float32, jnp.bfloat16

    x1 = jnp.transpose(x1_nchw, (0, 2, 3, 1)).astype(cdt)   # NCHW -> NHWC
    x2 = jnp.transpose(x2_nchw, (0, 2, 3, 1)).astype(cdt)
    n, h1, w1, cin = x1.shape
    _, h2, w2, c = x2.shape

    # ---- self.up : ConvTranspose2d(inC, C, 3, padding=1, stride=2) ----------
    # out[2i+py, 2j+px] = sum_q x1[(i,j)+dq] . Wp[q, (py,px)]
    wup = params['up_w'].astype(f32)                     # (Cin, C, 3, 3)
    zero = jnp.zeros((cin, c), f32)
    t = lambda kh, kw: wup[:, :, kh, kw]
    wq = [
        [t(1, 1), t(1, 2), t(2, 1), t(2, 2)],            # neighbor (i,   j  )
        [zero,    t(1, 0), zero,    t(2, 0)],            # neighbor (i,   j+1)
        [zero,    zero,    t(0, 1), t(0, 2)],            # neighbor (i+1, j  )
        [zero,    zero,    zero,    t(0, 0)],            # neighbor (i+1, j+1)
    ]
    w_ph = jnp.stack([jnp.stack(row, axis=1) for row in wq], axis=0)  # (4,Cin,4,C)
    w_ph = w_ph.reshape(4 * cin, 4 * c).astype(cdt)
    b_ph = jnp.tile(params['up_b'].astype(f32), 4).reshape(1, 4 * c)

    x1p = jnp.pad(x1, ((0, 0), (0, 1), (0, 1), (0, 0)))   # bottom/right halo
    # Kernel returns the upsampled map already cropped/padded to (2h1, 2w1) with
    # its 1-px conv halo: (n, 2h1+2, 2w1+2, c).
    upp = _upsample_call(x1p, w_ph, b_ph, h1=h1, w1=w1, c=c, out_dtype=cdt)
    if (h2, w2) != (2 * h1, 2 * w1):
        # Rare general diffX/diffY case: adjust in XLA (not hit in the test).
        upp = upp[:, :h2 + 2, :w2 + 2, :]
        upp = jnp.pad(upp, ((0, 0), (0, (h2 + 2) - upp.shape[1]),
                            (0, (w2 + 2) - upp.shape[2]), (0, 0)))

    # ---- BasicResConvBlock(2C -> C), BN folded (eval mode) -------------------
    eps = 1e-5
    s1 = params['bn1_g'] / jnp.sqrt(params['bn1_v'] + eps)
    w1m = jnp.transpose(params['c1_w'].astype(f32), (2, 3, 1, 0)) * s1   # (3,3,2C,C)
    b1 = ((params['c1_b'].astype(f32) - params['bn1_m']) * s1 + params['bn1_b'])
    w1_cat = jnp.concatenate([w1m[:, :, :c, :].reshape(9 * c, c),        # x2 taps
                              w1m[:, :, c:, :].reshape(9 * c, c)],       # up taps
                             axis=0).astype(cdt)                         # (18C, C)

    s2 = params['bn2_g'] / jnp.sqrt(params['bn2_v'] + eps)
    w2m = jnp.transpose(params['c2_w'].astype(f32), (2, 3, 1, 0)) * s2   # (3,3,C,C)
    b2 = ((params['c2_b'].astype(f32) - params['bn2_m']) * s2 + params['bn2_b'])
    ssc = params['bnsc_g'] / jnp.sqrt(params['bnsc_v'] + eps)
    wsc = jnp.transpose(params['sc_w'][:, :, 0, 0].astype(f32), (1, 0)) * ssc  # (2C,C)
    bsc = ((params['sc_b'].astype(f32) - params['bnsc_m']) * ssc + params['bnsc_b'])
    w2_cat = jnp.concatenate([w2m.reshape(9 * c, c),      # conv2 taps (9C)
                              wsc[:c], wsc[c:]],          # 1x1 shortcut (x2 | up)
                             axis=0).astype(cdt)          # (11C, C)
    b2_cat = (b2 + bsc).reshape(1, c)

    x2p = jnp.pad(x2, ((0, 0), (1, 1), (1, 1), (0, 0)))   # single halo pad

    # conv1(3x3, [x2|up] -> C) + BN + ReLU; output written WITH its 1-px halo.
    y1p = _tap_conv_call([x2p, upp], [_TAPS9, _TAPS9],
                         w1_cat, b1.reshape(1, c),
                         out_h=h2, out_w=w2, out_c=c, relu=True, pad_out=True,
                         out_dtype=cdt)                              # (N,H2+2,W2+2,C)

    # conv2(3x3)+BN + 1x1 shortcut(+BN) on [x2|up] + add + ReLU, fused (K=11C).
    out = _tap_conv_call([y1p, x2p, upp],
                         [_TAPS9, ((1, 1),), ((1, 1),)],
                         w2_cat, b2_cat, out_h=h2, out_w=w2, out_c=c,
                         relu=True, pad_out=False, out_dtype=f32)    # (N,H2,W2,C)

    # TODO(synk): returning NHWC here would save one full-tensor HBM pass, but
    # the reference module returns NCHW float32.
    return jnp.transpose(out, (0, 3, 1, 2))


# ----------------------------- parameter init ------------------------------- #

def init_params(key, in_c, c):
    ks = jax.random.split(key, 8)

    def u(k, shape, fan_in):
        bound = 1.0 / jnp.sqrt(float(fan_in))
        return jax.random.uniform(k, shape, jnp.float32, -bound, bound)

    p = {
        'up_w': u(ks[0], (in_c, c, 3, 3), in_c * 9),     # ConvTranspose2d weight
        'up_b': u(ks[1], (c,), in_c * 9),
        'c1_w': u(ks[2], (c, 2 * c, 3, 3), 2 * c * 9),   # Conv2d(2C, C, 3)
        'c1_b': u(ks[3], (c,), 2 * c * 9),
        'c2_w': u(ks[4], (c, c, 3, 3), c * 9),           # Conv2d(C, C, 3)
        'c2_b': u(ks[5], (c,), c * 9),
        'sc_w': u(ks[6], (c, 2 * c, 1, 1), 2 * c),       # Conv2d(2C, C, 1) shortcut
        'sc_b': u(ks[7], (c,), 2 * c),
    }
    for name in ('bn1', 'bn2', 'bnsc'):  # eval-mode BatchNorm stats/affine
        p[f'{name}_g'] = jnp.ones((c,), jnp.float32)
        p[f'{name}_b'] = jnp.zeros((c,), jnp.float32)
        p[f'{name}_m'] = jnp.zeros((c,), jnp.float32)
        p[f'{name}_v'] = jnp.ones((c,), jnp.float32)
    return p


# ---------------------------------- main ------------------------------------ #

if __name__ == "__main__":
    key = jax.random.PRNGKey(0)
    kx1, kx2, kp = jax.random.split(key, 3)

    N, IN_C, C = 2, 4, 8
    H1 = W1 = 8          # low-res feature map (decoder input)
    H2 = W2 = 16         # skip-connection feature map

    x1 = jax.random.normal(kx1, (N, IN_C, H1, W1), jnp.float32)
    x2 = jax.random.normal(kx2, (N, C, H2, W2), jnp.float32)
    params = init_params(kp, IN_C, C)

    out = jax.jit(unet_upsample_forward)(params, x1, x2)
    out = jax.block_until_ready(out)

    assert out.shape == (N, C, H2, W2), out.shape
    assert bool(jnp.all(jnp.isfinite(out)))
    print("KERNEL_OK")
</pallas_src>

<mosaic_0001>
module attributes {stable_mosaic.version = 11 : i64} {
  func.func @_upsample_phase_kernel(%arg0: i32, %arg1: memref<1x9x9x4xbf16, #tpu.memory_space<vmem>>, %arg2: memref<16x32xbf16, #tpu.memory_space<vmem>>, %arg3: memref<1x32xf32, #tpu.memory_space<vmem>>, %arg4: memref<1x9x2x9x16xbf16, #tpu.memory_space<vmem>>) attributes {dimension_semantics = [#tpu.dimension_semantics<parallel>], iteration_bounds = array<i64: 2>, scalar_prefetch = 0 : i64, scratch_operands = 0 : i64, tpu.core_type = #tpu.core_type<tc>, window_params = [{transform_indices = @transform_0, window_bounds = array<i64: 1, 9, 9, 4>}, {pipeline_mode = #tpu.pipeline_mode<synchronous>, transform_indices = @transform_1, window_bounds = array<i64: 16, 32>}, {pipeline_mode = #tpu.pipeline_mode<synchronous>, transform_indices = @transform_2, window_bounds = array<i64: 1, 32>}, {transform_indices = @transform_3, window_bounds = array<i64: 1, 9, 2, 9, 16>}]} {
    %c0 = arith.constant 0 : index
    %c0_0 = arith.constant 0 : index
    %c0_1 = arith.constant 0 : index
    %c0_2 = arith.constant 0 : index
    %0 = vector.load %arg1[%c0, %c0_0, %c0_1, %c0_2] : memref<1x9x9x4xbf16, #tpu.memory_space<vmem>>, vector<1x9x9x4xbf16>
    %1 = vector.shape_cast %0 : vector<1x9x9x4xbf16> to vector<9x9x4xbf16>
    %2 = vector.extract_strided_slice %1 {offsets = [0, 0, 0], sizes = [8, 8, 4], strides = [1, 1, 1]} : vector<9x9x4xbf16> to vector<8x8x4xbf16>
    %3 = vector.extract_strided_slice %1 {offsets = [0, 1, 0], sizes = [8, 8, 4], strides = [1, 1, 1]} : vector<9x9x4xbf16> to vector<8x8x4xbf16>
    %4 = vector.extract_strided_slice %1 {offsets = [1, 0, 0], sizes = [8, 8, 4], strides = [1, 1, 1]} : vector<9x9x4xbf16> to vector<8x8x4xbf16>
    %5 = vector.extract_strided_slice %1 {offsets = [1, 1, 0], sizes = [8, 8, 4], strides = [1, 1, 1]} : vector<9x9x4xbf16> to vector<8x8x4xbf16>
    %6 = tpu.concatenate %2, %3, %4, %5 in 2 : vector<8x8x4xbf16>, vector<8x8x4xbf16>, vector<8x8x4xbf16>, vector<8x8x4xbf16> -> vector<8x8x16xbf16>
    %7 = vector.shape_cast %6 : vector<8x8x16xbf16> to vector<64x16xbf16>
    %c0_3 = arith.constant 0 : index
    %c0_4 = arith.constant 0 : index
    %8 = vector.load %arg2[%c0_3, %c0_4] : memref<16x32xbf16, #tpu.memory_space<vmem>>, vector<16x32xbf16>
    %cst = arith.constant dense<0.000000e+00> : vector<64x32xf32>
    %9 = tpu.matmul %7, %8, %cst {dimension_numbers = #tpu.dot_dimension_numbers<[1], [0], [0], [1], [0, 0, 1, 1], [], []>} : vector<64x16xbf16>, vector<16x32xbf16>, vector<64x32xf32> -> vector<64x32xf32>
    %c0_5 = arith.constant 0 : index
    %c0_6 = arith.constant 0 : index
    %10 = vector.load %arg3[%c0_5, %c0_6] : memref<1x32xf32, #tpu.memory_space<vmem>>, vector<1x32xf32>
    %11 = vector.broadcast %10 : vector<1x32xf32> to vector<64x32xf32>
    %12 = arith.addf %9, %11 : vector<64x32xf32>
    %13 = arith.truncf %12 : vector<64x32xf32> to vector<64x32xbf16>
    %cst_7 = arith.constant 0.000000e+00 : bf16
    %14 = vector.broadcast %cst_7 : bf16 to vector<1x9x2x9x16xbf16>
    %c0_8 = arith.constant 0 : index
    %c0_9 = arith.constant 0 : index
    %c0_10 = arith.constant 0 : index
    %c0_11 = arith.constant 0 : index
    %c0_12 = arith.constant 0 : index
    %15 = vector.load %arg4[%c0_8, %c0_9, %c0_10, %c0_11, %c0_12] : memref<1x9x2x9x16xbf16, #tpu.memory_space<vmem>>, vector<1x9x2x9x16xbf16>
    tpu.vector_store %arg4[%c0_8, %c0_9, %c0_10, %c0_11, %c0_12], %14 {strides = array<i32>} : memref<1x9x2x9x16xbf16, #tpu.memory_space<vmem>>, vector<1x9x2x9x16xbf16>,
    %16 = vector.extract_strided_slice %13 {offsets = [0, 0], sizes = [64, 8], strides = [1, 1]} : vector<64x32xbf16> to vector<64x8xbf16>
    %17 = vector.shape_cast %16 : vector<64x8xbf16> to vector<8x8x8xbf16>
    %c0_13 = arith.constant 0 : index
    %c0_14 = arith.constant 0 : index
    %c1 = arith.constant 1 : index
    %c0_15 = arith.constant 0 : index
    %c8 = arith.constant 8 : index
    %18 = vector.load %arg4[%c0_13, %c0_14, %c1, %c0_15, %c8] : memref<1x9x2x9x16xbf16, #tpu.memory_space<vmem>>, vector<1x8x1x8x8xbf16>
    %19 = vector.shape_cast %18 : vector<1x8x1x8x8xbf16> to vector<8x8x8xbf16>
    %20 = vector.shape_cast %17 : vector<8x8x8xbf16> to vector<1x8x1x8x8xbf16>
    tpu.vector_store %arg4[%c0_13, %c0_14, %c1, %c0_15, %c8], %20 {strides = array<i32>} : memref<1x9x2x9x16xbf16, #tpu.memory_space<vmem>>, vector<1x8x1x8x8xbf16>,
    %21 = vector.extract_strided_slice %13 {offsets = [0, 8], sizes = [64, 8], strides = [1, 1]} : vector<64x32xbf16> to vector<64x8xbf16>
    %22 = vector.shape_cast %21 : vector<64x8xbf16> to vector<8x8x8xbf16>
    %23 = vector.extract_strided_slice %22 {offsets = [0, 0, 0], sizes = [8, 7, 8], strides = [1, 1, 1]} : vector<8x8x8xbf16> to vector<8x7x8xbf16>
    %c0_16 = arith.constant 0 : index
    %c0_17 = arith.constant 0 : index
    %c1_18 = arith.constant 1 : index
    %c1_19 = arith.constant 1 : index
    %c0_20 = arith.constant 0 : index
    %24 = vector.load %arg4[%c0_16, %c0_17, %c1_18, %c1_19, %c0_20] : memref<1x9x2x9x16xbf16, #tpu.memory_space<vmem>>, vector<1x8x1x7x8xbf16>
    %25 = vector.shape_cast %24 : vector<1x8x1x7x8xbf16> to vector<8x7x8xbf16>
    %26 = vector.shape_cast %23 : vector<8x7x8xbf16> to vector<1x8x1x7x8xbf16>
    tpu.vector_store %arg4[%c0_16, %c0_17, %c1_18, %c1_19, %c0_20], %26 {strides = array<i32>} : memref<1x9x2x9x16xbf16, #tpu.memory_space<vmem>>, vector<1x8x1x7x8xbf16>,
    %27 = vector.extract_strided_slice %13 {offsets = [0, 16], sizes = [64, 8], strides = [1, 1]} : vector<64x32xbf16> to vector<64x8xbf16>
    %28 = vector.shape_cast %27 : vector<64x8xbf16> to vector<8x8x8xbf16>
    %29 = vector.extract_strided_slice %28 {offsets = [0, 0, 0], sizes = [7, 8, 8], strides = [1, 1, 1]} : vector<8x8x8xbf16> to vector<7x8x8xbf16>
    %c0_21 = arith.constant 0 : index
    %c1_22 = arith.constant 1 : index
    %c0_23 = arith.constant 0 : index
    %c0_24 = arith.constant 0 : index
    %c8_25 = arith.constant 8 : index
    %30 = vector.load %arg4[%c0_21, %c1_22, %c0_23, %c0_24, %c8_25] : memref<1x9x2x9x16xbf16, #tpu.memory_space<vmem>>, vector<1x7x1x8x8xbf16>
    %31 = vector.shape_cast %30 : vector<1x7x1x8x8xbf16> to vector<7x8x8xbf16>
    %32 = vector.shape_cast %29 : vector<7x8x8xbf16> to vector<1x7x1x8x8xbf16>
    tpu.vector_store %arg4[%c0_21, %c1_22, %c0_23, %c0_24, %c8_25], %32 {strides = array<i32>} : memref<1x9x2x9x16xbf16, #tpu.memory_space<vmem>>, vector<1x7x1x8x8xbf16>,
    %33 = vector.extract_strided_slice %13 {offsets = [0, 24], sizes = [64, 8], strides = [1, 1]} : vector<64x32xbf16> to vector<64x8xbf16>
    %34 = vector.shape_cast %33 : vector<64x8xbf16> to vector<8x8x8xbf16>
    %35 = vector.extract_strided_slice %34 {offsets = [0, 0, 0], sizes = [7, 7, 8], strides = [1, 1, 1]} : vector<8x8x8xbf16> to vector<7x7x8xbf16>
    %c0_26 = arith.constant 0 : index
    %c1_27 = arith.constant 1 : index
    %c0_28 = arith.constant 0 : index
    %c1_29 = arith.constant 1 : index
    %c0_30 = arith.constant 0 : index
    %36 = vector.load %arg4[%c0_26, %c1_27, %c0_28, %c1_29, %c0_30] : memref<1x9x2x9x16xbf16, #tpu.memory_space<vmem>>, vector<1x7x1x7x8xbf16>
    %37 = vector.shape_cast %36 : vector<1x7x1x7x8xbf16> to vector<7x7x8xbf16>
    %38 = vector.shape_cast %35 : vector<7x7x8xbf16> to vector<1x7x1x7x8xbf16>
    tpu.vector_store %arg4[%c0_26, %c1_27, %c0_28, %c1_29, %c0_30], %38 {strides = array<i32>} : memref<1x9x2x9x16xbf16, #tpu.memory_space<vmem>>, vector<1x7x1x7x8xbf16>,
    return
  }
  func.func @transform_0(%arg0: i32) -> (i32, i32, i32, i32) {
    %c0_i32 = arith.constant 0 : i32
    %c0_i32_0 = arith.constant 0 : i32
    %c0_i32_1 = arith.constant 0 : i32
    %c0_i32_2 = arith.constant 0 : i32
    return %arg0, %c0_i32, %c0_i32_0, %c0_i32_1 : i32, i32, i32, i32
  }
  func.func @transform_1(%arg0: i32) -> (i32, i32) {
    %c0_i32 = arith.constant 0 : i32
    %c0_i32_0 = arith.constant 0 : i32
    %c0_i32_1 = arith.constant 0 : i32
    return %c0_i32, %c0_i32_0 : i32, i32
  }
  func.func @transform_2(%arg0: i32) -> (i32, i32) {
    %c0_i32 = arith.constant 0 : i32
    %c0_i32_0 = arith.constant 0 : i32
    %c0_i32_1 = arith.constant 0 : i32
    return %c0_i32, %c0_i32_0 : i32, i32
  }
  func.func @transform_3(%arg0: i32) -> (i32, i32, i32, i32, i32) {
    %c0_i32 = arith.constant 0 : i32
    %c0_i32_0 = arith.constant 0 : i32
    %c0_i32_1 = arith.constant 0 : i32
    %c0_i32_2 = arith.constant 0 : i32
    %c0_i32_3 = arith.constant 0 : i32
    return %arg0, %c0_i32, %c0_i32_0, %c0_i32_1, %c0_i32_2 : i32, i32, i32, i32, i32
  }
}

module attributes {stable_mosaic.version = 11 : i64} {
  func.func @_tap_conv_kernel(%arg0: i32, %arg1: memref<1x18x18x8xbf16, #tpu.memory_space<vmem>>, %arg2: memref<1x18x18x8xbf16, #tpu.memory_space<vmem>>, %arg3: memref<144x8xbf16, #tpu.memory_space<vmem>>, %arg4: memref<1x8xf32, #tpu.memory_space<vmem>>, %arg5: memref<1x18x18x8xbf16, #tpu.memory_space<vmem>>) attributes {dimension_semantics = [#tpu.dimension_semantics<parallel>], iteration_bounds = array<i64: 2>, scalar_prefetch = 0 : i64, scratch_operands = 0 : i64, tpu.core_type = #tpu.core_type<tc>, window_params = [{transform_indices = @transform_0, window_bounds = array<i64: 1, 18, 18, 8>}, {transform_indices = @transform_1, window_bounds = array<i64: 1, 18, 18, 8>}, {pipeline_mode = #tpu.pipeline_mode<synchronous>, transform_indices = @transform_2, window_bounds = array<i64: 144, 8>}, {pipeline_mode = #tpu.pipeline_mode<synchronous>, transform_indices = @transform_3, window_bounds = array<i64: 1, 8>}, {transform_indices = @transform_4, window_bounds = array<i64: 1, 18, 18, 8>}]} {
    %c0 = arith.constant 0 : index
    %c0_0 = arith.constant 0 : index
    %c0_1 = arith.constant 0 : index
    %c0_2 = arith.constant 0 : index
    %0 = vector.load %arg1[%c0, %c0_0, %c0_1, %c0_2] : memref<1x18x18x8xbf16, #tpu.memory_space<vmem>>, vector<1x18x18x8xbf16>
    %1 = vector.shape_cast %0 : vector<1x18x18x8xbf16> to vector<18x18x8xbf16>
    %2 = vector.extract_strided_slice %1 {offsets = [0, 0, 0], sizes = [16, 16, 8], strides = [1, 1, 1]} : vector<18x18x8xbf16> to vector<16x16x8xbf16>
    %3 = vector.extract_strided_slice %1 {offsets = [0, 1, 0], sizes = [16, 16, 8], strides = [1, 1, 1]} : vector<18x18x8xbf16> to vector<16x16x8xbf16>
    %4 = vector.extract_strided_slice %1 {offsets = [0, 2, 0], sizes = [16, 16, 8], strides = [1, 1, 1]} : vector<18x18x8xbf16> to vector<16x16x8xbf16>
    %5 = vector.extract_strided_slice %1 {offsets = [1, 0, 0], sizes = [16, 16, 8], strides = [1, 1, 1]} : vector<18x18x8xbf16> to vector<16x16x8xbf16>
    %6 = vector.extract_strided_slice %1 {offsets = [1, 1, 0], sizes = [16, 16, 8], strides = [1, 1, 1]} : vector<18x18x8xbf16> to vector<16x16x8xbf16>
    %7 = vector.extract_strided_slice %1 {offsets = [1, 2, 0], sizes = [16, 16, 8], strides = [1, 1, 1]} : vector<18x18x8xbf16> to vector<16x16x8xbf16>
    %8 = vector.extract_strided_slice %1 {offsets = [2, 0, 0], sizes = [16, 16, 8], strides = [1, 1, 1]} : vector<18x18x8xbf16> to vector<16x16x8xbf16>
    %9 = vector.extract_strided_slice %1 {offsets = [2, 1, 0], sizes = [16, 16, 8], strides = [1, 1, 1]} : vector<18x18x8xbf16> to vector<16x16x8xbf16>
    %10 = vector.extract_strided_slice %1 {offsets = [2, 2, 0], sizes = [16, 16, 8], strides = [1, 1, 1]} : vector<18x18x8xbf16> to vector<16x16x8xbf16>
    %c0_3 = arith.constant 0 : index
    %c0_4 = arith.constant 0 : index
    %c0_5 = arith.constant 0 : index
    %c0_6 = arith.constant 0 : index
    %11 = vector.load %arg2[%c0_3, %c0_4, %c0_5, %c0_6] : memref<1x18x18x8xbf16, #tpu.memory_space<vmem>>, vector<1x18x18x8xbf16>
    %12 = vector.shape_cast %11 : vector<1x18x18x8xbf16> to vector<18x18x8xbf16>
    %13 = vector.extract_strided_slice %12 {offsets = [0, 0, 0], sizes = [16, 16, 8], strides = [1, 1, 1]} : vector<18x18x8xbf16> to vector<16x16x8xbf16>
    %14 = vector.extract_strided_slice %12 {offsets = [0, 1, 0], sizes = [16, 16, 8], strides = [1, 1, 1]} : vector<18x18x8xbf16> to vector<16x16x8xbf16>
    %15 = vector.extract_strided_slice %12 {offsets = [0, 2, 0], sizes = [16, 16, 8], strides = [1, 1, 1]} : vector<18x18x8xbf16> to vector<16x16x8xbf16>
    %16 = vector.extract_strided_slice %12 {offsets = [1, 0, 0], sizes = [16, 16, 8], strides = [1, 1, 1]} : vector<18x18x8xbf16> to vector<16x16x8xbf16>
    %17 = vector.extract_strided_slice %12 {offsets = [1, 1, 0], sizes = [16, 16, 8], strides = [1, 1, 1]} : vector<18x18x8xbf16> to vector<16x16x8xbf16>
    %18 = vector.extract_strided_slice %12 {offsets = [1, 2, 0], sizes = [16, 16, 8], strides = [1, 1, 1]} : vector<18x18x8xbf16> to vector<16x16x8xbf16>
    %19 = vector.extract_strided_slice %12 {offsets = [2, 0, 0], sizes = [16, 16, 8], strides = [1, 1, 1]} : vector<18x18x8xbf16> to vector<16x16x8xbf16>
    %20 = vector.extract_strided_slice %12 {offsets = [2, 1, 0], sizes = [16, 16, 8], strides = [1, 1, 1]} : vector<18x18x8xbf16> to vector<16x16x8xbf16>
    %21 = vector.extract_strided_slice %12 {offsets = [2, 2, 0], sizes = [16, 16, 8], strides = [1, 1, 1]} : vector<18x18x8xbf16> to vector<16x16x8xbf16>
    %22 = tpu.concatenate %2, %3, %4, %5, %6, %7, %8, %9, %10, %13, %14, %15, %16, %17, %18, %19 in 2 : vector<16x16x8xbf16>, vector<16x16x8xbf16>, vector<16x16x8xbf16>, vector<16x16x8xbf16>, vector<16x16x8xbf16>, vector<16x16x8xbf16>, vector<16x16x8xbf16>, vector<16x16x8xbf16>, vector<16x16x8xbf16>, vector<16x16x8xbf16>, vector<16x16x8xbf16>, vector<16x16x8xbf16>, vector<16x16x8xbf16>, vector<16x16x8xbf16>, vector<16x16x8xbf16>, vector<16x16x8xbf16> -> vector<16x16x128xbf16>
    %23 = tpu.concatenate %20, %21 in 2 : vector<16x16x8xbf16>, vector<16x16x8xbf16> -> vector<16x16x16xbf16>
    %24 = tpu.concatenate %22, %23 in 2 : vector<16x16x128xbf16>, vector<16x16x16xbf16> -> vector<16x16x144xbf16>
    %25 = vector.shape_cast %24 : vector<16x16x144xbf16> to vector<256x144xbf16>
    %c0_7 = arith.constant 0 : index
    %c0_8 = arith.constant 0 : index
    %26 = vector.load %arg3[%c0_7, %c0_8] : memref<144x8xbf16, #tpu.memory_space<vmem>>, vector<144x8xbf16>
    %cst = arith.constant dense<0.000000e+00> : vector<256x8xf32>
    %27 = tpu.matmul %25, %26, %cst {dimension_numbers = #tpu.dot_dimension_numbers<[1], [0], [0], [1], [0, 0, 1, 1], [], []>} : vector<256x144xbf16>, vector<144x8xbf16>, vector<256x8xf32> -> vector<256x8xf32>
    %c0_9 = arith.constant 0 : index
    %c0_10 = arith.constant 0 : index
    %28 = vector.load %arg4[%c0_9, %c0_10] : memref<1x8xf32, #tpu.memory_space<vmem>>, vector<1x8xf32>
    %29 = vector.broadcast %28 : vector<1x8xf32> to vector<256x8xf32>
    %30 = arith.addf %27, %29 : vector<256x8xf32>
    %cst_11 = arith.constant 0.000000e+00 : f32
    %31 = vector.broadcast %cst_11 : f32 to vector<256x8xf32>
    %32 = arith.maximumf %30, %31 : vector<256x8xf32>
    %33 = vector.shape_cast %32 : vector<256x8xf32> to vector<16x16x8xf32>
    %34 = arith.truncf %33 : vector<16x16x8xf32> to vector<16x16x8xbf16>
    %cst_12 = arith.constant 0.000000e+00 : bf16
    %35 = vector.broadcast %cst_12 : bf16 to vector<1x18x18x8xbf16>
    %c0_13 = arith.constant 0 : index
    %c0_14 = arith.constant 0 : index
    %c0_15 = arith.constant 0 : index
    %c0_16 = arith.constant 0 : index
    %36 = vector.load %arg5[%c0_13, %c0_14, %c0_15, %c0_16] : memref<1x18x18x8xbf16, #tpu.memory_space<vmem>>, vector<1x18x18x8xbf16>
    tpu.vector_store %arg5[%c0_13, %c0_14, %c0_15, %c0_16], %35 {strides = array<i32>} : memref<1x18x18x8xbf16, #tpu.memory_space<vmem>>, vector<1x18x18x8xbf16>,
    %c0_17 = arith.constant 0 : index
    %c1 = arith.constant 1 : index
    %c1_18 = arith.constant 1 : index
    %c0_19 = arith.constant 0 : index
    %37 = vector.load %arg5[%c0_17, %c1, %c1_18, %c0_19] : memref<1x18x18x8xbf16, #tpu.memory_space<vmem>>, vector<1x16x16x8xbf16>
    %38 = vector.shape_cast %37 : vector<1x16x16x8xbf16> to vector<16x16x8xbf16>
    %39 = vector.shape_cast %34 : vector<16x16x8xbf16> to vector<1x16x16x8xbf16>
    tpu.vector_store %arg5[%c0_17, %c1, %c1_18, %c0_19], %39 {strides = array<i32>} : memref<1x18x18x8xbf16, #tpu.memory_space<vmem>>, vector<1x16x16x8xbf16>,
    return
  }
  func.func @transform_0(%arg0: i32) -> (i32, i32, i32, i32) {
    %c0_i32 = arith.constant 0 : i32
    %c0_i32_0 = arith.constant 0 : i32
    %c0_i32_1 = arith.constant 0 : i32
    %c0_i32_2 = arith.constant 0 : i32
    return %arg0, %c0_i32, %c0_i32_0, %c0_i32_1 : i32, i32, i32, i32
  }
  func.func @transform_1(%arg0: i32) -> (i32, i32, i32, i32) {
    %c0_i32 = arith.constant 0 : i32
    %c0_i32_0 = arith.constant 0 : i32
    %c0_i32_1 = arith.constant 0 : i32
    %c0_i32_2 = arith.constant 0 : i32
    return %arg0, %c0_i32, %c0_i32_0, %c0_i32_1 : i32, i32, i32, i32
  }
  func.func @transform_2(%arg0: i32) -> (i32, i32) {
    %c0_i32 = arith.constant 0 : i32
    %c0_i32_0 = arith.constant 0 : i32
    %c0_i32_1 = arith.constant 0 : i32
    return %c0_i32, %c0_i32_0 : i32, i32
  }
  func.func @transform_3(%arg0: i32) -> (i32, i32) {
    %c0_i32 = arith.constant 0 : i32
    %c0_i32_0 = arith.constant 0 : i32
    %c0_i32_1 = arith.constant 0 : i32
    return %c0_i32, %c0_i32_0 : i32, i32
  }
  func.func @transform_4(%arg0: i32) -> (i32, i32, i32, i32) {
    %c0_i32 = arith.constant 0 : i32
    %c0_i32_0 = arith.constant 0 : i32
    %c0_i32_1 = arith.constant 0 : i32
    %c0_i32_2 = arith.constant 0 : i32
    return %arg0, %c0_i32, %c0_i32_0, %c0_i32_1 : i32, i32, i32, i32
  }
}

module attributes {stable_mosaic.version = 11 : i64} {
  func.func @_tap_conv_kernel(%arg0: i32, %arg1: memref<1x18x18x8xbf16, #tpu.memory_space<vmem>>, %arg2: memref<1x18x18x8xbf16, #tpu.memory_space<vmem>>, %arg3: memref<1x18x18x8xbf16, #tpu.memory_space<vmem>>, %arg4: memref<88x8xbf16, #tpu.memory_space<vmem>>, %arg5: memref<1x8xf32, #tpu.memory_space<vmem>>, %arg6: memref<1x16x16x8xf32, #tpu.memory_space<vmem>>) attributes {dimension_semantics = [#tpu.dimension_semantics<parallel>], iteration_bounds = array<i64: 2>, scalar_prefetch = 0 : i64, scratch_operands = 0 : i64, tpu.core_type = #tpu.core_type<tc>, window_params = [{transform_indices = @transform_0, window_bounds = array<i64: 1, 18, 18, 8>}, {transform_indices = @transform_1, window_bounds = array<i64: 1, 18, 18, 8>}, {transform_indices = @transform_2, window_bounds = array<i64: 1, 18, 18, 8>}, {pipeline_mode = #tpu.pipeline_mode<synchronous>, transform_indices = @transform_3, window_bounds = array<i64: 88, 8>}, {pipeline_mode = #tpu.pipeline_mode<synchronous>, transform_indices = @transform_4, window_bounds = array<i64: 1, 8>}, {transform_indices = @transform_5, window_bounds = array<i64: 1, 16, 16, 8>}]} {
    %c0 = arith.constant 0 : index
    %c0_0 = arith.constant 0 : index
    %c0_1 = arith.constant 0 : index
    %c0_2 = arith.constant 0 : index
    %0 = vector.load %arg1[%c0, %c0_0, %c0_1, %c0_2] : memref<1x18x18x8xbf16, #tpu.memory_space<vmem>>, vector<1x18x18x8xbf16>
    %1 = vector.shape_cast %0 : vector<1x18x18x8xbf16> to vector<18x18x8xbf16>
    %2 = vector.extract_strided_slice %1 {offsets = [0, 0, 0], sizes = [16, 16, 8], strides = [1, 1, 1]} : vector<18x18x8xbf16> to vector<16x16x8xbf16>
    %3 = vector.extract_strided_slice %1 {offsets = [0, 1, 0], sizes = [16, 16, 8], strides = [1, 1, 1]} : vector<18x18x8xbf16> to vector<16x16x8xbf16>
    %4 = vector.extract_strided_slice %1 {offsets = [0, 2, 0], sizes = [16, 16, 8], strides = [1, 1, 1]} : vector<18x18x8xbf16> to vector<16x16x8xbf16>
    %5 = vector.extract_strided_slice %1 {offsets = [1, 0, 0], sizes = [16, 16, 8], strides = [1, 1, 1]} : vector<18x18x8xbf16> to vector<16x16x8xbf16>
    %6 = vector.extract_strided_slice %1 {offsets = [1, 1, 0], sizes = [16, 16, 8], strides = [1, 1, 1]} : vector<18x18x8xbf16> to vector<16x16x8xbf16>
    %7 = vector.extract_strided_slice %1 {offsets = [1, 2, 0], sizes = [16, 16, 8], strides = [1, 1, 1]} : vector<18x18x8xbf16> to vector<16x16x8xbf16>
    %8 = vector.extract_strided_slice %1 {offsets = [2, 0, 0], sizes = [16, 16, 8], strides = [1, 1, 1]} : vector<18x18x8xbf16> to vector<16x16x8xbf16>
    %9 = vector.extract_strided_slice %1 {offsets = [2, 1, 0], sizes = [16, 16, 8], strides = [1, 1, 1]} : vector<18x18x8xbf16> to vector<16x16x8xbf16>
    %10 = vector.extract_strided_slice %1 {offsets = [2, 2, 0], sizes = [16, 16, 8], strides = [1, 1, 1]} : vector<18x18x8xbf16> to vector<16x16x8xbf16>
    %c0_3 = arith.constant 0 : index
    %c0_4 = arith.constant 0 : index
    %c0_5 = arith.constant 0 : index
    %c0_6 = arith.constant 0 : index
    %11 = vector.load %arg2[%c0_3, %c0_4, %c0_5, %c0_6] : memref<1x18x18x8xbf16, #tpu.memory_space<vmem>>, vector<1x18x18x8xbf16>
    %12 = vector.shape_cast %11 : vector<1x18x18x8xbf16> to vector<18x18x8xbf16>
    %13 = vector.extract_strided_slice %12 {offsets = [1, 1, 0], sizes = [16, 16, 8], strides = [1, 1, 1]} : vector<18x18x8xbf16> to vector<16x16x8xbf16>
    %c0_7 = arith.constant 0 : index
    %c0_8 = arith.constant 0 : index
    %c0_9 = arith.constant 0 : index
    %c0_10 = arith.constant 0 : index
    %14 = vector.load %arg3[%c0_7, %c0_8, %c0_9, %c0_10] : memref<1x18x18x8xbf16, #tpu.memory_space<vmem>>, vector<1x18x18x8xbf16>
    %15 = vector.shape_cast %14 : vector<1x18x18x8xbf16> to vector<18x18x8xbf16>
    %16 = vector.extract_strided_slice %15 {offsets = [1, 1, 0], sizes = [16, 16, 8], strides = [1, 1, 1]} : vector<18x18x8xbf16> to vector<16x16x8xbf16>
    %17 = tpu.concatenate %2, %3, %4, %5, %6, %7, %8, %9, %10, %13, %16 in 2 : vector<16x16x8xbf16>, vector<16x16x8xbf16>, vector<16x16x8xbf16>, vector<16x16x8xbf16>, vector<16x16x8xbf16>, vector<16x16x8xbf16>, vector<16x16x8xbf16>, vector<16x16x8xbf16>, vector<16x16x8xbf16>, vector<16x16x8xbf16>, vector<16x16x8xbf16> -> vector<16x16x88xbf16>
    %18 = vector.shape_cast %17 : vector<16x16x88xbf16> to vector<256x88xbf16>
    %c0_11 = arith.constant 0 : index
    %c0_12 = arith.constant 0 : index
    %19 = vector.load %arg4[%c0_11, %c0_12] : memref<88x8xbf16, #tpu.memory_space<vmem>>, vector<88x8xbf16>
    %cst = arith.constant dense<0.000000e+00> : vector<256x8xf32>
    %20 = tpu.matmul %18, %19, %cst {dimension_numbers = #tpu.dot_dimension_numbers<[1], [0], [0], [1], [0, 0, 1, 1], [], []>} : vector<256x88xbf16>, vector<88x8xbf16>, vector<256x8xf32> -> vector<256x8xf32>
    %c0_13 = arith.constant 0 : index
    %c0_14 = arith.constant 0 : index
    %21 = vector.load %arg5[%c0_13, %c0_14] : memref<1x8xf32, #tpu.memory_space<vmem>>, vector<1x8xf32>
    %22 = vector.broadcast %21 : vector<1x8xf32> to vector<256x8xf32>
    %23 = arith.addf %20, %22 : vector<256x8xf32>
    %cst_15 = arith.constant 0.000000e+00 : f32
    %24 = vector.broadcast %cst_15 : f32 to vector<256x8xf32>
    %25 = arith.maximumf %23, %24 : vector<256x8xf32>
    %26 = vector.shape_cast %25 : vector<256x8xf32> to vector<16x16x8xf32>
    %c0_16 = arith.constant 0 : index
    %c0_17 = arith.constant 0 : index
    %c0_18 = arith.constant 0 : index
    %c0_19 = arith.constant 0 : index
    %27 = vector.load %arg6[%c0_16, %c0_17, %c0_18, %c0_19] : memref<1x16x16x8xf32, #tpu.memory_space<vmem>>, vector<1x16x16x8xf32>
    %28 = vector.shape_cast %27 : vector<1x16x16x8xf32> to vector<16x16x8xf32>
    %29 = vector.shape_cast %26 : vector<16x16x8xf32> to vector<1x16x16x8xf32>
    tpu.vector_store %arg6[%c0_16, %c0_17, %c0_18, %c0_19], %29 {strides = array<i32>} : memref<1x16x16x8xf32, #tpu.memory_space<vmem>>, vector<1x16x16x8xf32>,
    return
  }
  func.func @transform_0(%arg0: i32) -> (i32, i32, i32, i32) {
    %c0_i32 = arith.constant 0 : i32
    %c0_i32_0 = arith.constant 0 : i32
    %c0_i32_1 = arith.constant 0 : i32
    %c0_i32_2 = arith.constant 0 : i32
    return %arg0, %c0_i32, %c0_i32_0, %c0_i32_1 : i32, i32, i32, i32
  }
  func.func @transform_1(%arg0: i32) -> (i32, i32, i32, i32) {
    %c0_i32 = arith.constant 0 : i32
    %c0_i32_0 = arith.constant 0 : i32
    %c0_i32_1 = arith.constant 0 : i32
    %c0_i32_2 = arith.constant 0 : i32
    return %arg0, %c0_i32, %c0_i32_0, %c0_i32_1 : i32, i32, i32, i32
  }
  func.func @transform_2(%arg0: i32) -> (i32, i32, i32, i32) {
    %c0_i32 = arith.constant 0 : i32
    %c0_i32_0 = arith.constant 0 : i32
    %c0_i32_1 = arith.constant 0 : i32
    %c0_i32_2 = arith.constant 0 : i32
    return %arg0, %c0_i32, %c0_i32_0, %c0_i32_1 : i32, i32, i32, i32
  }
  func.func @transform_3(%arg0: i32) -> (i32, i32) {
    %c0_i32 = arith.constant 0 : i32
    %c0_i32_0 = arith.constant 0 : i32
    %c0_i32_1 = arith.constant 0 : i32
    return %c0_i32, %c0_i32_0 : i32, i32
  }
  func.func @transform_4(%arg0: i32) -> (i32, i32) {
    %c0_i32 = arith.constant 0 : i32
    %c0_i32_0 = arith.constant 0 : i32
    %c0_i32_1 = arith.constant 0 : i32
    return %c0_i32, %c0_i32_0 : i32, i32
  }
  func.func @transform_5(%arg0: i32) -> (i32, i32, i32, i32) {
    %c0_i32 = arith.constant 0 : i32
    %c0_i32_0 = arith.constant 0 : i32
    %c0_i32_1 = arith.constant 0 : i32
    %c0_i32_2 = arith.constant 0 : i32
    return %arg0, %c0_i32, %c0_i32_0, %c0_i32_1 : i32, i32, i32, i32
  }
}

</mosaic_0001>

<llo_original>
// kernel: tile.8
$region0: #{tile.8}
  #allocation0 [shape = 's32[1]{0}', space=sflag, size = 0x4, scoped, tag = 'scoped memory for tile.8']
  %s0 = inlined_call_operand.vmem [shape: f32[8], index: 0, kind: input, shape index: {}]
  %s1 = inlined_call_operand.vmem [shape: f32[4,8], index: 1, kind: output, shape index: {}]
  // Predicated region
  $region2: #{tile.8} parent=0 // pred_check
    _
  $region3: #{tile.8} parent=0 // pred_check_branch
    %3 = sbr.rel (0) target = $region5
  $region4: #{tile.8} parent=0 // pred_region
    _
  $region5: #{tile.8} parent=0 // pred_fallthru
    _
  %v4 = vld [vmem:[%s0] ss:$0 sm:$0xff]
  %5 = vst [vmem:[%s1] sm:$0xf] %v4

// kernel: tile.9
$region0: #{tile.9}
  %s0 = inlined_call_operand.vmem [shape: f32[4,8], index: 0, kind: input, shape index: {}]
  %s1 = inlined_call_operand.vmem [shape: f32[1,32], index: 1, kind: output, shape index: {}]
  $region1: #{tile.9} parent=0
    #allocation0 [shape = 'u8[4096]{0}', space=vmem, size = 0x1000, scoped, tag = 'scoped mem for output reshape']
    #allocation1 [shape = 'u8[4096]{0}', space=vmem, size = 0x1000, scoped, tag = 'scoped mem for input reshape']
    %s3 = sshll.u32 1, 4
    %s4 = ssub.s32 %s3, 1
    %v5 = vld [vmem:[%s0] sm:%s4]
    %6 = vst [vmem:[#allocation1] sm:%s4] %v5
    %v7 = vld [vmem:[#allocation1] sm:$0x1]
    %vm8 = vcmask 64512
    %9 = vst.msk [vmem:[#allocation0] sm:$0x1] %vm8, %v7
    %s10 = scalar_lea.vmem [#allocation1], 3
    %v11 = vld [vmem:[%s10] sm:$0x1]
    %12 = vrot.lane.b32.xlu0 %v11, 24
    %v13 = vpop.permute.xlu0 %12
    %vm14 = vcmask 261312
    %15 = vst.msk [vmem:[#allocation0] sm:$0x1] %vm14, %v13
    %s16 = scalar_lea.vmem [#allocation1], 2
    %v17 = vld [vmem:[%s16] sm:$0x1]
    %18 = vrot.lane.b32.xlu0 %v17, 16
    %v19 = vpop.permute.xlu0 %18
    %vm20 = vcmask 195712
    %21 = vst.msk [vmem:[#allocation0] sm:$0x1] %vm20, %v19
    %s22 = scalar_lea.vmem [#allocation1], 1
    %v23 = vld [vmem:[%s22] sm:$0x1]
    %24 = vrot.lane.b32.xlu0 %v23, 8
    %v25 = vpop.permute.xlu0 %24
    %vm26 = vcmask 130112
    %27 = vst.msk [vmem:[#allocation0] sm:$0x1] %vm26, %v25
    %s29 = sshll.u32 1, 1
    %s30 = ssub.s32 %s29, 1
    %v32 = vld [vmem:[#allocation0] sm:%s30]
    %s33 = sshll.u32 1, 1
    %s34 = ssub.s32 %s33, 1
    %35 = vst [vmem:[%s1] sm:%s34] %v32

// kernel: unet_upsample_forward.3
$region0: #{unet_upsample_forward.3}
  #allocation0 [shape = 'u32[]', space=smem, size = 0x4, offset = 0x4, fixed_abs, tag = 'smem constant byte address 0x4 - core index']
  #allocation1 [shape = 'u32[144,128]{1,0:T(1,128)}', space=vmem, size = 0x12000, scoped, tag = 'internal scratch']
  %s0 = inlined_call_operand.vmem [shape: bf16[2,9,9,4], index: 0, kind: input, shape index: {}]
  %s1 = inlined_call_operand.vmem [shape: bf16[16,32], index: 1, kind: input, shape index: {}]
  %s2 = inlined_call_operand.vmem [shape: f32[1,32], index: 2, kind: input, shape index: {}]
  %s3 = inlined_call_operand.vmem [shape: bf16[2,9,2,9,16], index: 3, kind: output, shape index: {}]
  %s4 = sld [smem:[#allocation0]]
  $region45: #{unet_upsample_forward.3} parent=0
    _
  %s6 = ssub.s32 1, %s4
  %s7 = scalar_select 0, %s6, %s4
  loop: start=0, step=1, limit=4
  $region2: #{unet_upsample_forward.3} parent=0 // loop_pre_header
    _
  $region3: #{unet_upsample_forward.3} parent=0 // loop_header
    %s9 = sphi 0, %s13
    %p10 = scmp.ge.s32.totalorder %s9, 4
    %s19 = sphi 0, %s21
    %s22 = sphi 0, %s19
    %s23 = sphi 0, %s22
    %s39 = sphi 0, %s23
    %s43 = sphi 0, %s43
    %s45 = sphi 0, %s43
    %s46 = sphi 0, %s45
    %s60 = sphi 0, %s46
    %s64 = sphi 0, %s64
    %s66 = sphi 0, %s64
    %s67 = sphi 0, %s66
    %s81 = sphi 0, %s67
    %s87 = sphi 0, %s89
    %s90 = sphi 0, %s87
    %s91 = sphi 0, %s90
    %s107 = sphi 0, %s91
  $region4: #{unet_upsample_forward.3} parent=0 // loop_header_branch
    %12 = sbr.rel (%p10) target = $region8
  $region5: #{unet_upsample_forward.3} parent=0 // loop_body
    %s14 = ssub.s32 %s9, 1
    %s15 = ssub.s32 %s9, 2
    %s16 = sadd.s32 %s9, 1
    %s17 = ssub.s32 %s9, %s16
    %p18 = scmp.eq.s32.totalorder %s17, 0
    %s20 = sadd.s32 %s19, 1
    %s21 = scalar_select %p18, %s19, %s20
    %p24 = pneg %p18
    %p25 = scmp.eq.s32.totalorder %s9, 1
    %p26 = por %p24, %p25
    %p27 = scmp.ne.s32.totalorder %s19, %s22
    %p28 = scmp.eq.s32.totalorder %s9, 0
    %p29 = por %p27, %p28
    %p30 = scmp.ne.s32.totalorder %s19, %s22
    %p31 = scmp.eq.s32.totalorder %s14, 1
    %p32 = por %p30, %p31
    %p33 = scmp.ne.s32.totalorder %s22, %s23
    %p34 = scmp.eq.s32.totalorder %s14, 0
    %p35 = por %p33, %p34
    %p36 = scmp.ne.s32.totalorder %s22, %s23
    %p37 = scmp.eq.s32.totalorder %s15, 1
    %p38 = por %p36, %p37
    %p40 = scmp.ne.s32.totalorder %s23, %s39
    %p41 = scmp.eq.s32.totalorder %s15, 0
    %p42 = por %p40, %p41
    %s44 = sadd.s32 %s43, 1
    %p47 = scmp.eq.s32.totalorder %s9, 1
    %p48 = scmp.ne.s32.totalorder %s43, %s45
    %p49 = scmp.eq.s32.totalorder %s9, 0
    %p50 = por %p48, %p49
    %p51 = scmp.ne.s32.totalorder %s43, %s45
    %p52 = scmp.eq.s32.totalorder %s14, 1
    %p53 = por %p51, %p52
    %p54 = scmp.ne.s32.totalorder %s45, %s46
    %p55 = scmp.eq.s32.totalorder %s14, 0
    %p56 = por %p54, %p55
    %p57 = scmp.ne.s32.totalorder %s45, %s46
    %p58 = scmp.eq.s32.totalorder %s15, 1
    %p59 = por %p57, %p58
    %p61 = scmp.ne.s32.totalorder %s46, %s60
    %p62 = scmp.eq.s32.totalorder %s15, 0
    %p63 = por %p61, %p62
    %s65 = sadd.s32 %s64, 1
    %p68 = scmp.eq.s32.totalorder %s9, 1
    %p69 = scmp.ne.s32.totalorder %s64, %s66
    %p70 = scmp.eq.s32.totalorder %s9, 0
    %p71 = por %p69, %p70
    %p72 = scmp.ne.s32.totalorder %s64, %s66
    %p73 = scmp.eq.s32.totalorder %s14, 1
    %p74 = por %p72, %p73
    %p75 = scmp.ne.s32.totalorder %s66, %s67
    %p76 = scmp.eq.s32.totalorder %s14, 0
    %p77 = por %p75, %p76
    %p78 = scmp.ne.s32.totalorder %s66, %s67
    %p79 = scmp.eq.s32.totalorder %s15, 1
    %p80 = por %p78, %p79
    %p82 = scmp.ne.s32.totalorder %s67, %s81
    %p83 = scmp.eq.s32.totalorder %s15, 0
    %p84 = por %p82, %p83
    %s85 = ssub.s32 %s9, %s16
    %p86 = scmp.eq.s32.totalorder %s85, 0
    %s88 = sadd.s32 %s87, 1
    %s89 = scalar_select %p86, %s87, %s88
    %p92 = pneg %p86
    %p93 = scmp.eq.s32.totalorder %s9, 1
    %p94 = por %p92, %p93
    %p95 = scmp.ne.s32.totalorder %s87, %s90
    %p96 = scmp.eq.s32.totalorder %s9, 0
    %p97 = por %p95, %p96
    %p98 = scmp.ne.s32.totalorder %s87, %s90
    %p99 = scmp.eq.s32.totalorder %s14, 1
    %p100 = por %p98, %p99
    %p101 = scmp.ne.s32.totalorder %s90, %s91
    %p102 = scmp.eq.s32.totalorder %s14, 0
    %p103 = por %p101, %p102
    %p104 = scmp.ne.s32.totalorder %s90, %s91
    %p105 = scmp.eq.s32.totalorder %s15, 1
    %p106 = por %p104, %p105
    %p108 = scmp.ne.s32.totalorder %s91, %s107
    %p109 = scmp.eq.s32.totalorder %s15, 0
    %p110 = por %p108, %p109
    %p111 = scmp.le.s32.totalorder 1, %s9
    %p112 = scmp.lt.s32.totalorder %s9, 3
    %p113 = pnand %p111, %p112
    %p114 = pneg %p113
    // Predicated region
    $region9: #{unet_upsample_forward.3} parent=5 // pred_check
      _
    $region10: #{unet_upsample_forward.3} parent=5 // pred_check_branch
      %116 = sbr.rel (%p113) target = $region12
    $region11: #{unet_upsample_forward.3} parent=5 // pred_region
      %s117 = ssub.s32 %s9, 1
      // Predicated region
      $region13: #{unet_upsample_forward.3} parent=11 // pred_check
        %p118 = pneg %p56
      $region14: #{unet_upsample_forward.3} parent=11 // pred_check_branch
        %120 = sbr.rel (%p118) target = $region16
      $region15: #{unet_upsample_forward.3} parent=11 // pred_region
        _
      $region16: #{unet_upsample_forward.3} parent=11 // pred_fallthru
        _
      // Predicated region
      $region17: #{unet_upsample_forward.3} parent=11 // pred_check
        %p121 = pneg %p77
      $region18: #{unet_upsample_forward.3} parent=11 // pred_check_branch
        %123 = sbr.rel (%p121) target = $region20
      $region19: #{unet_upsample_forward.3} parent=11 // pred_region
        _
      $region20: #{unet_upsample_forward.3} parent=11 // pred_fallthru
        _
    $region12: #{unet_upsample_forward.3} parent=5 // pred_fallthru
      _
    %p124 = scmp.lt.s32.totalorder %s9, 2
    // Predicated region
    $region21: #{unet_upsample_forward.3} parent=5 // pred_check
      %p125 = pneg %p124
    $region22: #{unet_upsample_forward.3} parent=5 // pred_check_branch
      %127 = sbr.rel (%p125) target = $region24
    $region23: #{unet_upsample_forward.3} parent=5 // pred_region
      // Predicated region
      $region25: #{unet_upsample_forward.3} parent=23 // pred_check
        %p128 = pneg %p29
      $region26: #{unet_upsample_forward.3} parent=23 // pred_check_branch
        %130 = sbr.rel (%p128) target = $region28
      $region27: #{unet_upsample_forward.3} parent=23 // pred_region
        %p131 = scmp.lt.s32.totalorder %s9, 1
        %s132 = scalar_select %p131, %s9, 1
        %s133 = smul.addr %s132, 18
        %s134 = smul.addr %s133, 4
        %s135 = scalar_lea.vmem %s0, %s134
      $region28: #{unet_upsample_forward.3} parent=23 // pred_fallthru
        _
    $region24: #{unet_upsample_forward.3} parent=5 // pred_fallthru
      _
    %p136 = scmp.le.s32.totalorder 1, %s9
    %p137 = scmp.lt.s32.totalorder %s9, 3
    %p138 = pnand %p136, %p137
    %p139 = pneg %p138
    // Predicated region
    $region29: #{unet_upsample_forward.3} parent=5 // pred_check
      _
    $region30: #{unet_upsample_forward.3} parent=5 // pred_check_branch
      %141 = sbr.rel (%p138) target = $region32
    $region31: #{unet_upsample_forward.3} parent=5 // pred_region
      %s142 = ssub.s32 %s9, 1
      %p143 = scmp.lt.s32.totalorder %s14, 1
      %s144 = scalar_select %p143, %s14, 1
      %s145 = smul.addr %s144, 18
      %s146 = smul.addr %s145, 4
      %s147 = scalar_lea.vmem %s0, %s146
      %p148 = pneg %p35
      %p149 = pneg %p32
      %p150 = pneg %p56
      %p151 = pneg %p53
      %p152 = pneg %p77
      %p153 = pneg %p74
      %p154 = pneg %p103
      %p155 = pneg %p100
      %p156 = scmp.lt.s32.totalorder %s14, 1
      %s157 = scalar_select %p156, %s14, 1
      %s158 = smul.addr %s157, 36
      %s159 = smul.addr %s158, 4
      %s160 = scalar_lea.vmem %s3, %s159
      %p161 = scmp.lt.s32.totalorder %s14, 1
      %s162 = scalar_select %p161, %s14, 1
      %s163 = smul.addr %s162, 18
      %s164 = smul.addr %s163, 4
      %s165 = scalar_lea.vmem %s0, %s164
      %p166 = scmp.lt.s32.totalorder %s14, 1
      %s167 = scalar_select %p166, %s14, 1
      %s168 = smul.addr %s167, 36
      %s169 = smul.addr %s168, 4
      %s170 = scalar_lea.vmem %s3, %s169
      %v172 = vld [vmem:[%s165] sm:$0xf]
      %v173 = vld [vmem:[%s165 + $0x4] sm:$0x1]
      %v174 = vld [vmem:[%s165 + $0x8] sm:$0xf]
      %v175 = vld [vmem:[%s165 + $0xc] sm:$0x1]
      %v176 = vld [vmem:[%s165 + $0x10] sm:$0xf]
      %v177 = vld [vmem:[%s165 + $0x14] sm:$0x1]
      %v178 = vld [vmem:[%s165 + $0x18] sm:$0xf]
      %v179 = vld [vmem:[%s165 + $0x1c] sm:$0x1]
      %v180 = vld [vmem:[%s165 + $0x20] sm:$0xf]
      %v181 = vld [vmem:[%s165 + $0x24] sm:$0x1]
      %v182 = vld [vmem:[%s165 + $0x28] sm:$0xf]
      %v183 = vld [vmem:[%s165 + $0x2c] sm:$0x1]
      %v184 = vld [vmem:[%s165 + $0x30] sm:$0xf]
      %v185 = vld [vmem:[%s165 + $0x34] sm:$0x1]
      %v186 = vld [vmem:[%s165 + $0x38] sm:$0xf]
      %v187 = vld [vmem:[%s165 + $0x3c] sm:$0x1]
      %v188 = vld [vmem:[%s165 + $0x40] sm:$0xf]
      %v189 = vld [vmem:[%s165 + $0x44] sm:$0x1]
      %v206 = vunpack.c.l.b16 %v172
      %v207 = vunpack.c.l.b16 %v173
      %v208 = vunpack.c.l.b16 %v174
      %v209 = vunpack.c.l.b16 %v175
      %v210 = vunpack.c.l.b16 %v176
      %v211 = vunpack.c.l.b16 %v177
      %v212 = vunpack.c.l.b16 %v178
      %v213 = vunpack.c.l.b16 %v179
      %v214 = vunpack.c.l.b16 %v180
      %v215 = vunpack.c.l.b16 %v181
      %v216 = vunpack.c.l.b16 %v182
      %v217 = vunpack.c.l.b16 %v183
      %v218 = vunpack.c.l.b16 %v184
      %v219 = vunpack.c.l.b16 %v185
      %v220 = vunpack.c.l.b16 %v186
      %v221 = vunpack.c.l.b16 %v187
      %v222 = vpack.c.b16 %v207, %v206
      %v223 = vpack.c.b16 %v209, %v208
      %v224 = vpack.c.b16 %v211, %v210
      %v225 = vpack.c.b16 %v213, %v212
      %v226 = vpack.c.b16 %v215, %v214
      %v227 = vpack.c.b16 %v217, %v216
      %v228 = vpack.c.b16 %v219, %v218
      %v229 = vpack.c.b16 %v221, %v220
      %v231 = vshrl.u32 %v222, 16
      %v233 = vshll.u32 %v222, 16
      %v235 = vrot.slane %v233, 1
      %v236 = vor.u32 %v231, %v235
      %v238 = vshrl.u32 %v223, 16
      %v240 = vshll.u32 %v223, 16
      %v242 = vrot.slane %v240, 1
      %v243 = vor.u32 %v238, %v242
      %v245 = vshrl.u32 %v224, 16
      %v247 = vshll.u32 %v224, 16
      %v249 = vrot.slane %v247, 1
      %v250 = vor.u32 %v245, %v249
      %v252 = vshrl.u32 %v225, 16
      %v254 = vshll.u32 %v225, 16
      %v256 = vrot.slane %v254, 1
      %v257 = vor.u32 %v252, %v256
      %v259 = vshrl.u32 %v226, 16
      %v261 = vshll.u32 %v226, 16
      %v263 = vrot.slane %v261, 1
      %v264 = vor.u32 %v259, %v263
      %v266 = vshrl.u32 %v227, 16
      %v268 = vshll.u32 %v227, 16
      %v270 = vrot.slane %v268, 1
      %v271 = vor.u32 %v266, %v270
      %v273 = vshrl.u32 %v228, 16
      %v275 = vshll.u32 %v228, 16
      %v277 = vrot.slane %v275, 1
      %v278 = vor.u32 %v273, %v277
      %v280 = vshrl.u32 %v229, 16
      %v282 = vshll.u32 %v229, 16
      %v284 = vrot.slane %v282, 1
      %v285 = vor.u32 %v280, %v284
      %286 = vrot.lane.b32.xlu0 %v236, 4
      %v287 = vpop.permute.xlu0 %286
      %288 = vrot.lane.b32.xlu0 %v243, 4
      %v289 = vpop.permute.xlu0 %288
      %290 = vrot.lane.b32.xlu0 %v250, 4
      %v291 = vpop.permute.xlu0 %290
      %292 = vrot.lane.b32.xlu0 %v257, 4
      %v293 = vpop.permute.xlu0 %292
      %294 = vrot.lane.b32.xlu0 %v264, 4
      %v295 = vpop.permute.xlu0 %294
      %296 = vrot.lane.b32.xlu0 %v271, 4
      %v297 = vpop.permute.xlu0 %296
      %298 = vrot.lane.b32.xlu0 %v278, 4
      %v299 = vpop.permute.xlu0 %298
      %300 = vrot.lane.b32.xlu0 %v285, 4
      %v301 = vpop.permute.xlu0 %300
      %v303 = vunpack.c.l.b16 %v188
      %v304 = vpack.c.b16 %v208, %v208
      %v305 = vpack.c.b16 %v210, %v210
      %v306 = vpack.c.b16 %v212, %v212
      %v307 = vpack.c.b16 %v214, %v214
      %v308 = vpack.c.b16 %v216, %v216
      %v309 = vpack.c.b16 %v218, %v218
      %v310 = vpack.c.b16 %v220, %v220
      %v311 = vpack.c.b16 %v303, %v303
      %312 = vrot.lane.b32.xlu0 %v304, 8
      %v313 = vpop.permute.xlu0 %312
      %314 = vrot.lane.b32.xlu0 %v305, 8
      %v315 = vpop.permute.xlu0 %314
      %316 = vrot.lane.b32.xlu0 %v306, 8
      %v317 = vpop.permute.xlu0 %316
      %318 = vrot.lane.b32.xlu0 %v307, 8
      %v319 = vpop.permute.xlu0 %318
      %320 = vrot.lane.b32.xlu0 %v308, 8
      %v321 = vpop.permute.xlu0 %320
      %322 = vrot.lane.b32.xlu0 %v309, 8
      %v323 = vpop.permute.xlu0 %322
      %324 = vrot.lane.b32.xlu0 %v310, 8
      %v325 = vpop.permute.xlu0 %324
      %326 = vrot.lane.b32.xlu0 %v311, 8
      %v327 = vpop.permute.xlu0 %326
      %v329 = vunpack.c.l.b16 %v189
      %v330 = vpack.c.b16 %v329, %v303
      %v332 = vshrl.u32 %v330, 16
      %v334 = vshll.u32 %v330, 16
      %v336 = vrot.slane %v334, 1
      %v337 = vor.u32 %v332, %v336
      %338 = vrot.lane.b32.xlu0 %v243, 12
      %v339 = vpop.permute.xlu0 %338
      %340 = vrot.lane.b32.xlu0 %v250, 12
      %v341 = vpop.permute.xlu0 %340
      %342 = vrot.lane.b32.xlu0 %v257, 12
      %v343 = vpop.permute.xlu0 %342
      %344 = vrot.lane.b32.xlu0 %v264, 12
      %v345 = vpop.permute.xlu0 %344
      %346 = vrot.lane.b32.xlu0 %v271, 12
      %v347 = vpop.permute.xlu0 %346
      %348 = vrot.lane.b32.xlu0 %v278, 12
      %v349 = vpop.permute.xlu0 %348
      %350 = vrot.lane.b32.xlu0 %v285, 12
      %v351 = vpop.permute.xlu0 %350
      %352 = vrot.lane.b32.xlu0 %v337, 12
      %v353 = vpop.permute.xlu0 %352
      %vm354 = vcmask 31744
      %v357 = vsel %vm354, %v172, %v287
      %v360 = vsel %vm354, %v174, %v289
      %v363 = vsel %vm354, %v176, %v291
      %v366 = vsel %vm354, %v178, %v293
      %v369 = vsel %vm354, %v180, %v295
      %v372 = vsel %vm354, %v182, %v297
      %v375 = vsel %vm354, %v184, %v299
      %v378 = vsel %vm354, %v186, %v301
      %vm379 = vcmask 64512
      %v381 = vsel %vm379, %v357, %v313
      %v383 = vsel %vm379, %v360, %v315
      %v385 = vsel %vm379, %v363, %v317
      %v387 = vsel %vm379, %v366, %v319
      %v389 = vsel %vm379, %v369, %v321
      %v391 = vsel %vm379, %v372, %v323
      %v393 = vsel %vm379, %v375, %v325
      %v395 = vsel %vm379, %v378, %v327
      %vm396 = vcmask 97280
      %v398 = vsel %vm396, %v381, %v339
      %v400 = vsel %vm396, %v383, %v341
      %v402 = vsel %vm396, %v385, %v343
      %v404 = vsel %vm396, %v387, %v345
      %v406 = vsel %vm396, %v389, %v347
      %v408 = vsel %vm396, %v391, %v349
      %v410 = vsel %vm396, %v393, %v351
      %v412 = vsel %vm396, %v395, %v353
      %v413 = vld [vmem:[%s1] sm:$0xf]
      %v414 = vld [vmem:[%s1 + $0x4] sm:$0xf]
      %v415 = vld [vmem:[%s2] sm:$0x1]
      %v417 = vlaneseq
      %v418 = vshrl.u32 %v417, 7
      %v419 = vsub.s32 0, %v418
      %v420 = vrot.slane %v415, %v419
      %v430 = vunpack.c.l.b16 %v398
      %v431 = vunpack.c.l.b16 %v400
      %v432 = vunpack.c.l.b16 %v402
      %v433 = vunpack.c.l.b16 %v404
      %v434 = vunpack.c.l.b16 %v406
      %v435 = vunpack.c.l.b16 %v408
      %v436 = vunpack.c.l.b16 %v410
      %v437 = vunpack.c.l.b16 %v412
      %v438 = vpack.c.b16 %v431, %v430
      %v439 = vpack.c.b16 %v433, %v432
      %v440 = vpack.c.b16 %v435, %v434
      %v441 = vpack.c.b16 %v437, %v436
      %v444 = vunpack.c.l.b16 %v413
      %v445 = vunpack.c.l.b16 %v414
      %v446 = vpack.c.b16 %v445, %v444
      %vm448 = vcmask 130048
      %v450 = vsel %vm448, %v438, 0
      %v453 = vsel %vm448, %v439, 0
      %v456 = vsel %vm448, %v440, 0
      %v459 = vsel %vm448, %v441, 0
      %461 = vmatprep.subr.bf16.mxu0 0
      %462 = vmatpush1.bf16.msra.mxu0 0
      %463 = vmatprep.subr.bf16.mxu0 0
      %464 = vmatpush1.bf16.msra.mxu0 0
      %465 = vmatprep.subr.bf16.mxu0 0
      %466 = vmatpush1.bf16.msra.mxu0 0
      %467 = vmatprep.subr.bf16.mxu0 0
      %468 = vmatpush1.bf16.msra.mxu0 0
      %469 = vmatprep.subr.bf16.mxu0 0
      %470 = vmatpush1.bf16.msra.mxu0 0
      %471 = vmatprep.subr.bf16.mxu0 0
      %472 = vmatpush1.bf16.msra.mxu0 0
      %473 = vmatprep.subr.bf16.mxu0 0
      %474 = vmatpush1.bf16.msra.mxu0 0
      %475 = vmatprep.subr.bf16.mxu0 0
      %476 = vmatpush1.bf16.msra.mxu0 %v446
      %477 = vmatprep.subr.bf16.mxu0 0
      %478 = vmatpush2.bf16.msra.mxu0 0
      %479 = vmatprep.subr.bf16.mxu0 0
      %480 = vmatpush2.bf16.msra.mxu0 0
      %481 = vmatprep.subr.bf16.mxu0 0
      %482 = vmatpush2.bf16.msra.mxu0 0
      %483 = vmatprep.subr.bf16.mxu0 0
      %484 = vmatpush2.bf16.msra.mxu0 0
      %485 = vmatprep.subr.bf16.mxu0 0
      %486 = vmatpush2.bf16.msra.mxu0 0
      %487 = vmatprep.subr.bf16.mxu0 0
      %488 = vmatpush2.bf16.msra.mxu0 0
      %489 = vmatprep.subr.bf16.mxu0 0
      %490 = vmatpush2.bf16.msra.mxu0 0
      %491 = vmatprep.subr.bf16.mxu0 0
      %492 = vmatpush2.bf16.msra.mxu0 0
      %493 = vmatprep.mubr.bf16.mxu0 0
      %494 = vmatmul.mubr.bf16.gmra.mxu0 %v450
      %v495 = vpop.f32.mrf.mxu0
      %v496 = vadd.f32 %v420, %v495
      %v497 = vpop.f32.mrf.mxu0
      %v498 = vpop.f32.mrf.mxu0
      %v499 = vadd.f32 %v420, %v498
      %v500 = vpop.f32.mrf.mxu0
      %501 = vmatprep.mubr.bf16.mxu0 0
      %502 = vmatmul.mubr.bf16.gmra.mxu0 %v453
      %v503 = vpop.f32.mrf.mxu0
      %v504 = vadd.f32 %v420, %v503
      %v505 = vpop.f32.mrf.mxu0
      %v506 = vpop.f32.mrf.mxu0
      %v507 = vadd.f32 %v420, %v506
      %v508 = vpop.f32.mrf.mxu0
      %509 = vmatprep.mubr.bf16.mxu0 0
      %510 = vmatmul.mubr.bf16.gmra.mxu0 %v456
      %v511 = vpop.f32.mrf.mxu0
      %v512 = vadd.f32 %v420, %v511
      %v513 = vpop.f32.mrf.mxu0
      %v514 = vpop.f32.mrf.mxu0
      %v515 = vadd.f32 %v420, %v514
      %v516 = vpop.f32.mrf.mxu0
      %517 = vmatprep.mubr.bf16.mxu0 0
      %518 = vmatmul.mubr.bf16.gmra.mxu0 %v459
      %v519 = vpop.f32.mrf.mxu0
      %v520 = vadd.f32 %v420, %v519
      %v521 = vpop.f32.mrf.mxu0
      %v522 = vpop.f32.mrf.mxu0
      %v523 = vadd.f32 %v420, %v522
      %v524 = vpop.f32.mrf.mxu0
      %525 = vdwg.mxu0
      %v526 = vpack.c.bf16 %v499, %v496
      %v527 = vpack.c.bf16 %v507, %v504
      %v528 = vpack.c.bf16 %v515, %v512
      %v529 = vpack.c.bf16 %v523, %v520
      %vm530 = vcmask 125952
      %531 = vst.msk [vmem:[%s170] sm:$0xf] %vm530, 0
      %vm532 = vcmask 122880
      %vm533 = vsmask.f32 256
      %vm534 = vmand %vm532, %vm533
      %v535 = vld [vmem:[%s170 + $0x4] sm:$0x1]
      %v536 = vsel %vm534, 0, %v535
      %537 = vst [vmem:[%s170 + $0x4] sm:$0x1] %v536
      %538 = vst.msk [vmem:[%s170 + $0x8] sm:$0xf] %vm530, 0
      %v539 = vld [vmem:[%s170 + $0xc] sm:$0x1]
      %v540 = vsel %vm534, 0, %v539
      %541 = vst [vmem:[%s170 + $0xc] sm:$0x1] %v540
      %542 = vst.msk [vmem:[%s170 + $0x10] sm:$0xf] %vm530, 0
      %v543 = vld [vmem:[%s170 + $0x14] sm:$0x1]
      %v544 = vsel %vm534, 0, %v543
      %545 = vst [vmem:[%s170 + $0x14] sm:$0x1] %v544
      %546 = vst.msk [vmem:[%s170 + $0x18] sm:$0xf] %vm530, 0
      %v547 = vld [vmem:[%s170 + $0x1c] sm:$0x1]
      %v548 = vsel %vm534, 0, %v547
      %549 = vst [vmem:[%s170 + $0x1c] sm:$0x1] %v548
      %550 = vst.msk [vmem:[%s170 + $0x20] sm:$0xf] %vm530, 0
      %v551 = vld [vmem:[%s170 + $0x24] sm:$0x1]
      %v552 = vsel %vm534, 0, %v551
      %553 = vst [vmem:[%s170 + $0x24] sm:$0x1] %v552
      %554 = vst.msk [vmem:[%s170 + $0x28] sm:$0xf] %vm530, 0
      %v555 = vld [vmem:[%s170 + $0x2c] sm:$0x1]
      %v556 = vsel %vm534, 0, %v555
      %557 = vst [vmem:[%s170 + $0x2c] sm:$0x1] %v556
      %558 = vst.msk [vmem:[%s170 + $0x30] sm:$0xf] %vm530, 0
      %v559 = vld [vmem:[%s170 + $0x34] sm:$0x1]
      %v560 = vsel %vm534, 0, %v559
      %561 = vst [vmem:[%s170 + $0x34] sm:$0x1] %v560
      %562 = vst.msk [vmem:[%s170 + $0x38] sm:$0xf] %vm530, 0
      %v563 = vld [vmem:[%s170 + $0x3c] sm:$0x1]
      %v564 = vsel %vm534, 0, %v563
      %565 = vst [vmem:[%s170 + $0x3c] sm:$0x1] %v564
      %566 = vst.msk [vmem:[%s170 + $0x40] sm:$0xf] %vm530, 0
      %v567 = vld [vmem:[%s170 + $0x44] sm:$0x1]
      %v568 = vsel %vm534, 0, %v567
      %569 = vst [vmem:[%s170 + $0x44] sm:$0x1] %v568
      %570 = vst.msk [vmem:[%s170 + $0x48] sm:$0xf] %vm530, 0
      %v571 = vld [vmem:[%s170 + $0x4c] sm:$0x1]
      %v572 = vsel %vm534, 0, %v571
      %573 = vst [vmem:[%s170 + $0x4c] sm:$0x1] %v572
      %574 = vst.msk [vmem:[%s170 + $0x50] sm:$0xf] %vm530, 0
      %v575 = vld [vmem:[%s170 + $0x54] sm:$0x1]
      %v576 = vsel %vm534, 0, %v575
      %577 = vst [vmem:[%s170 + $0x54] sm:$0x1] %v576
      %578 = vst.msk [vmem:[%s170 + $0x58] sm:$0xf] %vm530, 0
      %v579 = vld [vmem:[%s170 + $0x5c] sm:$0x1]
      %v580 = vsel %vm534, 0, %v579
      %581 = vst [vmem:[%s170 + $0x5c] sm:$0x1] %v580
      %582 = vst.msk [vmem:[%s170 + $0x60] sm:$0xf] %vm530, 0
      %v583 = vld [vmem:[%s170 + $0x64] sm:$0x1]
      %v584 = vsel %vm534, 0, %v583
      %585 = vst [vmem:[%s170 + $0x64] sm:$0x1] %v584
      %586 = vst.msk [vmem:[%s170 + $0x68] sm:$0xf] %vm530, 0
      %v587 = vld [vmem:[%s170 + $0x6c] sm:$0x1]
      %v588 = vsel %vm534, 0, %v587
      %589 = vst [vmem:[%s170 + $0x6c] sm:$0x1] %v588
      %590 = vst.msk [vmem:[%s170 + $0x70] sm:$0xf] %vm530, 0
      %v591 = vld [vmem:[%s170 + $0x74] sm:$0x1]
      %v592 = vsel %vm534, 0, %v591
      %593 = vst [vmem:[%s170 + $0x74] sm:$0x1] %v592
      %594 = vst.msk [vmem:[%s170 + $0x78] sm:$0xf] %vm530, 0
      %v595 = vld [vmem:[%s170 + $0x7c] sm:$0x1]
      %v596 = vsel %vm534, 0, %v595
      %597 = vst [vmem:[%s170 + $0x7c] sm:$0x1] %v596
      %598 = vst.msk [vmem:[%s170 + $0x80] sm:$0xf] %vm530, 0
      %v599 = vld [vmem:[%s170 + $0x84] sm:$0x1]
      %v600 = vsel %vm534, 0, %v599
      %601 = vst [vmem:[%s170 + $0x84] sm:$0x1] %v600
      %602 = vst.msk [vmem:[%s170 + $0x88] sm:$0xf] %vm530, 0
      %v603 = vld [vmem:[%s170 + $0x8c] sm:$0x1]
      %v604 = vsel %vm534, 0, %v603
      %605 = vst [vmem:[%s170 + $0x8c] sm:$0x1] %v604
      %v610 = vunpack.c.l.b16 %v526
      %v611 = vunpack.c.h.b16 %v526
      %v612 = vunpack.c.l.b16 %v527
      %v613 = vunpack.c.h.b16 %v527
      %v614 = vunpack.c.l.b16 %v528
      %v615 = vunpack.c.h.b16 %v528
      %v616 = vunpack.c.l.b16 %v529
      %v617 = vunpack.c.h.b16 %v529
      %v618 = vpack.c.b16 %v610, %v610
      %v619 = vpack.c.b16 %v611, %v611
      %v620 = vpack.c.b16 %v612, %v612
      %v621 = vpack.c.b16 %v613, %v613
      %v622 = vpack.c.b16 %v614, %v614
      %v623 = vpack.c.b16 %v615, %v615
      %v624 = vpack.c.b16 %v616, %v616
      %v625 = vpack.c.b16 %v617, %v617
      %626 = vrot.lane.b32.xlu0 %v618, 8
      %v627 = vpop.permute.xlu0 %626
      %628 = vrot.lane.b32.xlu0 %v619, 8
      %v629 = vpop.permute.xlu0 %628
      %630 = vrot.lane.b32.xlu0 %v620, 8
      %v631 = vpop.permute.xlu0 %630
      %632 = vrot.lane.b32.xlu0 %v621, 8
      %v633 = vpop.permute.xlu0 %632
      %634 = vrot.lane.b32.xlu0 %v622, 8
      %v635 = vpop.permute.xlu0 %634
      %636 = vrot.lane.b32.xlu0 %v623, 8
      %v637 = vpop.permute.xlu0 %636
      %638 = vrot.lane.b32.xlu0 %v624, 8
      %v639 = vpop.permute.xlu0 %638
      %640 = vrot.lane.b32.xlu0 %v625, 8
      %v641 = vpop.permute.xlu0 %640
      %s650 = scalar_lea.vmem %s170, 8
      %vm651 = vcmask 126016
      %652 = vst.msk [vmem:[%s650] sm:$0xf] %vm651, %v627
      %653 = vst.msk [vmem:[%s650 + $0x10] sm:$0xf] %vm651, %v629
      %654 = vst.msk [vmem:[%s650 + $0x20] sm:$0xf] %vm651, %v631
      %655 = vst.msk [vmem:[%s650 + $0x30] sm:$0xf] %vm651, %v633
      %656 = vst.msk [vmem:[%s650 + $0x40] sm:$0xf] %vm651, %v635
      %657 = vst.msk [vmem:[%s650 + $0x50] sm:$0xf] %vm651, %v637
      %658 = vst.msk [vmem:[%s650 + $0x60] sm:$0xf] %vm651, %v639
      %659 = vst.msk [vmem:[%s650 + $0x70] sm:$0xf] %vm651, %v641
      %v661 = vshrl.u32 %v618, 16
      %v663 = vrot.slane %v661, 7
      %v664 = vshll.u32 %v618, 16
      %v666 = vor.u32 %v663, %v664
      %v668 = vshrl.u32 %v619, 16
      %v670 = vrot.slane %v668, 7
      %v671 = vshll.u32 %v619, 16
      %v673 = vor.u32 %v670, %v671
      %v675 = vshrl.u32 %v620, 16
      %v677 = vrot.slane %v675, 7
      %v678 = vshll.u32 %v620, 16
      %v680 = vor.u32 %v677, %v678
      %v682 = vshrl.u32 %v621, 16
      %v684 = vrot.slane %v682, 7
      %v685 = vshll.u32 %v621, 16
      %v687 = vor.u32 %v684, %v685
      %v689 = vshrl.u32 %v622, 16
      %v691 = vrot.slane %v689, 7
      %v692 = vshll.u32 %v622, 16
      %v694 = vor.u32 %v691, %v692
      %v696 = vshrl.u32 %v623, 16
      %v698 = vrot.slane %v696, 7
      %v699 = vshll.u32 %v623, 16
      %v701 = vor.u32 %v698, %v699
      %v703 = vshrl.u32 %v624, 16
      %v705 = vrot.slane %v703, 7
      %v706 = vshll.u32 %v624, 16
      %v708 = vor.u32 %v705, %v706
      %v710 = vshrl.u32 %v625, 16
      %v712 = vrot.slane %v710, 7
      %v713 = vshll.u32 %v625, 16
      %v715 = vor.u32 %v712, %v713
      %716 = vrot.lane.b32.xlu0 %v666, 120
      %v717 = vpop.permute.xlu0 %716
      %718 = vrot.lane.b32.xlu0 %v673, 120
      %v719 = vpop.permute.xlu0 %718
      %720 = vrot.lane.b32.xlu0 %v680, 120
      %v721 = vpop.permute.xlu0 %720
      %722 = vrot.lane.b32.xlu0 %v687, 120
      %v723 = vpop.permute.xlu0 %722
      %724 = vrot.lane.b32.xlu0 %v694, 120
      %v725 = vpop.permute.xlu0 %724
      %726 = vrot.lane.b32.xlu0 %v701, 120
      %v727 = vpop.permute.xlu0 %726
      %728 = vrot.lane.b32.xlu0 %v708, 120
      %v729 = vpop.permute.xlu0 %728
      %730 = vrot.lane.b32.xlu0 %v715, 120
      %v731 = vpop.permute.xlu0 %730
      %vm740 = vcmask 60416
      %vm741 = vsmask.f32 7938
      %vm742 = vmand %vm740, %vm741
      %v743 = vld [vmem:[%s650] sm:$0xf]
      %v744 = vsel %vm742, %v717, %v743
      %745 = vst [vmem:[%s650] sm:$0xf] %v744
      %v746 = vld [vmem:[%s650 + $0x10] sm:$0xf]
      %v747 = vsel %vm742, %v719, %v746
      %748 = vst [vmem:[%s650 + $0x10] sm:$0xf] %v747
      %v749 = vld [vmem:[%s650 + $0x20] sm:$0xf]
      %v750 = vsel %vm742, %v721, %v749
      %751 = vst [vmem:[%s650 + $0x20] sm:$0xf] %v750
      %v752 = vld [vmem:[%s650 + $0x30] sm:$0xf]
      %v753 = vsel %vm742, %v723, %v752
      %754 = vst [vmem:[%s650 + $0x30] sm:$0xf] %v753
      %v755 = vld [vmem:[%s650 + $0x40] sm:$0xf]
      %v756 = vsel %vm742, %v725, %v755
      %757 = vst [vmem:[%s650 + $0x40] sm:$0xf] %v756
      %v758 = vld [vmem:[%s650 + $0x50] sm:$0xf]
      %v759 = vsel %vm742, %v727, %v758
      %760 = vst [vmem:[%s650 + $0x50] sm:$0xf] %v759
      %v761 = vld [vmem:[%s650 + $0x60] sm:$0xf]
      %v762 = vsel %vm742, %v729, %v761
      %763 = vst [vmem:[%s650 + $0x60] sm:$0xf] %v762
      %v764 = vld [vmem:[%s650 + $0x70] sm:$0xf]
      %v765 = vsel %vm742, %v731, %v764
      %766 = vst [vmem:[%s650 + $0x70] sm:$0xf] %v765
      %767 = vrot.lane.b32.xlu0 %v618, 120
      %v768 = vpop.permute.xlu0 %767
      %769 = vrot.lane.b32.xlu0 %v619, 120
      %v770 = vpop.permute.xlu0 %769
      %771 = vrot.lane.b32.xlu0 %v620, 120
      %v772 = vpop.permute.xlu0 %771
      %773 = vrot.lane.b32.xlu0 %v621, 120
      %v774 = vpop.permute.xlu0 %773
      %775 = vrot.lane.b32.xlu0 %v622, 120
      %v776 = vpop.permute.xlu0 %775
      %777 = vrot.lane.b32.xlu0 %v623, 120
      %v778 = vpop.permute.xlu0 %777
      %779 = vrot.lane.b32.xlu0 %v624, 120
      %v780 = vpop.permute.xlu0 %779
      %s788 = scalar_lea.vmem %s170, 16
      %789 = vst.msk [vmem:[%s788] sm:$0xf] %vm651, %v768
      %790 = vst.msk [vmem:[%s788 + $0x10] sm:$0xf] %vm651, %v770
      %791 = vst.msk [vmem:[%s788 + $0x20] sm:$0xf] %vm651, %v772
      %792 = vst.msk [vmem:[%s788 + $0x30] sm:$0xf] %vm651, %v774
      %793 = vst.msk [vmem:[%s788 + $0x40] sm:$0xf] %vm651, %v776
      %794 = vst.msk [vmem:[%s788 + $0x50] sm:$0xf] %vm651, %v778
      %795 = vst.msk [vmem:[%s788 + $0x60] sm:$0xf] %vm651, %v780
      %796 = vrot.lane.b32.xlu0 %v666, 104
      %v797 = vpop.permute.xlu0 %796
      %798 = vrot.lane.b32.xlu0 %v673, 104
      %v799 = vpop.permute.xlu0 %798
      %800 = vrot.lane.b32.xlu0 %v680, 104
      %v801 = vpop.permute.xlu0 %800
      %802 = vrot.lane.b32.xlu0 %v687, 104
      %v803 = vpop.permute.xlu0 %802
      %804 = vrot.lane.b32.xlu0 %v694, 104
      %v805 = vpop.permute.xlu0 %804
      %806 = vrot.lane.b32.xlu0 %v701, 104
      %v807 = vpop.permute.xlu0 %806
      %808 = vrot.lane.b32.xlu0 %v708, 104
      %v809 = vpop.permute.xlu0 %808
      %v817 = vld [vmem:[%s788] sm:$0xf]
      %v818 = vsel %vm742, %v797, %v817
      %819 = vst [vmem:[%s788] sm:$0xf] %v818
      %v820 = vld [vmem:[%s788 + $0x10] sm:$0xf]
      %v821 = vsel %vm742, %v799, %v820
      %822 = vst [vmem:[%s788 + $0x10] sm:$0xf] %v821
      %v823 = vld [vmem:[%s788 + $0x20] sm:$0xf]
      %v824 = vsel %vm742, %v801, %v823
      %825 = vst [vmem:[%s788 + $0x20] sm:$0xf] %v824
      %v826 = vld [vmem:[%s788 + $0x30] sm:$0xf]
      %v827 = vsel %vm742, %v803, %v826
      %828 = vst [vmem:[%s788 + $0x30] sm:$0xf] %v827
      %v829 = vld [vmem:[%s788 + $0x40] sm:$0xf]
      %v830 = vsel %vm742, %v805, %v829
      %831 = vst [vmem:[%s788 + $0x40] sm:$0xf] %v830
      %v832 = vld [vmem:[%s788 + $0x50] sm:$0xf]
      %v833 = vsel %vm742, %v807, %v832
      %834 = vst [vmem:[%s788 + $0x50] sm:$0xf] %v833
      %v835 = vld [vmem:[%s788 + $0x60] sm:$0xf]
      %v836 = vsel %vm742, %v809, %v835
      %837 = vst [vmem:[%s788 + $0x60] sm:$0xf] %v836
      %p838 = scmp.lt.s32.totalorder %s14, 1
      %s839 = scalar_select %p838, %s14, 1
      %s840 = smul.addr %s839, 36
      %s841 = smul.addr %s840, 4
      %s842 = scalar_lea.vmem %s3, %s841
      // Predicated region
      $region33: #{unet_upsample_forward.3} parent=31 // pred_check
        %p843 = pneg %p100
      $region34: #{unet_upsample_forward.3} parent=31 // pred_check_branch
        %845 = sbr.rel (%p843) target = $region36
      $region35: #{unet_upsample_forward.3} parent=31 // pred_region
        _
      $region36: #{unet_upsample_forward.3} parent=31 // pred_fallthru
        _
    $region32: #{unet_upsample_forward.3} parent=5 // pred_fallthru
      _
    %p846 = scmp.le.s32.totalorder 2, %s9
    // Predicated region
    $region37: #{unet_upsample_forward.3} parent=5 // pred_check
      %p847 = pneg %p846
    $region38: #{unet_upsample_forward.3} parent=5 // pred_check_branch
      %849 = sbr.rel (%p847) target = $region40
    $region39: #{unet_upsample_forward.3} parent=5 // pred_region
      %s850 = ssub.s32 %s9, 2
      // Predicated region
      $region41: #{unet_upsample_forward.3} parent=39 // pred_check
        %p851 = pneg %p106
      $region42: #{unet_upsample_forward.3} parent=39 // pred_check_branch
        %853 = sbr.rel (%p851) target = $region44
      $region43: #{unet_upsample_forward.3} parent=39 // pred_region
        %p854 = scmp.lt.s32.totalorder %s15, 1
        %s855 = scalar_select %p854, %s15, 1
        %s856 = smul.addr %s855, 36
        %s857 = smul.addr %s856, 4
        %s858 = scalar_lea.vmem %s3, %s857
      $region44: #{unet_upsample_forward.3} parent=39 // pred_fallthru
        _
    $region40: #{unet_upsample_forward.3} parent=5 // pred_fallthru
      _
  $region6: #{unet_upsample_forward.3} parent=0 // loop_footer
    %s13 = sadd.s32 1, %s9
  $region7: #{unet_upsample_forward.3} parent=0 // loop_footer_branch
    %8 = sbr.rel target = $region3
  $region8: #{unet_upsample_forward.3} parent=0 // loop_exit
    _

// kernel: unet_upsample_forward.5
$region0: #{unet_upsample_forward.5}
  #allocation0 [shape = 'u32[]', space=smem, size = 0x4, offset = 0x4, fixed_abs, tag = 'smem constant byte address 0x4 - core index']
  #allocation1 [shape = 'u32[144,128]{1,0:T(1,128)}', space=vmem, size = 0x12000, scoped, tag = 'internal scratch']
  %s0 = inlined_call_operand.vmem [shape: bf16[2,18,18,8], index: 0, kind: input, shape index: {}]
  %s1 = inlined_call_operand.vmem [shape: bf16[2,18,18,8], index: 1, kind: input, shape index: {}]
  %s2 = inlined_call_operand.vmem [shape: bf16[2,18,18,8], index: 2, kind: input, shape index: {}]
  %s3 = inlined_call_operand.vmem [shape: bf16[88,8], index: 3, kind: input, shape index: {}]
  %s4 = inlined_call_operand.vmem [shape: f32[1,8], index: 4, kind: input, shape index: {}]
  %s5 = inlined_call_operand.vmem [shape: f32[2,16,16,8], index: 5, kind: output, shape index: {}]
  %s6 = sld [smem:[#allocation0]]
  $region53: #{unet_upsample_forward.5} parent=0
    _
  %s8 = ssub.s32 1, %s6
  %s9 = scalar_select 0, %s8, %s6
  loop: start=0, step=1, limit=4
  $region2: #{unet_upsample_forward.5} parent=0 // loop_pre_header
    _
  $region3: #{unet_upsample_forward.5} parent=0 // loop_header
    %s11 = sphi 0, %s15
    %p12 = scmp.ge.s32.totalorder %s11, 4
    %s21 = sphi 0, %s23
    %s24 = sphi 0, %s21
    %s25 = sphi 0, %s24
    %s41 = sphi 0, %s25
    %s47 = sphi 0, %s49
    %s50 = sphi 0, %s47
    %s51 = sphi 0, %s50
    %s67 = sphi 0, %s51
    %s73 = sphi 0, %s75
    %s76 = sphi 0, %s73
    %s77 = sphi 0, %s76
    %s93 = sphi 0, %s77
    %s97 = sphi 0, %s97
    %s99 = sphi 0, %s97
    %s100 = sphi 0, %s99
    %s114 = sphi 0, %s100
    %s118 = sphi 0, %s118
    %s120 = sphi 0, %s118
    %s121 = sphi 0, %s120
    %s135 = sphi 0, %s121
    %s141 = sphi 0, %s143
    %s144 = sphi 0, %s141
    %s145 = sphi 0, %s144
    %s161 = sphi 0, %s145
  $region4: #{unet_upsample_forward.5} parent=0 // loop_header_branch
    %14 = sbr.rel (%p12) target = $region8
  $region5: #{unet_upsample_forward.5} parent=0 // loop_body
    %s16 = ssub.s32 %s11, 1
    %s17 = ssub.s32 %s11, 2
    %s18 = sadd.s32 %s11, 1
    %s19 = ssub.s32 %s11, %s18
    %p20 = scmp.eq.s32.totalorder %s19, 0
    %s22 = sadd.s32 %s21, 1
    %s23 = scalar_select %p20, %s21, %s22
    %p26 = pneg %p20
    %p27 = scmp.eq.s32.totalorder %s11, 1
    %p28 = por %p26, %p27
    %p29 = scmp.ne.s32.totalorder %s21, %s24
    %p30 = scmp.eq.s32.totalorder %s11, 0
    %p31 = por %p29, %p30
    %p32 = scmp.ne.s32.totalorder %s21, %s24
    %p33 = scmp.eq.s32.totalorder %s16, 1
    %p34 = por %p32, %p33
    %p35 = scmp.ne.s32.totalorder %s24, %s25
    %p36 = scmp.eq.s32.totalorder %s16, 0
    %p37 = por %p35, %p36
    %p38 = scmp.ne.s32.totalorder %s24, %s25
    %p39 = scmp.eq.s32.totalorder %s17, 1
    %p40 = por %p38, %p39
    %p42 = scmp.ne.s32.totalorder %s25, %s41
    %p43 = scmp.eq.s32.totalorder %s17, 0
    %p44 = por %p42, %p43
    %s45 = ssub.s32 %s11, %s18
    %p46 = scmp.eq.s32.totalorder %s45, 0
    %s48 = sadd.s32 %s47, 1
    %s49 = scalar_select %p46, %s47, %s48
    %p52 = pneg %p46
    %p53 = scmp.eq.s32.totalorder %s11, 1
    %p54 = por %p52, %p53
    %p55 = scmp.ne.s32.totalorder %s47, %s50
    %p56 = scmp.eq.s32.totalorder %s11, 0
    %p57 = por %p55, %p56
    %p58 = scmp.ne.s32.totalorder %s47, %s50
    %p59 = scmp.eq.s32.totalorder %s16, 1
    %p60 = por %p58, %p59
    %p61 = scmp.ne.s32.totalorder %s50, %s51
    %p62 = scmp.eq.s32.totalorder %s16, 0
    %p63 = por %p61, %p62
    %p64 = scmp.ne.s32.totalorder %s50, %s51
    %p65 = scmp.eq.s32.totalorder %s17, 1
    %p66 = por %p64, %p65
    %p68 = scmp.ne.s32.totalorder %s51, %s67
    %p69 = scmp.eq.s32.totalorder %s17, 0
    %p70 = por %p68, %p69
    %s71 = ssub.s32 %s11, %s18
    %p72 = scmp.eq.s32.totalorder %s71, 0
    %s74 = sadd.s32 %s73, 1
    %s75 = scalar_select %p72, %s73, %s74
    %p78 = pneg %p72
    %p79 = scmp.eq.s32.totalorder %s11, 1
    %p80 = por %p78, %p79
    %p81 = scmp.ne.s32.totalorder %s73, %s76
    %p82 = scmp.eq.s32.totalorder %s11, 0
    %p83 = por %p81, %p82
    %p84 = scmp.ne.s32.totalorder %s73, %s76
    %p85 = scmp.eq.s32.totalorder %s16, 1
    %p86 = por %p84, %p85
    %p87 = scmp.ne.s32.totalorder %s76, %s77
    %p88 = scmp.eq.s32.totalorder %s16, 0
    %p89 = por %p87, %p88
    %p90 = scmp.ne.s32.totalorder %s76, %s77
    %p91 = scmp.eq.s32.totalorder %s17, 1
    %p92 = por %p90, %p91
    %p94 = scmp.ne.s32.totalorder %s77, %s93
    %p95 = scmp.eq.s32.totalorder %s17, 0
    %p96 = por %p94, %p95
    %s98 = sadd.s32 %s97, 1
    %p101 = scmp.eq.s32.totalorder %s11, 1
    %p102 = scmp.ne.s32.totalorder %s97, %s99
    %p103 = scmp.eq.s32.totalorder %s11, 0
    %p104 = por %p102, %p103
    %p105 = scmp.ne.s32.totalorder %s97, %s99
    %p106 = scmp.eq.s32.totalorder %s16, 1
    %p107 = por %p105, %p106
    %p108 = scmp.ne.s32.totalorder %s99, %s100
    %p109 = scmp.eq.s32.totalorder %s16, 0
    %p110 = por %p108, %p109
    %p111 = scmp.ne.s32.totalorder %s99, %s100
    %p112 = scmp.eq.s32.totalorder %s17, 1
    %p113 = por %p111, %p112
    %p115 = scmp.ne.s32.totalorder %s100, %s114
    %p116 = scmp.eq.s32.totalorder %s17, 0
    %p117 = por %p115, %p116
    %s119 = sadd.s32 %s118, 1
    %p122 = scmp.eq.s32.totalorder %s11, 1
    %p123 = scmp.ne.s32.totalorder %s118, %s120
    %p124 = scmp.eq.s32.totalorder %s11, 0
    %p125 = por %p123, %p124
    %p126 = scmp.ne.s32.totalorder %s118, %s120
    %p127 = scmp.eq.s32.totalorder %s16, 1
    %p128 = por %p126, %p127
    %p129 = scmp.ne.s32.totalorder %s120, %s121
    %p130 = scmp.eq.s32.totalorder %s16, 0
    %p131 = por %p129, %p130
    %p132 = scmp.ne.s32.totalorder %s120, %s121
    %p133 = scmp.eq.s32.totalorder %s17, 1
    %p134 = por %p132, %p133
    %p136 = scmp.ne.s32.totalorder %s121, %s135
    %p137 = scmp.eq.s32.totalorder %s17, 0
    %p138 = por %p136, %p137
    %s139 = ssub.s32 %s11, %s18
    %p140 = scmp.eq.s32.totalorder %s139, 0
    %s142 = sadd.s32 %s141, 1
    %s143 = scalar_select %p140, %s141, %s142
    %p146 = pneg %p140
    %p147 = scmp.eq.s32.totalorder %s11, 1
    %p148 = por %p146, %p147
    %p149 = scmp.ne.s32.totalorder %s141, %s144
    %p150 = scmp.eq.s32.totalorder %s11, 0
    %p151 = por %p149, %p150
    %p152 = scmp.ne.s32.totalorder %s141, %s144
    %p153 = scmp.eq.s32.totalorder %s16, 1
    %p154 = por %p152, %p153
    %p155 = scmp.ne.s32.totalorder %s144, %s145
    %p156 = scmp.eq.s32.totalorder %s16, 0
    %p157 = por %p155, %p156
    %p158 = scmp.ne.s32.totalorder %s144, %s145
    %p159 = scmp.eq.s32.totalorder %s17, 1
    %p160 = por %p158, %p159
    %p162 = scmp.ne.s32.totalorder %s145, %s161
    %p163 = scmp.eq.s32.totalorder %s17, 0
    %p164 = por %p162, %p163
    %p165 = scmp.le.s32.totalorder 1, %s11
    %p166 = scmp.lt.s32.totalorder %s11, 3
    %p167 = pnand %p165, %p166
    %p168 = pneg %p167
    // Predicated region
    $region9: #{unet_upsample_forward.5} parent=5 // pred_check
      _
    $region10: #{unet_upsample_forward.5} parent=5 // pred_check_branch
      %170 = sbr.rel (%p167) target = $region12
    $region11: #{unet_upsample_forward.5} parent=5 // pred_region
      %s171 = ssub.s32 %s11, 1
      // Predicated region
      $region13: #{unet_upsample_forward.5} parent=11 // pred_check
        %p172 = pneg %p110
      $region14: #{unet_upsample_forward.5} parent=11 // pred_check_branch
        %174 = sbr.rel (%p172) target = $region16
      $region15: #{unet_upsample_forward.5} parent=11 // pred_region
        _
      $region16: #{unet_upsample_forward.5} parent=11 // pred_fallthru
        _
      // Predicated region
      $region17: #{unet_upsample_forward.5} parent=11 // pred_check
        %p175 = pneg %p131
      $region18: #{unet_upsample_forward.5} parent=11 // pred_check_branch
        %177 = sbr.rel (%p175) target = $region20
      $region19: #{unet_upsample_forward.5} parent=11 // pred_region
        _
      $region20: #{unet_upsample_forward.5} parent=11 // pred_fallthru
        _
    $region12: #{unet_upsample_forward.5} parent=5 // pred_fallthru
      _
    %p178 = scmp.lt.s32.totalorder %s11, 2
    // Predicated region
    $region21: #{unet_upsample_forward.5} parent=5 // pred_check
      %p179 = pneg %p178
    $region22: #{unet_upsample_forward.5} parent=5 // pred_check_branch
      %181 = sbr.rel (%p179) target = $region24
    $region23: #{unet_upsample_forward.5} parent=5 // pred_region
      // Predicated region
      $region25: #{unet_upsample_forward.5} parent=23 // pred_check
        %p182 = pneg %p31
      $region26: #{unet_upsample_forward.5} parent=23 // pred_check_branch
        %184 = sbr.rel (%p182) target = $region28
      $region27: #{unet_upsample_forward.5} parent=23 // pred_region
        %p185 = scmp.lt.s32.totalorder %s11, 1
        %s186 = scalar_select %p185, %s11, 1
        %s187 = smul.addr %s186, 54
        %s188 = smul.addr %s187, 4
        %s189 = scalar_lea.vmem %s0, %s188
      $region28: #{unet_upsample_forward.5} parent=23 // pred_fallthru
        _
      // Predicated region
      $region29: #{unet_upsample_forward.5} parent=23 // pred_check
        %p190 = pneg %p57
      $region30: #{unet_upsample_forward.5} parent=23 // pred_check_branch
        %192 = sbr.rel (%p190) target = $region32
      $region31: #{unet_upsample_forward.5} parent=23 // pred_region
        %p193 = scmp.lt.s32.totalorder %s11, 1
        %s194 = scalar_select %p193, %s11, 1
        %s195 = smul.addr %s194, 54
        %s196 = smul.addr %s195, 4
        %s197 = scalar_lea.vmem %s1, %s196
      $region32: #{unet_upsample_forward.5} parent=23 // pred_fallthru
        _
      // Predicated region
      $region33: #{unet_upsample_forward.5} parent=23 // pred_check
        %p198 = pneg %p83
      $region34: #{unet_upsample_forward.5} parent=23 // pred_check_branch
        %200 = sbr.rel (%p198) target = $region36
      $region35: #{unet_upsample_forward.5} parent=23 // pred_region
        %p201 = scmp.lt.s32.totalorder %s11, 1
        %s202 = scalar_select %p201, %s11, 1
        %s203 = smul.addr %s202, 54
        %s204 = smul.addr %s203, 4
        %s205 = scalar_lea.vmem %s2, %s204
      $region36: #{unet_upsample_forward.5} parent=23 // pred_fallthru
        _
    $region24: #{unet_upsample_forward.5} parent=5 // pred_fallthru
      _
    %p206 = scmp.le.s32.totalorder 1, %s11
    %p207 = scmp.lt.s32.totalorder %s11, 3
    %p208 = pnand %p206, %p207
    %p209 = pneg %p208
    // Predicated region
    $region37: #{unet_upsample_forward.5} parent=5 // pred_check
      _
    $region38: #{unet_upsample_forward.5} parent=5 // pred_check_branch
      %211 = sbr.rel (%p208) target = $region40
    $region39: #{unet_upsample_forward.5} parent=5 // pred_region
      %s212 = ssub.s32 %s11, 1
      %p213 = scmp.lt.s32.totalorder %s16, 1
      %s214 = scalar_select %p213, %s16, 1
      %s215 = smul.addr %s214, 54
      %s216 = smul.addr %s215, 4
      %s217 = scalar_lea.vmem %s0, %s216
      %p218 = pneg %p37
      %p219 = pneg %p34
      %p220 = scmp.lt.s32.totalorder %s16, 1
      %s221 = scalar_select %p220, %s16, 1
      %s222 = smul.addr %s221, 54
      %s223 = smul.addr %s222, 4
      %s224 = scalar_lea.vmem %s1, %s223
      %p225 = pneg %p63
      %p226 = pneg %p60
      %p227 = scmp.lt.s32.totalorder %s16, 1
      %s228 = scalar_select %p227, %s16, 1
      %s229 = smul.addr %s228, 54
      %s230 = smul.addr %s229, 4
      %s231 = scalar_lea.vmem %s2, %s230
      %p232 = pneg %p89
      %p233 = pneg %p86
      %p234 = pneg %p110
      %p235 = pneg %p107
      %p236 = pneg %p131
      %p237 = pneg %p128
      %p238 = pneg %p157
      %p239 = pneg %p154
      %p240 = scmp.lt.s32.totalorder %s16, 1
      %s241 = scalar_select %p240, %s16, 1
      %s242 = smul.addr %s241, 32
      %s243 = smul.addr %s242, 8
      %s244 = scalar_lea.vmem %s5, %s243
      %p245 = scmp.lt.s32.totalorder %s16, 1
      %s246 = scalar_select %p245, %s16, 1
      %s247 = smul.addr %s246, 54
      %s248 = smul.addr %s247, 4
      %s249 = scalar_lea.vmem %s0, %s248
      %p250 = scmp.lt.s32.totalorder %s16, 1
      %s251 = scalar_select %p250, %s16, 1
      %s252 = smul.addr %s251, 54
      %s253 = smul.addr %s252, 4
      %s254 = scalar_lea.vmem %s1, %s253
      %p255 = scmp.lt.s32.totalorder %s16, 1
      %s256 = scalar_select %p255, %s16, 1
      %s257 = smul.addr %s256, 54
      %s258 = smul.addr %s257, 4
      %s259 = scalar_lea.vmem %s2, %s258
      %p260 = scmp.lt.s32.totalorder %s16, 1
      %s261 = scalar_select %p260, %s16, 1
      %s262 = smul.addr %s261, 32
      %s263 = smul.addr %s262, 8
      %s264 = scalar_lea.vmem %s5, %s263
      %v266 = vld [vmem:[%s249] sm:$0xf]
      %v267 = vld [vmem:[%s249 + $0x4] sm:$0xf]
      %v268 = vld [vmem:[%s249 + $0x8] sm:$0x1]
      %v269 = vld [vmem:[%s249 + $0xc] sm:$0xf]
      %v270 = vld [vmem:[%s249 + $0x10] sm:$0xf]
      %v271 = vld [vmem:[%s249 + $0x14] sm:$0x1]
      %v272 = vld [vmem:[%s249 + $0x18] sm:$0xf]
      %v273 = vld [vmem:[%s249 + $0x1c] sm:$0xf]
      %v274 = vld [vmem:[%s249 + $0x20] sm:$0x1]
      %v275 = vld [vmem:[%s249 + $0x24] sm:$0xf]
      %v276 = vld [vmem:[%s249 + $0x28] sm:$0xf]
      %v277 = vld [vmem:[%s249 + $0x2c] sm:$0x1]
      %v278 = vld [vmem:[%s249 + $0x30] sm:$0xf]
      %v279 = vld [vmem:[%s249 + $0x34] sm:$0xf]
      %v280 = vld [vmem:[%s249 + $0x38] sm:$0x1]
      %v281 = vld [vmem:[%s249 + $0x3c] sm:$0xf]
      %v282 = vld [vmem:[%s249 + $0x40] sm:$0xf]
      %v283 = vld [vmem:[%s249 + $0x44] sm:$0x1]
      %v284 = vld [vmem:[%s249 + $0x48] sm:$0xf]
      %v285 = vld [vmem:[%s249 + $0x4c] sm:$0xf]
      %v286 = vld [vmem:[%s249 + $0x50] sm:$0x1]
      %v287 = vld [vmem:[%s249 + $0x54] sm:$0xf]
      %v288 = vld [vmem:[%s249 + $0x58] sm:$0xf]
      %v289 = vld [vmem:[%s249 + $0x5c] sm:$0x1]
      %v290 = vld [vmem:[%s249 + $0x60] sm:$0xf]
      %v291 = vld [vmem:[%s249 + $0x64] sm:$0xf]
      %v292 = vld [vmem:[%s249 + $0x68] sm:$0x1]
      %v293 = vld [vmem:[%s249 + $0x6c] sm:$0xf]
      %v294 = vld [vmem:[%s249 + $0x70] sm:$0xf]
      %v295 = vld [vmem:[%s249 + $0x74] sm:$0x1]
      %v296 = vld [vmem:[%s249 + $0x78] sm:$0xf]
      %v297 = vld [vmem:[%s249 + $0x7c] sm:$0xf]
      %v298 = vld [vmem:[%s249 + $0x80] sm:$0x1]
      %v299 = vld [vmem:[%s249 + $0x84] sm:$0xf]
      %v300 = vld [vmem:[%s249 + $0x88] sm:$0xf]
      %v301 = vld [vmem:[%s249 + $0x8c] sm:$0x1]
      %v302 = vld [vmem:[%s249 + $0x90] sm:$0xf]
      %v303 = vld [vmem:[%s249 + $0x94] sm:$0xf]
      %v304 = vld [vmem:[%s249 + $0x98] sm:$0x1]
      %v305 = vld [vmem:[%s249 + $0x9c] sm:$0xf]
      %v306 = vld [vmem:[%s249 + $0xa0] sm:$0xf]
      %v307 = vld [vmem:[%s249 + $0xa4] sm:$0x1]
      %v308 = vld [vmem:[%s249 + $0xa8] sm:$0xf]
      %v309 = vld [vmem:[%s249 + $0xac] sm:$0xf]
      %v310 = vld [vmem:[%s249 + $0xb0] sm:$0x1]
      %v311 = vld [vmem:[%s249 + $0xb4] sm:$0xf]
      %v312 = vld [vmem:[%s249 + $0xb8] sm:$0xf]
      %v313 = vld [vmem:[%s249 + $0xbc] sm:$0x1]
      %v314 = vld [vmem:[%s249 + $0xc0] sm:$0xf]
      %v315 = vld [vmem:[%s249 + $0xc4] sm:$0xf]
      %v316 = vld [vmem:[%s249 + $0xc8] sm:$0x1]
      %v317 = vld [vmem:[%s249 + $0xcc] sm:$0xf]
      %v318 = vld [vmem:[%s249 + $0xd0] sm:$0xf]
      %v319 = vld [vmem:[%s249 + $0xd4] sm:$0x1]
      %v320 = vld [vmem:[%s254 + $0xc] sm:$0xf]
      %v321 = vld [vmem:[%s254 + $0x10] sm:$0xf]
      %v322 = vld [vmem:[%s254 + $0x14] sm:$0x1]
      %v323 = vld [vmem:[%s254 + $0x18] sm:$0xf]
      %v324 = vld [vmem:[%s254 + $0x1c] sm:$0xf]
      %v325 = vld [vmem:[%s254 + $0x20] sm:$0x1]
      %v326 = vld [vmem:[%s254 + $0x24] sm:$0xf]
      %v327 = vld [vmem:[%s254 + $0x28] sm:$0xf]
      %v328 = vld [vmem:[%s254 + $0x2c] sm:$0x1]
      %v329 = vld [vmem:[%s254 + $0x30] sm:$0xf]
      %v330 = vld [vmem:[%s254 + $0x34] sm:$0xf]
      %v331 = vld [vmem:[%s254 + $0x38] sm:$0x1]
      %v332 = vld [vmem:[%s254 + $0x3c] sm:$0xf]
      %v333 = vld [vmem:[%s254 + $0x40] sm:$0xf]
      %v334 = vld [vmem:[%s254 + $0x44] sm:$0x1]
      %v335 = vld [vmem:[%s254 + $0x48] sm:$0xf]
      %v336 = vld [vmem:[%s254 + $0x4c] sm:$0xf]
      %v337 = vld [vmem:[%s254 + $0x50] sm:$0x1]
      %v338 = vld [vmem:[%s254 + $0x54] sm:$0xf]
      %v339 = vld [vmem:[%s254 + $0x58] sm:$0xf]
      %v340 = vld [vmem:[%s254 + $0x5c] sm:$0x1]
      %v341 = vld [vmem:[%s254 + $0x60] sm:$0xf]
      %v342 = vld [vmem:[%s254 + $0x64] sm:$0xf]
      %v343 = vld [vmem:[%s254 + $0x68] sm:$0x1]
      %v344 = vld [vmem:[%s254 + $0x6c] sm:$0xf]
      %v345 = vld [vmem:[%s254 + $0x70] sm:$0xf]
      %v346 = vld [vmem:[%s254 + $0x74] sm:$0x1]
      %v347 = vld [vmem:[%s254 + $0x78] sm:$0xf]
      %v348 = vld [vmem:[%s254 + $0x7c] sm:$0xf]
      %v349 = vld [vmem:[%s254 + $0x80] sm:$0x1]
      %v350 = vld [vmem:[%s254 + $0x84] sm:$0xf]
      %v351 = vld [vmem:[%s254 + $0x88] sm:$0xf]
      %v352 = vld [vmem:[%s254 + $0x8c] sm:$0x1]
      %v353 = vld [vmem:[%s254 + $0x90] sm:$0xf]
      %v354 = vld [vmem:[%s254 + $0x94] sm:$0xf]
      %v355 = vld [vmem:[%s254 + $0x98] sm:$0x1]
      %v356 = vld [vmem:[%s254 + $0x9c] sm:$0xf]
      %v357 = vld [vmem:[%s254 + $0xa0] sm:$0xf]
      %v358 = vld [vmem:[%s254 + $0xa4] sm:$0x1]
      %v359 = vld [vmem:[%s254 + $0xa8] sm:$0xf]
      %v360 = vld [vmem:[%s254 + $0xac] sm:$0xf]
      %v361 = vld [vmem:[%s254 + $0xb0] sm:$0x1]
      %v362 = vld [vmem:[%s254 + $0xb4] sm:$0xf]
      %v363 = vld [vmem:[%s254 + $0xb8] sm:$0xf]
      %v364 = vld [vmem:[%s254 + $0xbc] sm:$0x1]
      %v365 = vld [vmem:[%s254 + $0xc0] sm:$0xf]
      %v366 = vld [vmem:[%s254 + $0xc4] sm:$0xf]
      %v367 = vld [vmem:[%s254 + $0xc8] sm:$0x1]
      %v368 = vld [vmem:[%s259 + $0xc] sm:$0xf]
      %v369 = vld [vmem:[%s259 + $0x10] sm:$0xf]
      %v370 = vld [vmem:[%s259 + $0x14] sm:$0x1]
      %v371 = vld [vmem:[%s259 + $0x18] sm:$0xf]
      %v372 = vld [vmem:[%s259 + $0x1c] sm:$0xf]
      %v373 = vld [vmem:[%s259 + $0x20] sm:$0x1]
      %v374 = vld [vmem:[%s259 + $0x24] sm:$0xf]
      %v375 = vld [vmem:[%s259 + $0x28] sm:$0xf]
      %v376 = vld [vmem:[%s259 + $0x2c] sm:$0x1]
      %v377 = vld [vmem:[%s259 + $0x30] sm:$0xf]
      %v378 = vld [vmem:[%s259 + $0x34] sm:$0xf]
      %v379 = vld [vmem:[%s259 + $0x38] sm:$0x1]
      %v380 = vld [vmem:[%s259 + $0x3c] sm:$0xf]
      %v381 = vld [vmem:[%s259 + $0x40] sm:$0xf]
      %v382 = vld [vmem:[%s259 + $0x44] sm:$0x1]
      %v383 = vld [vmem:[%s259 + $0x48] sm:$0xf]
      %v384 = vld [vmem:[%s259 + $0x4c] sm:$0xf]
      %v385 = vld [vmem:[%s259 + $0x50] sm:$0x1]
      %v386 = vld [vmem:[%s259 + $0x54] sm:$0xf]
      %v387 = vld [vmem:[%s259 + $0x58] sm:$0xf]
      %v388 = vld [vmem:[%s259 + $0x5c] sm:$0x1]
      %v389 = vld [vmem:[%s259 + $0x60] sm:$0xf]
      %v390 = vld [vmem:[%s259 + $0x64] sm:$0xf]
      %v391 = vld [vmem:[%s259 + $0x68] sm:$0x1]
      %v392 = vld [vmem:[%s259 + $0x6c] sm:$0xf]
      %v393 = vld [vmem:[%s259 + $0x70] sm:$0xf]
      %v394 = vld [vmem:[%s259 + $0x74] sm:$0x1]
      %v395 = vld [vmem:[%s259 + $0x78] sm:$0xf]
      %v396 = vld [vmem:[%s259 + $0x7c] sm:$0xf]
      %v397 = vld [vmem:[%s259 + $0x80] sm:$0x1]
      %v398 = vld [vmem:[%s259 + $0x84] sm:$0xf]
      %v399 = vld [vmem:[%s259 + $0x88] sm:$0xf]
      %v400 = vld [vmem:[%s259 + $0x8c] sm:$0x1]
      %v401 = vld [vmem:[%s259 + $0x90] sm:$0xf]
      %v402 = vld [vmem:[%s259 + $0x94] sm:$0xf]
      %v403 = vld [vmem:[%s259 + $0x98] sm:$0x1]
      %v404 = vld [vmem:[%s259 + $0x9c] sm:$0xf]
      %v405 = vld [vmem:[%s259 + $0xa0] sm:$0xf]
      %v406 = vld [vmem:[%s259 + $0xa4] sm:$0x1]
      %v407 = vld [vmem:[%s259 + $0xa8] sm:$0xf]
      %v408 = vld [vmem:[%s259 + $0xac] sm:$0xf]
      %v409 = vld [vmem:[%s259 + $0xb0] sm:$0x1]
      %v410 = vld [vmem:[%s259 + $0xb4] sm:$0xf]
      %v411 = vld [vmem:[%s259 + $0xb8] sm:$0xf]
      %v412 = vld [vmem:[%s259 + $0xbc] sm:$0x1]
      %v413 = vld [vmem:[%s259 + $0xc0] sm:$0xf]
      %v414 = vld [vmem:[%s259 + $0xc4] sm:$0xf]
      %v415 = vld [vmem:[%s259 + $0xc8] sm:$0x1]
      %v448 = vunpack.c.l.b16 %v266
      %v449 = vunpack.c.l.b16 %v267
      %v450 = vunpack.c.l.b16 %v269
      %v451 = vunpack.c.l.b16 %v270
      %v452 = vunpack.c.l.b16 %v272
      %v453 = vunpack.c.l.b16 %v273
      %v454 = vunpack.c.l.b16 %v275
      %v455 = vunpack.c.l.b16 %v276
      %v456 = vunpack.c.l.b16 %v278
      %v457 = vunpack.c.l.b16 %v279
      %v458 = vunpack.c.l.b16 %v281
      %v459 = vunpack.c.l.b16 %v282
      %v460 = vunpack.c.l.b16 %v284
      %v461 = vunpack.c.l.b16 %v285
      %v462 = vunpack.c.l.b16 %v287
      %v463 = vunpack.c.l.b16 %v288
      %v464 = vunpack.c.l.b16 %v290
      %v465 = vunpack.c.l.b16 %v291
      %v466 = vunpack.c.l.b16 %v293
      %v467 = vunpack.c.l.b16 %v294
      %v468 = vunpack.c.l.b16 %v296
      %v469 = vunpack.c.l.b16 %v297
      %v470 = vunpack.c.l.b16 %v299
      %v471 = vunpack.c.l.b16 %v300
      %v472 = vunpack.c.l.b16 %v302
      %v473 = vunpack.c.l.b16 %v303
      %v474 = vunpack.c.l.b16 %v305
      %v475 = vunpack.c.l.b16 %v306
      %v476 = vunpack.c.l.b16 %v308
      %v477 = vunpack.c.l.b16 %v309
      %v478 = vunpack.c.l.b16 %v311
      %v479 = vunpack.c.l.b16 %v312
      %v480 = vpack.c.b16 %v449, %v448
      %v481 = vpack.c.b16 %v451, %v450
      %v482 = vpack.c.b16 %v453, %v452
      %v483 = vpack.c.b16 %v455, %v454
      %v484 = vpack.c.b16 %v457, %v456
      %v485 = vpack.c.b16 %v459, %v458
      %v486 = vpack.c.b16 %v461, %v460
      %v487 = vpack.c.b16 %v463, %v462
      %v488 = vpack.c.b16 %v465, %v464
      %v489 = vpack.c.b16 %v467, %v466
      %v490 = vpack.c.b16 %v469, %v468
      %v491 = vpack.c.b16 %v471, %v470
      %v492 = vpack.c.b16 %v473, %v472
      %v493 = vpack.c.b16 %v475, %v474
      %v494 = vpack.c.b16 %v477, %v476
      %v495 = vpack.c.b16 %v479, %v478
      %v512 = vunpack.c.l.b16 %v268
      %v513 = vunpack.c.l.b16 %v271
      %v514 = vunpack.c.l.b16 %v274
      %v515 = vunpack.c.l.b16 %v277
      %v516 = vunpack.c.l.b16 %v280
      %v517 = vunpack.c.l.b16 %v283
      %v518 = vunpack.c.l.b16 %v286
      %v519 = vunpack.c.l.b16 %v289
      %v520 = vunpack.c.l.b16 %v292
      %v521 = vunpack.c.l.b16 %v295
      %v522 = vunpack.c.l.b16 %v298
      %v523 = vunpack.c.l.b16 %v301
      %v524 = vunpack.c.l.b16 %v304
      %v525 = vunpack.c.l.b16 %v307
      %v526 = vunpack.c.l.b16 %v310
      %v527 = vunpack.c.l.b16 %v313
      %v528 = vpack.c.b16 %v512, %v512
      %v529 = vpack.c.b16 %v513, %v513
      %v530 = vpack.c.b16 %v514, %v514
      %v531 = vpack.c.b16 %v515, %v515
      %v532 = vpack.c.b16 %v516, %v516
      %v533 = vpack.c.b16 %v517, %v517
      %v534 = vpack.c.b16 %v518, %v518
      %v535 = vpack.c.b16 %v519, %v519
      %v536 = vpack.c.b16 %v520, %v520
      %v537 = vpack.c.b16 %v521, %v521
      %v538 = vpack.c.b16 %v522, %v522
      %v539 = vpack.c.b16 %v523, %v523
      %v540 = vpack.c.b16 %v524, %v524
      %v541 = vpack.c.b16 %v525, %v525
      %v542 = vpack.c.b16 %v526, %v526
      %v543 = vpack.c.b16 %v527, %v527
      %vm544 = vsmask.f32 7424
      %v546 = vshrl.u32 %v480, 16
      %v548 = vshll.u32 %v480, 16
      %v550 = vrot.slane %v548, 1
      %v551 = vor.u32 %v546, %v550
      %v553 = vshll.u32 %v528, 16
      %v555 = vrot.slane %v553, 1
      %v556 = vsel %vm544, %v551, %v555
      %v558 = vshrl.u32 %v481, 16
      %v560 = vshll.u32 %v481, 16
      %v562 = vrot.slane %v560, 1
      %v563 = vor.u32 %v558, %v562
      %v565 = vshll.u32 %v529, 16
      %v567 = vrot.slane %v565, 1
      %v568 = vsel %vm544, %v563, %v567
      %v570 = vshrl.u32 %v482, 16
      %v572 = vshll.u32 %v482, 16
      %v574 = vrot.slane %v572, 1
      %v575 = vor.u32 %v570, %v574
      %v577 = vshll.u32 %v530, 16
      %v579 = vrot.slane %v577, 1
      %v580 = vsel %vm544, %v575, %v579
      %v582 = vshrl.u32 %v483, 16
      %v584 = vshll.u32 %v483, 16
      %v586 = vrot.slane %v584, 1
      %v587 = vor.u32 %v582, %v586
      %v589 = vshll.u32 %v531, 16
      %v591 = vrot.slane %v589, 1
      %v592 = vsel %vm544, %v587, %v591
      %v594 = vshrl.u32 %v484, 16
      %v596 = vshll.u32 %v484, 16
      %v598 = vrot.slane %v596, 1
      %v599 = vor.u32 %v594, %v598
      %v601 = vshll.u32 %v532, 16
      %v603 = vrot.slane %v601, 1
      %v604 = vsel %vm544, %v599, %v603
      %v606 = vshrl.u32 %v485, 16
      %v608 = vshll.u32 %v485, 16
      %v610 = vrot.slane %v608, 1
      %v611 = vor.u32 %v606, %v610
      %v613 = vshll.u32 %v533, 16
      %v615 = vrot.slane %v613, 1
      %v616 = vsel %vm544, %v611, %v615
      %v618 = vshrl.u32 %v486, 16
      %v620 = vshll.u32 %v486, 16
      %v622 = vrot.slane %v620, 1
      %v623 = vor.u32 %v618, %v622
      %v625 = vshll.u32 %v534, 16
      %v627 = vrot.slane %v625, 1
      %v628 = vsel %vm544, %v623, %v627
      %v630 = vshrl.u32 %v487, 16
      %v632 = vshll.u32 %v487, 16
      %v634 = vrot.slane %v632, 1
      %v635 = vor.u32 %v630, %v634
      %v637 = vshll.u32 %v535, 16
      %v639 = vrot.slane %v637, 1
      %v640 = vsel %vm544, %v635, %v639
      %v642 = vshrl.u32 %v488, 16
      %v644 = vshll.u32 %v488, 16
      %v646 = vrot.slane %v644, 1
      %v647 = vor.u32 %v642, %v646
      %v649 = vshll.u32 %v536, 16
      %v651 = vrot.slane %v649, 1
      %v652 = vsel %vm544, %v647, %v651
      %v654 = vshrl.u32 %v489, 16
      %v656 = vshll.u32 %v489, 16
      %v658 = vrot.slane %v656, 1
      %v659 = vor.u32 %v654, %v658
      %v661 = vshll.u32 %v537, 16
      %v663 = vrot.slane %v661, 1
      %v664 = vsel %vm544, %v659, %v663
      %v666 = vshrl.u32 %v490, 16
      %v668 = vshll.u32 %v490, 16
      %v670 = vrot.slane %v668, 1
      %v671 = vor.u32 %v666, %v670
      %v673 = vshll.u32 %v538, 16
      %v675 = vrot.slane %v673, 1
      %v676 = vsel %vm544, %v671, %v675
      %v678 = vshrl.u32 %v491, 16
      %v680 = vshll.u32 %v491, 16
      %v682 = vrot.slane %v680, 1
      %v683 = vor.u32 %v678, %v682
      %v685 = vshll.u32 %v539, 16
      %v687 = vrot.slane %v685, 1
      %v688 = vsel %vm544, %v683, %v687
      %v690 = vshrl.u32 %v492, 16
      %v692 = vshll.u32 %v492, 16
      %v694 = vrot.slane %v692, 1
      %v695 = vor.u32 %v690, %v694
      %v697 = vshll.u32 %v540, 16
      %v699 = vrot.slane %v697, 1
      %v700 = vsel %vm544, %v695, %v699
      %v702 = vshrl.u32 %v493, 16
      %v704 = vshll.u32 %v493, 16
      %v706 = vrot.slane %v704, 1
      %v707 = vor.u32 %v702, %v706
      %v709 = vshll.u32 %v541, 16
      %v711 = vrot.slane %v709, 1
      %v712 = vsel %vm544, %v707, %v711
      %v714 = vshrl.u32 %v494, 16
      %v716 = vshll.u32 %v494, 16
      %v718 = vrot.slane %v716, 1
      %v719 = vor.u32 %v714, %v718
      %v721 = vshll.u32 %v542, 16
      %v723 = vrot.slane %v721, 1
      %v724 = vsel %vm544, %v719, %v723
      %v726 = vshrl.u32 %v495, 16
      %v728 = vshll.u32 %v495, 16
      %v730 = vrot.slane %v728, 1
      %v731 = vor.u32 %v726, %v730
      %v733 = vshll.u32 %v543, 16
      %v735 = vrot.slane %v733, 1
      %v736 = vsel %vm544, %v731, %v735
      %737 = vrot.lane.b32.xlu0 %v556, 8
      %v738 = vpop.permute.xlu0 %737
      %739 = vrot.lane.b32.xlu0 %v568, 8
      %v740 = vpop.permute.xlu0 %739
      %741 = vrot.lane.b32.xlu0 %v580, 8
      %v742 = vpop.permute.xlu0 %741
      %743 = vrot.lane.b32.xlu0 %v592, 8
      %v744 = vpop.permute.xlu0 %743
      %745 = vrot.lane.b32.xlu0 %v604, 8
      %v746 = vpop.permute.xlu0 %745
      %747 = vrot.lane.b32.xlu0 %v616, 8
      %v748 = vpop.permute.xlu0 %747
      %749 = vrot.lane.b32.xlu0 %v628, 8
      %v750 = vpop.permute.xlu0 %749
      %751 = vrot.lane.b32.xlu0 %v640, 8
      %v752 = vpop.permute.xlu0 %751
      %753 = vrot.lane.b32.xlu0 %v652, 8
      %v754 = vpop.permute.xlu0 %753
      %755 = vrot.lane.b32.xlu0 %v664, 8
      %v756 = vpop.permute.xlu0 %755
      %757 = vrot.lane.b32.xlu0 %v676, 8
      %v758 = vpop.permute.xlu0 %757
      %759 = vrot.lane.b32.xlu0 %v688, 8
      %v760 = vpop.permute.xlu0 %759
      %761 = vrot.lane.b32.xlu0 %v700, 8
      %v762 = vpop.permute.xlu0 %761
      %763 = vrot.lane.b32.xlu0 %v712, 8
      %v764 = vpop.permute.xlu0 %763
      %765 = vrot.lane.b32.xlu0 %v724, 8
      %v766 = vpop.permute.xlu0 %765
      %767 = vrot.lane.b32.xlu0 %v736, 8
      %v768 = vpop.permute.xlu0 %767
      %vm769 = vcmask 1046528
      %v770 = vrot.slane %v480, 1
      %v771 = vrot.slane %v528, 1
      %v772 = vsel %vm769, %v770, %v771
      %v773 = vrot.slane %v481, 1
      %v774 = vrot.slane %v529, 1
      %v775 = vsel %vm769, %v773, %v774
      %v776 = vrot.slane %v482, 1
      %v777 = vrot.slane %v530, 1
      %v778 = vsel %vm769, %v776, %v777
      %v779 = vrot.slane %v483, 1
      %v780 = vrot.slane %v531, 1
      %v781 = vsel %vm769, %v779, %v780
      %v782 = vrot.slane %v484, 1
      %v783 = vrot.slane %v532, 1
      %v784 = vsel %vm769, %v782, %v783
      %v785 = vrot.slane %v485, 1
      %v786 = vrot.slane %v533, 1
      %v787 = vsel %vm769, %v785, %v786
      %v788 = vrot.slane %v486, 1
      %v789 = vrot.slane %v534, 1
      %v790 = vsel %vm769, %v788, %v789
      %v791 = vrot.slane %v487, 1
      %v792 = vrot.slane %v535, 1
      %v793 = vsel %vm769, %v791, %v792
      %v794 = vrot.slane %v488, 1
      %v795 = vrot.slane %v536, 1
      %v796 = vsel %vm769, %v794, %v795
      %v797 = vrot.slane %v489, 1
      %v798 = vrot.slane %v537, 1
      %v799 = vsel %vm769, %v797, %v798
      %v800 = vrot.slane %v490, 1
      %v801 = vrot.slane %v538, 1
      %v802 = vsel %vm769, %v800, %v801
      %v803 = vrot.slane %v491, 1
      %v804 = vrot.slane %v539, 1
      %v805 = vsel %vm769, %v803, %v804
      %v806 = vrot.slane %v492, 1
      %v807 = vrot.slane %v540, 1
      %v808 = vsel %vm769, %v806, %v807
      %v809 = vrot.slane %v493, 1
      %v810 = vrot.slane %v541, 1
      %v811 = vsel %vm769, %v809, %v810
      %v812 = vrot.slane %v494, 1
      %v813 = vrot.slane %v542, 1
      %v814 = vsel %vm769, %v812, %v813
      %v815 = vrot.slane %v495, 1
      %v816 = vrot.slane %v543, 1
      %v817 = vsel %vm769, %v815, %v816
      %818 = vrot.lane.b32.xlu0 %v772, 16
      %v819 = vpop.permute.xlu0 %818
      %820 = vrot.lane.b32.xlu0 %v775, 16
      %v821 = vpop.permute.xlu0 %820
      %822 = vrot.lane.b32.xlu0 %v778, 16
      %v823 = vpop.permute.xlu0 %822
      %824 = vrot.lane.b32.xlu0 %v781, 16
      %v825 = vpop.permute.xlu0 %824
      %826 = vrot.lane.b32.xlu0 %v784, 16
      %v827 = vpop.permute.xlu0 %826
      %828 = vrot.lane.b32.xlu0 %v787, 16
      %v829 = vpop.permute.xlu0 %828
      %830 = vrot.lane.b32.xlu0 %v790, 16
      %v831 = vpop.permute.xlu0 %830
      %832 = vrot.lane.b32.xlu0 %v793, 16
      %v833 = vpop.permute.xlu0 %832
      %834 = vrot.lane.b32.xlu0 %v796, 16
      %v835 = vpop.permute.xlu0 %834
      %836 = vrot.lane.b32.xlu0 %v799, 16
      %v837 = vpop.permute.xlu0 %836
      %838 = vrot.lane.b32.xlu0 %v802, 16
      %v839 = vpop.permute.xlu0 %838
      %840 = vrot.lane.b32.xlu0 %v805, 16
      %v841 = vpop.permute.xlu0 %840
      %842 = vrot.lane.b32.xlu0 %v808, 16
      %v843 = vpop.permute.xlu0 %842
      %844 = vrot.lane.b32.xlu0 %v811, 16
      %v845 = vpop.permute.xlu0 %844
      %846 = vrot.lane.b32.xlu0 %v814, 16
      %v847 = vpop.permute.xlu0 %846
      %848 = vrot.lane.b32.xlu0 %v817, 16
      %v849 = vpop.permute.xlu0 %848
      %v852 = vunpack.c.l.b16 %v314
      %v853 = vunpack.c.l.b16 %v315
      %v854 = vpack.c.b16 %v853, %v852
      %855 = vrot.lane.b32.xlu0 %v481, 24
      %v856 = vpop.permute.xlu0 %855
      %857 = vrot.lane.b32.xlu0 %v482, 24
      %v858 = vpop.permute.xlu0 %857
      %859 = vrot.lane.b32.xlu0 %v483, 24
      %v860 = vpop.permute.xlu0 %859
      %861 = vrot.lane.b32.xlu0 %v484, 24
      %v862 = vpop.permute.xlu0 %861
      %863 = vrot.lane.b32.xlu0 %v485, 24
      %v864 = vpop.permute.xlu0 %863
      %865 = vrot.lane.b32.xlu0 %v486, 24
      %v866 = vpop.permute.xlu0 %865
      %867 = vrot.lane.b32.xlu0 %v487, 24
      %v868 = vpop.permute.xlu0 %867
      %869 = vrot.lane.b32.xlu0 %v488, 24
      %v870 = vpop.permute.xlu0 %869
      %871 = vrot.lane.b32.xlu0 %v489, 24
      %v872 = vpop.permute.xlu0 %871
      %873 = vrot.lane.b32.xlu0 %v490, 24
      %v874 = vpop.permute.xlu0 %873
      %875 = vrot.lane.b32.xlu0 %v491, 24
      %v876 = vpop.permute.xlu0 %875
      %877 = vrot.lane.b32.xlu0 %v492, 24
      %v878 = vpop.permute.xlu0 %877
      %879 = vrot.lane.b32.xlu0 %v493, 24
      %v880 = vpop.permute.xlu0 %879
      %881 = vrot.lane.b32.xlu0 %v494, 24
      %v882 = vpop.permute.xlu0 %881
      %883 = vrot.lane.b32.xlu0 %v495, 24
      %v884 = vpop.permute.xlu0 %883
      %885 = vrot.lane.b32.xlu0 %v854, 24
      %v886 = vpop.permute.xlu0 %885
      %v888 = vunpack.c.l.b16 %v316
      %v889 = vpack.c.b16 %v888, %v888
      %v891 = vshrl.u32 %v854, 16
      %v893 = vshll.u32 %v854, 16
      %v895 = vrot.slane %v893, 1
      %v896 = vor.u32 %v891, %v895
      %v898 = vshll.u32 %v889, 16
      %v900 = vrot.slane %v898, 1
      %v901 = vsel %vm544, %v896, %v900
      %902 = vrot.lane.b32.xlu0 %v568, 32
      %v903 = vpop.permute.xlu0 %902
      %904 = vrot.lane.b32.xlu0 %v580, 32
      %v905 = vpop.permute.xlu0 %904
      %906 = vrot.lane.b32.xlu0 %v592, 32
      %v907 = vpop.permute.xlu0 %906
      %908 = vrot.lane.b32.xlu0 %v604, 32
      %v909 = vpop.permute.xlu0 %908
      %910 = vrot.lane.b32.xlu0 %v616, 32
      %v911 = vpop.permute.xlu0 %910
      %912 = vrot.lane.b32.xlu0 %v628, 32
      %v913 = vpop.permute.xlu0 %912
      %914 = vrot.lane.b32.xlu0 %v640, 32
      %v915 = vpop.permute.xlu0 %914
      %916 = vrot.lane.b32.xlu0 %v652, 32
      %v917 = vpop.permute.xlu0 %916
      %918 = vrot.lane.b32.xlu0 %v664, 32
      %v919 = vpop.permute.xlu0 %918
      %920 = vrot.lane.b32.xlu0 %v676, 32
      %v921 = vpop.permute.xlu0 %920
      %922 = vrot.lane.b32.xlu0 %v688, 32
      %v923 = vpop.permute.xlu0 %922
      %924 = vrot.lane.b32.xlu0 %v700, 32
      %v925 = vpop.permute.xlu0 %924
      %926 = vrot.lane.b32.xlu0 %v712, 32
      %v927 = vpop.permute.xlu0 %926
      %928 = vrot.lane.b32.xlu0 %v724, 32
      %v929 = vpop.permute.xlu0 %928
      %930 = vrot.lane.b32.xlu0 %v736, 32
      %v931 = vpop.permute.xlu0 %930
      %932 = vrot.lane.b32.xlu0 %v901, 32
      %v933 = vpop.permute.xlu0 %932
      %v934 = vrot.slane %v854, 1
      %v935 = vrot.slane %v889, 1
      %v936 = vsel %vm769, %v934, %v935
      %937 = vrot.lane.b32.xlu0 %v775, 40
      %v938 = vpop.permute.xlu0 %937
      %939 = vrot.lane.b32.xlu0 %v778, 40
      %v940 = vpop.permute.xlu0 %939
      %941 = vrot.lane.b32.xlu0 %v781, 40
      %v942 = vpop.permute.xlu0 %941
      %943 = vrot.lane.b32.xlu0 %v784, 40
      %v944 = vpop.permute.xlu0 %943
      %945 = vrot.lane.b32.xlu0 %v787, 40
      %v946 = vpop.permute.xlu0 %945
      %947 = vrot.lane.b32.xlu0 %v790, 40
      %v948 = vpop.permute.xlu0 %947
      %949 = vrot.lane.b32.xlu0 %v793, 40
      %v950 = vpop.permute.xlu0 %949
      %951 = vrot.lane.b32.xlu0 %v796, 40
      %v952 = vpop.permute.xlu0 %951
      %953 = vrot.lane.b32.xlu0 %v799, 40
      %v954 = vpop.permute.xlu0 %953
      %955 = vrot.lane.b32.xlu0 %v802, 40
      %v956 = vpop.permute.xlu0 %955
      %957 = vrot.lane.b32.xlu0 %v805, 40
      %v958 = vpop.permute.xlu0 %957
      %959 = vrot.lane.b32.xlu0 %v808, 40
      %v960 = vpop.permute.xlu0 %959
      %961 = vrot.lane.b32.xlu0 %v811, 40
      %v962 = vpop.permute.xlu0 %961
      %963 = vrot.lane.b32.xlu0 %v814, 40
      %v964 = vpop.permute.xlu0 %963
      %965 = vrot.lane.b32.xlu0 %v817, 40
      %v966 = vpop.permute.xlu0 %965
      %967 = vrot.lane.b32.xlu0 %v936, 40
      %v968 = vpop.permute.xlu0 %967
      %v971 = vunpack.c.l.b16 %v317
      %v972 = vunpack.c.l.b16 %v318
      %v973 = vpack.c.b16 %v972, %v971
      %974 = vrot.lane.b32.xlu0 %v482, 48
      %v975 = vpop.permute.xlu0 %974
      %976 = vrot.lane.b32.xlu0 %v483, 48
      %v977 = vpop.permute.xlu0 %976
      %978 = vrot.lane.b32.xlu0 %v484, 48
      %v979 = vpop.permute.xlu0 %978
      %980 = vrot.lane.b32.xlu0 %v485, 48
      %v981 = vpop.permute.xlu0 %980
      %982 = vrot.lane.b32.xlu0 %v486, 48
      %v983 = vpop.permute.xlu0 %982
      %984 = vrot.lane.b32.xlu0 %v487, 48
      %v985 = vpop.permute.xlu0 %984
      %986 = vrot.lane.b32.xlu0 %v488, 48
      %v987 = vpop.permute.xlu0 %986
      %988 = vrot.lane.b32.xlu0 %v489, 48
      %v989 = vpop.permute.xlu0 %988
      %990 = vrot.lane.b32.xlu0 %v490, 48
      %v991 = vpop.permute.xlu0 %990
      %992 = vrot.lane.b32.xlu0 %v491, 48
      %v993 = vpop.permute.xlu0 %992
      %994 = vrot.lane.b32.xlu0 %v492, 48
      %v995 = vpop.permute.xlu0 %994
      %996 = vrot.lane.b32.xlu0 %v493, 48
      %v997 = vpop.permute.xlu0 %996
      %998 = vrot.lane.b32.xlu0 %v494, 48
      %v999 = vpop.permute.xlu0 %998
      %1000 = vrot.lane.b32.xlu0 %v495, 48
      %v1001 = vpop.permute.xlu0 %1000
      %1002 = vrot.lane.b32.xlu0 %v854, 48
      %v1003 = vpop.permute.xlu0 %1002
      %1004 = vrot.lane.b32.xlu0 %v973, 48
      %v1005 = vpop.permute.xlu0 %1004
      %v1007 = vunpack.c.l.b16 %v319
      %v1008 = vpack.c.b16 %v1007, %v1007
      %v1010 = vshrl.u32 %v973, 16
      %v1012 = vshll.u32 %v973, 16
      %v1014 = vrot.slane %v1012, 1
      %v1015 = vor.u32 %v1010, %v1014
      %v1017 = vshll.u32 %v1008, 16
      %v1019 = vrot.slane %v1017, 1
      %v1020 = vsel %vm544, %v1015, %v1019
      %1021 = vrot.lane.b32.xlu0 %v580, 56
      %v1022 = vpop.permute.xlu0 %1021
      %1023 = vrot.lane.b32.xlu0 %v592, 56
      %v1024 = vpop.permute.xlu0 %1023
      %1025 = vrot.lane.b32.xlu0 %v604, 56
      %v1026 = vpop.permute.xlu0 %1025
      %1027 = vrot.lane.b32.xlu0 %v616, 56
      %v1028 = vpop.permute.xlu0 %1027
      %1029 = vrot.lane.b32.xlu0 %v628, 56
      %v1030 = vpop.permute.xlu0 %1029
      %1031 = vrot.lane.b32.xlu0 %v640, 56
      %v1032 = vpop.permute.xlu0 %1031
      %1033 = vrot.lane.b32.xlu0 %v652, 56
      %v1034 = vpop.permute.xlu0 %1033
      %1035 = vrot.lane.b32.xlu0 %v664, 56
      %v1036 = vpop.permute.xlu0 %1035
      %1037 = vrot.lane.b32.xlu0 %v676, 56
      %v1038 = vpop.permute.xlu0 %1037
      %1039 = vrot.lane.b32.xlu0 %v688, 56
      %v1040 = vpop.permute.xlu0 %1039
      %1041 = vrot.lane.b32.xlu0 %v700, 56
      %v1042 = vpop.permute.xlu0 %1041
      %1043 = vrot.lane.b32.xlu0 %v712, 56
      %v1044 = vpop.permute.xlu0 %1043
      %1045 = vrot.lane.b32.xlu0 %v724, 56
      %v1046 = vpop.permute.xlu0 %1045
      %1047 = vrot.lane.b32.xlu0 %v736, 56
      %v1048 = vpop.permute.xlu0 %1047
      %1049 = vrot.lane.b32.xlu0 %v901, 56
      %v1050 = vpop.permute.xlu0 %1049
      %1051 = vrot.lane.b32.xlu0 %v1020, 56
      %v1052 = vpop.permute.xlu0 %1051
      %v1053 = vrot.slane %v973, 1
      %v1054 = vrot.slane %v1008, 1
      %v1055 = vsel %vm769, %v1053, %v1054
      %1056 = vrot.lane.b32.xlu0 %v778, 64
      %v1057 = vpop.permute.xlu0 %1056
      %1058 = vrot.lane.b32.xlu0 %v781, 64
      %v1059 = vpop.permute.xlu0 %1058
      %1060 = vrot.lane.b32.xlu0 %v784, 64
      %v1061 = vpop.permute.xlu0 %1060
      %1062 = vrot.lane.b32.xlu0 %v787, 64
      %v1063 = vpop.permute.xlu0 %1062
      %1064 = vrot.lane.b32.xlu0 %v790, 64
      %v1065 = vpop.permute.xlu0 %1064
      %1066 = vrot.lane.b32.xlu0 %v793, 64
      %v1067 = vpop.permute.xlu0 %1066
      %1068 = vrot.lane.b32.xlu0 %v796, 64
      %v1069 = vpop.permute.xlu0 %1068
      %1070 = vrot.lane.b32.xlu0 %v799, 64
      %v1071 = vpop.permute.xlu0 %1070
      %1072 = vrot.lane.b32.xlu0 %v802, 64
      %v1073 = vpop.permute.xlu0 %1072
      %1074 = vrot.lane.b32.xlu0 %v805, 64
      %v1075 = vpop.permute.xlu0 %1074
      %1076 = vrot.lane.b32.xlu0 %v808, 64
      %v1077 = vpop.permute.xlu0 %1076
      %1078 = vrot.lane.b32.xlu0 %v811, 64
      %v1079 = vpop.permute.xlu0 %1078
      %1080 = vrot.lane.b32.xlu0 %v814, 64
      %v1081 = vpop.permute.xlu0 %1080
      %1082 = vrot.lane.b32.xlu0 %v817, 64
      %v1083 = vpop.permute.xlu0 %1082
      %1084 = vrot.lane.b32.xlu0 %v936, 64
      %v1085 = vpop.permute.xlu0 %1084
      %1086 = vrot.lane.b32.xlu0 %v1055, 64
      %v1087 = vpop.permute.xlu0 %1086
      %v1136 = vunpack.c.l.b16 %v320
      %v1137 = vunpack.c.l.b16 %v321
      %v1138 = vunpack.c.l.b16 %v322
      %v1139 = vunpack.c.l.b16 %v323
      %v1140 = vunpack.c.l.b16 %v324
      %v1141 = vunpack.c.l.b16 %v325
      %v1142 = vunpack.c.l.b16 %v326
      %v1143 = vunpack.c.l.b16 %v327
      %v1144 = vunpack.c.l.b16 %v328
      %v1145 = vunpack.c.l.b16 %v329
      %v1146 = vunpack.c.l.b16 %v330
      %v1147 = vunpack.c.l.b16 %v331
      %v1148 = vunpack.c.l.b16 %v332
      %v1149 = vunpack.c.l.b16 %v333
      %v1150 = vunpack.c.l.b16 %v334
      %v1151 = vunpack.c.l.b16 %v335
      %v1152 = vunpack.c.l.b16 %v336
      %v1153 = vunpack.c.l.b16 %v337
      %v1154 = vunpack.c.l.b16 %v338
      %v1155 = vunpack.c.l.b16 %v339
      %v1156 = vunpack.c.l.b16 %v340
      %v1157 = vunpack.c.l.b16 %v341
      %v1158 = vunpack.c.l.b16 %v342
      %v1159 = vunpack.c.l.b16 %v343
      %v1160 = vunpack.c.l.b16 %v344
      %v1161 = vunpack.c.l.b16 %v345
      %v1162 = vunpack.c.l.b16 %v346
      %v1163 = vunpack.c.l.b16 %v347
      %v1164 = vunpack.c.l.b16 %v348
      %v1165 = vunpack.c.l.b16 %v349
      %v1166 = vunpack.c.l.b16 %v350
      %v1167 = vunpack.c.l.b16 %v351
      %v1168 = vunpack.c.l.b16 %v352
      %v1169 = vunpack.c.l.b16 %v353
      %v1170 = vunpack.c.l.b16 %v354
      %v1171 = vunpack.c.l.b16 %v355
      %v1172 = vunpack.c.l.b16 %v356
      %v1173 = vunpack.c.l.b16 %v357
      %v1174 = vunpack.c.l.b16 %v358
      %v1175 = vunpack.c.l.b16 %v359
      %v1176 = vunpack.c.l.b16 %v360
      %v1177 = vunpack.c.l.b16 %v361
      %v1178 = vunpack.c.l.b16 %v362
      %v1179 = vunpack.c.l.b16 %v363
      %v1180 = vunpack.c.l.b16 %v364
      %v1181 = vunpack.c.l.b16 %v365
      %v1182 = vunpack.c.l.b16 %v366
      %v1183 = vunpack.c.l.b16 %v367
      %v1184 = vpack.c.b16 %v1137, %v1136
      %v1185 = vpack.c.b16 %v1138, %v1138
      %v1186 = vpack.c.b16 %v1140, %v1139
      %v1187 = vpack.c.b16 %v1141, %v1141
      %v1188 = vpack.c.b16 %v1143, %v1142
      %v1189 = vpack.c.b16 %v1144, %v1144
      %v1190 = vpack.c.b16 %v1146, %v1145
      %v1191 = vpack.c.b16 %v1147, %v1147
      %v1192 = vpack.c.b16 %v1149, %v1148
      %v1193 = vpack.c.b16 %v1150, %v1150
      %v1194 = vpack.c.b16 %v1152, %v1151
      %v1195 = vpack.c.b16 %v1153, %v1153
      %v1196 = vpack.c.b16 %v1155, %v1154
      %v1197 = vpack.c.b16 %v1156, %v1156
      %v1198 = vpack.c.b16 %v1158, %v1157
      %v1199 = vpack.c.b16 %v1159, %v1159
      %v1200 = vpack.c.b16 %v1161, %v1160
      %v1201 = vpack.c.b16 %v1162, %v1162
      %v1202 = vpack.c.b16 %v1164, %v1163
      %v1203 = vpack.c.b16 %v1165, %v1165
      %v1204 = vpack.c.b16 %v1167, %v1166
      %v1205 = vpack.c.b16 %v1168, %v1168
      %v1206 = vpack.c.b16 %v1170, %v1169
      %v1207 = vpack.c.b16 %v1171, %v1171
      %v1208 = vpack.c.b16 %v1173, %v1172
      %v1209 = vpack.c.b16 %v1174, %v1174
      %v1210 = vpack.c.b16 %v1176, %v1175
      %v1211 = vpack.c.b16 %v1177, %v1177
      %v1212 = vpack.c.b16 %v1179, %v1178
      %v1213 = vpack.c.b16 %v1180, %v1180
      %v1214 = vpack.c.b16 %v1182, %v1181
      %v1215 = vpack.c.b16 %v1183, %v1183
      %v1217 = vshrl.u32 %v1184, 16
      %v1219 = vshll.u32 %v1184, 16
      %v1221 = vrot.slane %v1219, 1
      %v1222 = vor.u32 %v1217, %v1221
      %v1224 = vshll.u32 %v1185, 16
      %v1226 = vrot.slane %v1224, 1
      %v1227 = vsel %vm544, %v1222, %v1226
      %v1229 = vshrl.u32 %v1186, 16
      %v1231 = vshll.u32 %v1186, 16
      %v1233 = vrot.slane %v1231, 1
      %v1234 = vor.u32 %v1229, %v1233
      %v1236 = vshll.u32 %v1187, 16
      %v1238 = vrot.slane %v1236, 1
      %v1239 = vsel %vm544, %v1234, %v1238
      %v1241 = vshrl.u32 %v1188, 16
      %v1243 = vshll.u32 %v1188, 16
      %v1245 = vrot.slane %v1243, 1
      %v1246 = vor.u32 %v1241, %v1245
      %v1248 = vshll.u32 %v1189, 16
      %v1250 = vrot.slane %v1248, 1
      %v1251 = vsel %vm544, %v1246, %v1250
      %v1253 = vshrl.u32 %v1190, 16
      %v1255 = vshll.u32 %v1190, 16
      %v1257 = vrot.slane %v1255, 1
      %v1258 = vor.u32 %v1253, %v1257
      %v1260 = vshll.u32 %v1191, 16
      %v1262 = vrot.slane %v1260, 1
      %v1263 = vsel %vm544, %v1258, %v1262
      %v1265 = vshrl.u32 %v1192, 16
      %v1267 = vshll.u32 %v1192, 16
      %v1269 = vrot.slane %v1267, 1
      %v1270 = vor.u32 %v1265, %v1269
      %v1272 = vshll.u32 %v1193, 16
      %v1274 = vrot.slane %v1272, 1
      %v1275 = vsel %vm544, %v1270, %v1274
      %v1277 = vshrl.u32 %v1194, 16
      %v1279 = vshll.u32 %v1194, 16
      %v1281 = vrot.slane %v1279, 1
      %v1282 = vor.u32 %v1277, %v1281
      %v1284 = vshll.u32 %v1195, 16
      %v1286 = vrot.slane %v1284, 1
      %v1287 = vsel %vm544, %v1282, %v1286
      %v1289 = vshrl.u32 %v1196, 16
      %v1291 = vshll.u32 %v1196, 16
      %v1293 = vrot.slane %v1291, 1
      %v1294 = vor.u32 %v1289, %v1293
      %v1296 = vshll.u32 %v1197, 16
      %v1298 = vrot.slane %v1296, 1
      %v1299 = vsel %vm544, %v1294, %v1298
      %v1301 = vshrl.u32 %v1198, 16
      %v1303 = vshll.u32 %v1198, 16
      %v1305 = vrot.slane %v1303, 1
      %v1306 = vor.u32 %v1301, %v1305
      %v1308 = vshll.u32 %v1199, 16
      %v1310 = vrot.slane %v1308, 1
      %v1311 = vsel %vm544, %v1306, %v1310
      %v1313 = vshrl.u32 %v1200, 16
      %v1315 = vshll.u32 %v1200, 16
      %v1317 = vrot.slane %v1315, 1
      %v1318 = vor.u32 %v1313, %v1317
      %v1320 = vshll.u32 %v1201, 16
      %v1322 = vrot.slane %v1320, 1
      %v1323 = vsel %vm544, %v1318, %v1322
      %v1325 = vshrl.u32 %v1202, 16
      %v1327 = vshll.u32 %v1202, 16
      %v1329 = vrot.slane %v1327, 1
      %v1330 = vor.u32 %v1325, %v1329
      %v1332 = vshll.u32 %v1203, 16
      %v1334 = vrot.slane %v1332, 1
      %v1335 = vsel %vm544, %v1330, %v1334
      %v1337 = vshrl.u32 %v1204, 16
      %v1339 = vshll.u32 %v1204, 16
      %v1341 = vrot.slane %v1339, 1
      %v1342 = vor.u32 %v1337, %v1341
      %v1344 = vshll.u32 %v1205, 16
      %v1346 = vrot.slane %v1344, 1
      %v1347 = vsel %vm544, %v1342, %v1346
      %v1349 = vshrl.u32 %v1206, 16
      %v1351 = vshll.u32 %v1206, 16
      %v1353 = vrot.slane %v1351, 1
      %v1354 = vor.u32 %v1349, %v1353
      %v1356 = vshll.u32 %v1207, 16
      %v1358 = vrot.slane %v1356, 1
      %v1359 = vsel %vm544, %v1354, %v1358
      %v1361 = vshrl.u32 %v1208, 16
      %v1363 = vshll.u32 %v1208, 16
      %v1365 = vrot.slane %v1363, 1
      %v1366 = vor.u32 %v1361, %v1365
      %v1368 = vshll.u32 %v1209, 16
      %v1370 = vrot.slane %v1368, 1
      %v1371 = vsel %vm544, %v1366, %v1370
      %v1373 = vshrl.u32 %v1210, 16
      %v1375 = vshll.u32 %v1210, 16
      %v1377 = vrot.slane %v1375, 1
      %v1378 = vor.u32 %v1373, %v1377
      %v1380 = vshll.u32 %v1211, 16
      %v1382 = vrot.slane %v1380, 1
      %v1383 = vsel %vm544, %v1378, %v1382
      %v1385 = vshrl.u32 %v1212, 16
      %v1387 = vshll.u32 %v1212, 16
      %v1389 = vrot.slane %v1387, 1
      %v1390 = vor.u32 %v1385, %v1389
      %v1392 = vshll.u32 %v1213, 16
      %v1394 = vrot.slane %v1392, 1
      %v1395 = vsel %vm544, %v1390, %v1394
      %v1397 = vshrl.u32 %v1214, 16
      %v1399 = vshll.u32 %v1214, 16
      %v1401 = vrot.slane %v1399, 1
      %v1402 = vor.u32 %v1397, %v1401
      %v1404 = vshll.u32 %v1215, 16
      %v1406 = vrot.slane %v1404, 1
      %v1407 = vsel %vm544, %v1402, %v1406
      %1408 = vrot.lane.b32.xlu0 %v1227, 72
      %v1409 = vpop.permute.xlu0 %1408
      %1410 = vrot.lane.b32.xlu0 %v1239, 72
      %v1411 = vpop.permute.xlu0 %1410
      %1412 = vrot.lane.b32.xlu0 %v1251, 72
      %v1413 = vpop.permute.xlu0 %1412
      %1414 = vrot.lane.b32.xlu0 %v1263, 72
      %v1415 = vpop.permute.xlu0 %1414
      %1416 = vrot.lane.b32.xlu0 %v1275, 72
      %v1417 = vpop.permute.xlu0 %1416
      %1418 = vrot.lane.b32.xlu0 %v1287, 72
      %v1419 = vpop.permute.xlu0 %1418
      %1420 = vrot.lane.b32.xlu0 %v1299, 72
      %v1421 = vpop.permute.xlu0 %1420
      %1422 = vrot.lane.b32.xlu0 %v1311, 72
      %v1423 = vpop.permute.xlu0 %1422
      %1424 = vrot.lane.b32.xlu0 %v1323, 72
      %v1425 = vpop.permute.xlu0 %1424
      %1426 = vrot.lane.b32.xlu0 %v1335, 72
      %v1427 = vpop.permute.xlu0 %1426
      %1428 = vrot.lane.b32.xlu0 %v1347, 72
      %v1429 = vpop.permute.xlu0 %1428
      %1430 = vrot.lane.b32.xlu0 %v1359, 72
      %v1431 = vpop.permute.xlu0 %1430
      %1432 = vrot.lane.b32.xlu0 %v1371, 72
      %v1433 = vpop.permute.xlu0 %1432
      %1434 = vrot.lane.b32.xlu0 %v1383, 72
      %v1435 = vpop.permute.xlu0 %1434
      %1436 = vrot.lane.b32.xlu0 %v1395, 72
      %v1437 = vpop.permute.xlu0 %1436
      %1438 = vrot.lane.b32.xlu0 %v1407, 72
      %v1439 = vpop.permute.xlu0 %1438
      %v1488 = vunpack.c.l.b16 %v368
      %v1489 = vunpack.c.l.b16 %v369
      %v1490 = vunpack.c.l.b16 %v370
      %v1491 = vunpack.c.l.b16 %v371
      %v1492 = vunpack.c.l.b16 %v372
      %v1493 = vunpack.c.l.b16 %v373
      %v1494 = vunpack.c.l.b16 %v374
      %v1495 = vunpack.c.l.b16 %v375
      %v1496 = vunpack.c.l.b16 %v376
      %v1497 = vunpack.c.l.b16 %v377
      %v1498 = vunpack.c.l.b16 %v378
      %v1499 = vunpack.c.l.b16 %v379
      %v1500 = vunpack.c.l.b16 %v380
      %v1501 = vunpack.c.l.b16 %v381
      %v1502 = vunpack.c.l.b16 %v382
      %v1503 = vunpack.c.l.b16 %v383
      %v1504 = vunpack.c.l.b16 %v384
      %v1505 = vunpack.c.l.b16 %v385
      %v1506 = vunpack.c.l.b16 %v386
      %v1507 = vunpack.c.l.b16 %v387
      %v1508 = vunpack.c.l.b16 %v388
      %v1509 = vunpack.c.l.b16 %v389
      %v1510 = vunpack.c.l.b16 %v390
      %v1511 = vunpack.c.l.b16 %v391
      %v1512 = vunpack.c.l.b16 %v392
      %v1513 = vunpack.c.l.b16 %v393
      %v1514 = vunpack.c.l.b16 %v394
      %v1515 = vunpack.c.l.b16 %v395
      %v1516 = vunpack.c.l.b16 %v396
      %v1517 = vunpack.c.l.b16 %v397
      %v1518 = vunpack.c.l.b16 %v398
      %v1519 = vunpack.c.l.b16 %v399
      %v1520 = vunpack.c.l.b16 %v400
      %v1521 = vunpack.c.l.b16 %v401
      %v1522 = vunpack.c.l.b16 %v402
      %v1523 = vunpack.c.l.b16 %v403
      %v1524 = vunpack.c.l.b16 %v404
      %v1525 = vunpack.c.l.b16 %v405
      %v1526 = vunpack.c.l.b16 %v406
      %v1527 = vunpack.c.l.b16 %v407
      %v1528 = vunpack.c.l.b16 %v408
      %v1529 = vunpack.c.l.b16 %v409
      %v1530 = vunpack.c.l.b16 %v410
      %v1531 = vunpack.c.l.b16 %v411
      %v1532 = vunpack.c.l.b16 %v412
      %v1533 = vunpack.c.l.b16 %v413
      %v1534 = vunpack.c.l.b16 %v414
      %v1535 = vunpack.c.l.b16 %v415
      %v1536 = vpack.c.b16 %v1489, %v1488
      %v1537 = vpack.c.b16 %v1490, %v1490
      %v1538 = vpack.c.b16 %v1492, %v1491
      %v1539 = vpack.c.b16 %v1493, %v1493
      %v1540 = vpack.c.b16 %v1495, %v1494
      %v1541 = vpack.c.b16 %v1496, %v1496
      %v1542 = vpack.c.b16 %v1498, %v1497
      %v1543 = vpack.c.b16 %v1499, %v1499
      %v1544 = vpack.c.b16 %v1501, %v1500
      %v1545 = vpack.c.b16 %v1502, %v1502
      %v1546 = vpack.c.b16 %v1504, %v1503
      %v1547 = vpack.c.b16 %v1505, %v1505
      %v1548 = vpack.c.b16 %v1507, %v1506
      %v1549 = vpack.c.b16 %v1508, %v1508
      %v1550 = vpack.c.b16 %v1510, %v1509
      %v1551 = vpack.c.b16 %v1511, %v1511
      %v1552 = vpack.c.b16 %v1513, %v1512
      %v1553 = vpack.c.b16 %v1514, %v1514
      %v1554 = vpack.c.b16 %v1516, %v1515
      %v1555 = vpack.c.b16 %v1517, %v1517
      %v1556 = vpack.c.b16 %v1519, %v1518
      %v1557 = vpack.c.b16 %v1520, %v1520
      %v1558 = vpack.c.b16 %v1522, %v1521
      %v1559 = vpack.c.b16 %v1523, %v1523
      %v1560 = vpack.c.b16 %v1525, %v1524
      %v1561 = vpack.c.b16 %v1526, %v1526
      %v1562 = vpack.c.b16 %v1528, %v1527
      %v1563 = vpack.c.b16 %v1529, %v1529
      %v1564 = vpack.c.b16 %v1531, %v1530
      %v1565 = vpack.c.b16 %v1532, %v1532
      %v1566 = vpack.c.b16 %v1534, %v1533
      %v1567 = vpack.c.b16 %v1535, %v1535
      %v1569 = vshrl.u32 %v1536, 16
      %v1571 = vshll.u32 %v1536, 16
      %v1573 = vrot.slane %v1571, 1
      %v1574 = vor.u32 %v1569, %v1573
      %v1576 = vshll.u32 %v1537, 16
      %v1578 = vrot.slane %v1576, 1
      %v1579 = vsel %vm544, %v1574, %v1578
      %v1581 = vshrl.u32 %v1538, 16
      %v1583 = vshll.u32 %v1538, 16
      %v1585 = vrot.slane %v1583, 1
      %v1586 = vor.u32 %v1581, %v1585
      %v1588 = vshll.u32 %v1539, 16
      %v1590 = vrot.slane %v1588, 1
      %v1591 = vsel %vm544, %v1586, %v1590
      %v1593 = vshrl.u32 %v1540, 16
      %v1595 = vshll.u32 %v1540, 16
      %v1597 = vrot.slane %v1595, 1
      %v1598 = vor.u32 %v1593, %v1597
      %v1600 = vshll.u32 %v1541, 16
      %v1602 = vrot.slane %v1600, 1
      %v1603 = vsel %vm544, %v1598, %v1602
      %v1605 = vshrl.u32 %v1542, 16
      %v1607 = vshll.u32 %v1542, 16
      %v1609 = vrot.slane %v1607, 1
      %v1610 = vor.u32 %v1605, %v1609
      %v1612 = vshll.u32 %v1543, 16
      %v1614 = vrot.slane %v1612, 1
      %v1615 = vsel %vm544, %v1610, %v1614
      %v1617 = vshrl.u32 %v1544, 16
      %v1619 = vshll.u32 %v1544, 16
      %v1621 = vrot.slane %v1619, 1
      %v1622 = vor.u32 %v1617, %v1621
      %v1624 = vshll.u32 %v1545, 16
      %v1626 = vrot.slane %v1624, 1
      %v1627 = vsel %vm544, %v1622, %v1626
      %v1629 = vshrl.u32 %v1546, 16
      %v1631 = vshll.u32 %v1546, 16
      %v1633 = vrot.slane %v1631, 1
      %v1634 = vor.u32 %v1629, %v1633
      %v1636 = vshll.u32 %v1547, 16
      %v1638 = vrot.slane %v1636, 1
      %v1639 = vsel %vm544, %v1634, %v1638
      %v1641 = vshrl.u32 %v1548, 16
      %v1643 = vshll.u32 %v1548, 16
      %v1645 = vrot.slane %v1643, 1
      %v1646 = vor.u32 %v1641, %v1645
      %v1648 = vshll.u32 %v1549, 16
      %v1650 = vrot.slane %v1648, 1
      %v1651 = vsel %vm544, %v1646, %v1650
      %v1653 = vshrl.u32 %v1550, 16
      %v1655 = vshll.u32 %v1550, 16
      %v1657 = vrot.slane %v1655, 1
      %v1658 = vor.u32 %v1653, %v1657
      %v1660 = vshll.u32 %v1551, 16
      %v1662 = vrot.slane %v1660, 1
      %v1663 = vsel %vm544, %v1658, %v1662
      %v1665 = vshrl.u32 %v1552, 16
      %v1667 = vshll.u32 %v1552, 16
      %v1669 = vrot.slane %v1667, 1
      %v1670 = vor.u32 %v1665, %v1669
      %v1672 = vshll.u32 %v1553, 16
      %v1674 = vrot.slane %v1672, 1
      %v1675 = vsel %vm544, %v1670, %v1674
      %v1677 = vshrl.u32 %v1554, 16
      %v1679 = vshll.u32 %v1554, 16
      %v1681 = vrot.slane %v1679, 1
      %v1682 = vor.u32 %v1677, %v1681
      %v1684 = vshll.u32 %v1555, 16
      %v1686 = vrot.slane %v1684, 1
      %v1687 = vsel %vm544, %v1682, %v1686
      %v1689 = vshrl.u32 %v1556, 16
      %v1691 = vshll.u32 %v1556, 16
      %v1693 = vrot.slane %v1691, 1
      %v1694 = vor.u32 %v1689, %v1693
      %v1696 = vshll.u32 %v1557, 16
      %v1698 = vrot.slane %v1696, 1
      %v1699 = vsel %vm544, %v1694, %v1698
      %v1701 = vshrl.u32 %v1558, 16
      %v1703 = vshll.u32 %v1558, 16
      %v1705 = vrot.slane %v1703, 1
      %v1706 = vor.u32 %v1701, %v1705
      %v1708 = vshll.u32 %v1559, 16
      %v1710 = vrot.slane %v1708, 1
      %v1711 = vsel %vm544, %v1706, %v1710
      %v1713 = vshrl.u32 %v1560, 16
      %v1715 = vshll.u32 %v1560, 16
      %v1717 = vrot.slane %v1715, 1
      %v1718 = vor.u32 %v1713, %v1717
      %v1720 = vshll.u32 %v1561, 16
      %v1722 = vrot.slane %v1720, 1
      %v1723 = vsel %vm544, %v1718, %v1722
      %v1725 = vshrl.u32 %v1562, 16
      %v1727 = vshll.u32 %v1562, 16
      %v1729 = vrot.slane %v1727, 1
      %v1730 = vor.u32 %v1725, %v1729
      %v1732 = vshll.u32 %v1563, 16
      %v1734 = vrot.slane %v1732, 1
      %v1735 = vsel %vm544, %v1730, %v1734
      %v1737 = vshrl.u32 %v1564, 16
      %v1739 = vshll.u32 %v1564, 16
      %v1741 = vrot.slane %v1739, 1
      %v1742 = vor.u32 %v1737, %v1741
      %v1744 = vshll.u32 %v1565, 16
      %v1746 = vrot.slane %v1744, 1
      %v1747 = vsel %vm544, %v1742, %v1746
      %v1749 = vshrl.u32 %v1566, 16
      %v1751 = vshll.u32 %v1566, 16
      %v1753 = vrot.slane %v1751, 1
      %v1754 = vor.u32 %v1749, %v1753
      %v1756 = vshll.u32 %v1567, 16
      %v1758 = vrot.slane %v1756, 1
      %v1759 = vsel %vm544, %v1754, %v1758
      %1760 = vrot.lane.b32.xlu0 %v1579, 80
      %v1761 = vpop.permute.xlu0 %1760
      %1762 = vrot.lane.b32.xlu0 %v1591, 80
      %v1763 = vpop.permute.xlu0 %1762
      %1764 = vrot.lane.b32.xlu0 %v1603, 80
      %v1765 = vpop.permute.xlu0 %1764
      %1766 = vrot.lane.b32.xlu0 %v1615, 80
      %v1767 = vpop.permute.xlu0 %1766
      %1768 = vrot.lane.b32.xlu0 %v1627, 80
      %v1769 = vpop.permute.xlu0 %1768
      %1770 = vrot.lane.b32.xlu0 %v1639, 80
      %v1771 = vpop.permute.xlu0 %1770
      %1772 = vrot.lane.b32.xlu0 %v1651, 80
      %v1773 = vpop.permute.xlu0 %1772
      %1774 = vrot.lane.b32.xlu0 %v1663, 80
      %v1775 = vpop.permute.xlu0 %1774
      %1776 = vrot.lane.b32.xlu0 %v1675, 80
      %v1777 = vpop.permute.xlu0 %1776
      %1778 = vrot.lane.b32.xlu0 %v1687, 80
      %v1779 = vpop.permute.xlu0 %1778
      %1780 = vrot.lane.b32.xlu0 %v1699, 80
      %v1781 = vpop.permute.xlu0 %1780
      %1782 = vrot.lane.b32.xlu0 %v1711, 80
      %v1783 = vpop.permute.xlu0 %1782
      %1784 = vrot.lane.b32.xlu0 %v1723, 80
      %v1785 = vpop.permute.xlu0 %1784
      %1786 = vrot.lane.b32.xlu0 %v1735, 80
      %v1787 = vpop.permute.xlu0 %1786
      %1788 = vrot.lane.b32.xlu0 %v1747, 80
      %v1789 = vpop.permute.xlu0 %1788
      %1790 = vrot.lane.b32.xlu0 %v1759, 80
      %v1791 = vpop.permute.xlu0 %1790
      %vm1792 = vcmask 64512
      %v1794 = vsel %vm1792, %v480, %v738
      %v1796 = vsel %vm1792, %v481, %v740
      %v1798 = vsel %vm1792, %v482, %v742
      %v1800 = vsel %vm1792, %v483, %v744
      %v1802 = vsel %vm1792, %v484, %v746
      %v1804 = vsel %vm1792, %v485, %v748
      %v1806 = vsel %vm1792, %v486, %v750
      %v1808 = vsel %vm1792, %v487, %v752
      %v1810 = vsel %vm1792, %v488, %v754
      %v1812 = vsel %vm1792, %v489, %v756
      %v1814 = vsel %vm1792, %v490, %v758
      %v1816 = vsel %vm1792, %v491, %v760
      %v1818 = vsel %vm1792, %v492, %v762
      %v1820 = vsel %vm1792, %v493, %v764
      %v1822 = vsel %vm1792, %v494, %v766
      %v1824 = vsel %vm1792, %v495, %v768
      %vm1825 = vcmask 130048
      %v1827 = vsel %vm1825, %v1794, %v819
      %v1829 = vsel %vm1825, %v1796, %v821
      %v1831 = vsel %vm1825, %v1798, %v823
      %v1833 = vsel %vm1825, %v1800, %v825
      %v1835 = vsel %vm1825, %v1802, %v827
      %v1837 = vsel %vm1825, %v1804, %v829
      %v1839 = vsel %vm1825, %v1806, %v831
      %v1841 = vsel %vm1825, %v1808, %v833
      %v1843 = vsel %vm1825, %v1810, %v835
      %v1845 = vsel %vm1825, %v1812, %v837
      %v1847 = vsel %vm1825, %v1814, %v839
      %v1849 = vsel %vm1825, %v1816, %v841
      %v1851 = vsel %vm1825, %v1818, %v843
      %v1853 = vsel %vm1825, %v1820, %v845
      %v1855 = vsel %vm1825, %v1822, %v847
      %v1857 = vsel %vm1825, %v1824, %v849
      %vm1858 = vcmask 195584
      %v1860 = vsel %vm1858, %v1827, %v856
      %v1862 = vsel %vm1858, %v1829, %v858
      %v1864 = vsel %vm1858, %v1831, %v860
      %v1866 = vsel %vm1858, %v1833, %v862
      %v1868 = vsel %vm1858, %v1835, %v864
      %v1870 = vsel %vm1858, %v1837, %v866
      %v1872 = vsel %vm1858, %v1839, %v868
      %v1874 = vsel %vm1858, %v1841, %v870
      %v1876 = vsel %vm1858, %v1843, %v872
      %v1878 = vsel %vm1858, %v1845, %v874
      %v1880 = vsel %vm1858, %v1847, %v876
      %v1882 = vsel %vm1858, %v1849, %v878
      %v1884 = vsel %vm1858, %v1851, %v880
      %v1886 = vsel %vm1858, %v1853, %v882
      %v1888 = vsel %vm1858, %v1855, %v884
      %v1890 = vsel %vm1858, %v1857, %v886
      %vm1891 = vcmask 261120
      %v1893 = vsel %vm1891, %v1860, %v903
      %v1895 = vsel %vm1891, %v1862, %v905
      %v1897 = vsel %vm1891, %v1864, %v907
      %v1899 = vsel %vm1891, %v1866, %v909
      %v1901 = vsel %vm1891, %v1868, %v911
      %v1903 = vsel %vm1891, %v1870, %v913
      %v1905 = vsel %vm1891, %v1872, %v915
      %v1907 = vsel %vm1891, %v1874, %v917
      %v1909 = vsel %vm1891, %v1876, %v919
      %v1911 = vsel %vm1891, %v1878, %v921
      %v1913 = vsel %vm1891, %v1880, %v923
      %v1915 = vsel %vm1891, %v1882, %v925
      %v1917 = vsel %vm1891, %v1884, %v927
      %v1919 = vsel %vm1891, %v1886, %v929
      %v1921 = vsel %vm1891, %v1888, %v931
      %v1923 = vsel %vm1891, %v1890, %v933
      %vm1924 = vcmask 326656
      %v1926 = vsel %vm1924, %v1893, %v938
      %v1928 = vsel %vm1924, %v1895, %v940
      %v1930 = vsel %vm1924, %v1897, %v942
      %v1932 = vsel %vm1924, %v1899, %v944
      %v1934 = vsel %vm1924, %v1901, %v946
      %v1936 = vsel %vm1924, %v1903, %v948
      %v1938 = vsel %vm1924, %v1905, %v950
      %v1940 = vsel %vm1924, %v1907, %v952
      %v1942 = vsel %vm1924, %v1909, %v954
      %v1944 = vsel %vm1924, %v1911, %v956
      %v1946 = vsel %vm1924, %v1913, %v958
      %v1948 = vsel %vm1924, %v1915, %v960
      %v1950 = vsel %vm1924, %v1917, %v962
      %v1952 = vsel %vm1924, %v1919, %v964
      %v1954 = vsel %vm1924, %v1921, %v966
      %v1956 = vsel %vm1924, %v1923, %v968
      %vm1957 = vcmask 392192
      %v1959 = vsel %vm1957, %v1926, %v975
      %v1961 = vsel %vm1957, %v1928, %v977
      %v1963 = vsel %vm1957, %v1930, %v979
      %v1965 = vsel %vm1957, %v1932, %v981
      %v1967 = vsel %vm1957, %v1934, %v983
      %v1969 = vsel %vm1957, %v1936, %v985
      %v1971 = vsel %vm1957, %v1938, %v987
      %v1973 = vsel %vm1957, %v1940, %v989
      %v1975 = vsel %vm1957, %v1942, %v991
      %v1977 = vsel %vm1957, %v1944, %v993
      %v1979 = vsel %vm1957, %v1946, %v995
      %v1981 = vsel %vm1957, %v1948, %v997
      %v1983 = vsel %vm1957, %v1950, %v999
      %v1985 = vsel %vm1957, %v1952, %v1001
      %v1987 = vsel %vm1957, %v1954, %v1003
      %v1989 = vsel %vm1957, %v1956, %v1005
      %vm1990 = vcmask 457728
      %v1992 = vsel %vm1990, %v1959, %v1022
      %v1994 = vsel %vm1990, %v1961, %v1024
      %v1996 = vsel %vm1990, %v1963, %v1026
      %v1998 = vsel %vm1990, %v1965, %v1028
      %v2000 = vsel %vm1990, %v1967, %v1030
      %v2002 = vsel %vm1990, %v1969, %v1032
      %v2004 = vsel %vm1990, %v1971, %v1034
      %v2006 = vsel %vm1990, %v1973, %v1036
      %v2008 = vsel %vm1990, %v1975, %v1038
      %v2010 = vsel %vm1990, %v1977, %v1040
      %v2012 = vsel %vm1990, %v1979, %v1042
      %v2014 = vsel %vm1990, %v1981, %v1044
      %v2016 = vsel %vm1990, %v1983, %v1046
      %v2018 = vsel %vm1990, %v1985, %v1048
      %v2020 = vsel %vm1990, %v1987, %v1050
      %v2022 = vsel %vm1990, %v1989, %v1052
      %vm2023 = vcmask 523264
      %v2025 = vsel %vm2023, %v1992, %v1057
      %v2027 = vsel %vm2023, %v1994, %v1059
      %v2029 = vsel %vm2023, %v1996, %v1061
      %v2031 = vsel %vm2023, %v1998, %v1063
      %v2033 = vsel %vm2023, %v2000, %v1065
      %v2035 = vsel %vm2023, %v2002, %v1067
      %v2037 = vsel %vm2023, %v2004, %v1069
      %v2039 = vsel %vm2023, %v2006, %v1071
      %v2041 = vsel %vm2023, %v2008, %v1073
      %v2043 = vsel %vm2023, %v2010, %v1075
      %v2045 = vsel %vm2023, %v2012, %v1077
      %v2047 = vsel %vm2023, %v2014, %v1079
      %v2049 = vsel %vm2023, %v2016, %v1081
      %v2051 = vsel %vm2023, %v2018, %v1083
      %v2053 = vsel %vm2023, %v2020, %v1085
      %v2055 = vsel %vm2023, %v2022, %v1087
      %vm2056 = vcmask 588800
      %v2058 = vsel %vm2056, %v2025, %v1409
      %v2060 = vsel %vm2056, %v2027, %v1411
      %v2062 = vsel %vm2056, %v2029, %v1413
      %v2064 = vsel %vm2056, %v2031, %v1415
      %v2066 = vsel %vm2056, %v2033, %v1417
      %v2068 = vsel %vm2056, %v2035, %v1419
      %v2070 = vsel %vm2056, %v2037, %v1421
      %v2072 = vsel %vm2056, %v2039, %v1423
      %v2074 = vsel %vm2056, %v2041, %v1425
      %v2076 = vsel %vm2056, %v2043, %v1427
      %v2078 = vsel %vm2056, %v2045, %v1429
      %v2080 = vsel %vm2056, %v2047, %v1431
      %v2082 = vsel %vm2056, %v2049, %v1433
      %v2084 = vsel %vm2056, %v2051, %v1435
      %v2086 = vsel %vm2056, %v2053, %v1437
      %v2088 = vsel %vm2056, %v2055, %v1439
      %vm2089 = vcmask 654336
      %v2091 = vsel %vm2089, %v2058, %v1761
      %v2093 = vsel %vm2089, %v2060, %v1763
      %v2095 = vsel %vm2089, %v2062, %v1765
      %v2097 = vsel %vm2089, %v2064, %v1767
      %v2099 = vsel %vm2089, %v2066, %v1769
      %v2101 = vsel %vm2089, %v2068, %v1771
      %v2103 = vsel %vm2089, %v2070, %v1773
      %v2105 = vsel %vm2089, %v2072, %v1775
      %v2107 = vsel %vm2089, %v2074, %v1777
      %v2109 = vsel %vm2089, %v2076, %v1779
      %v2111 = vsel %vm2089, %v2078, %v1781
      %v2113 = vsel %vm2089, %v2080, %v1783
      %v2115 = vsel %vm2089, %v2082, %v1785
      %v2117 = vsel %vm2089, %v2084, %v1787
      %v2119 = vsel %vm2089, %v2086, %v1789
      %v2121 = vsel %vm2089, %v2088, %v1791
      %v2122 = vld [vmem:[%s3] sm:$0xf]
      %v2123 = vld [vmem:[%s3 + $0x4] sm:$0xf]
      %v2124 = vld [vmem:[%s3 + $0x8] sm:$0xf]
      %v2125 = vld [vmem:[%s3 + $0xc] sm:$0xf]
      %v2126 = vld [vmem:[%s3 + $0x10] sm:$0xf]
      %v2127 = vld [vmem:[%s3 + $0x14] sm:$0xf]
      %v2128 = vld [vmem:[%s3 + $0x18] sm:$0xf]
      %v2129 = vld [vmem:[%s3 + $0x1c] sm:$0xf]
      %v2130 = vld [vmem:[%s3 + $0x20] sm:$0xf]
      %v2131 = vld [vmem:[%s3 + $0x24] sm:$0xf]
      %v2132 = vld [vmem:[%s3 + $0x28] sm:$0xf]
      %v2133 = vld [vmem:[%s4] sm:$0x1]
      %v2135 = vlaneseq
      %v2136 = vshrl.u32 %v2135, 7
      %v2137 = vsub.s32 0, %v2136
      %v2138 = vrot.slane %v2133, %v2137
      %v2151 = vunpack.c.l.b16 %v2122
      %v2152 = vunpack.c.l.b16 %v2123
      %v2153 = vunpack.c.l.b16 %v2124
      %v2154 = vunpack.c.l.b16 %v2125
      %v2155 = vunpack.c.l.b16 %v2126
      %v2156 = vunpack.c.l.b16 %v2127
      %v2157 = vunpack.c.l.b16 %v2128
      %v2158 = vunpack.c.l.b16 %v2129
      %v2159 = vunpack.c.l.b16 %v2130
      %v2160 = vunpack.c.l.b16 %v2131
      %v2161 = vunpack.c.l.b16 %v2132
      %v2162 = vpack.c.b16 %v2152, %v2151
      %v2163 = vpack.c.b16 %v2154, %v2153
      %v2164 = vpack.c.b16 %v2156, %v2155
      %v2165 = vpack.c.b16 %v2158, %v2157
      %v2166 = vpack.c.b16 %v2160, %v2159
      %v2167 = vpack.c.b16 %v2161, %v2161
      %vm2173 = vcmask 719872
      %v2174 = vsel %vm2173, %v2091, 0
      %v2176 = vsel %vm2173, %v2093, 0
      %v2178 = vsel %vm2173, %v2095, 0
      %v2180 = vsel %vm2173, %v2097, 0
      %v2182 = vsel %vm2173, %v2099, 0
      %v2184 = vsel %vm2173, %v2101, 0
      %v2186 = vsel %vm2173, %v2103, 0
      %v2188 = vsel %vm2173, %v2105, 0
      %v2190 = vsel %vm2173, %v2107, 0
      %v2192 = vsel %vm2173, %v2109, 0
      %v2194 = vsel %vm2173, %v2111, 0
      %v2196 = vsel %vm2173, %v2113, 0
      %v2198 = vsel %vm2173, %v2115, 0
      %v2200 = vsel %vm2173, %v2117, 0
      %v2202 = vsel %vm2173, %v2119, 0
      %v2204 = vsel %vm2173, %v2121, 0
      %vm2206 = vcmask 1043456
      %v2208 = vsel %vm2206, %v2167, 0
      %2210 = vmatprep.subr.bf16.mxu0 0
      %2211 = vmatpush1.bf16.msra.mxu0 0
      %2212 = vmatprep.subr.bf16.mxu0 0
      %2213 = vmatpush1.bf16.msra.mxu0 0
      %2214 = vmatprep.subr.bf16.mxu0 0
      %2215 = vmatpush1.bf16.msra.mxu0 %v2208
      %2216 = vmatprep.subr.bf16.mxu0 0
      %2217 = vmatpush1.bf16.msra.mxu0 %v2166
      %2218 = vmatprep.subr.bf16.mxu0 0
      %2219 = vmatpush1.bf16.msra.mxu0 %v2165
      %2220 = vmatprep.subr.bf16.mxu0 0
      %2221 = vmatpush1.bf16.msra.mxu0 %v2164
      %2222 = vmatprep.subr.bf16.mxu0 0
      %2223 = vmatpush1.bf16.msra.mxu0 %v2163
      %2224 = vmatprep.subr.bf16.mxu0 0
      %2225 = vmatpush1.bf16.msra.mxu0 %v2162
      %2226 = vmatprep.subr.bf16.mxu0 0
      %2227 = vmatpush2.bf16.msra.mxu0 0
      %2228 = vmatprep.subr.bf16.mxu0 0
      %2229 = vmatpush2.bf16.msra.mxu0 0
      %2230 = vmatprep.subr.bf16.mxu0 0
      %2231 = vmatpush2.bf16.msra.mxu0 0
      %2232 = vmatprep.subr.bf16.mxu0 0
      %2233 = vmatpush2.bf16.msra.mxu0 0
      %2234 = vmatprep.subr.bf16.mxu0 0
      %2235 = vmatpush2.bf16.msra.mxu0 0
      %2236 = vmatprep.subr.bf16.mxu0 0
      %2237 = vmatpush2.bf16.msra.mxu0 0
      %2238 = vmatprep.subr.bf16.mxu0 0
      %2239 = vmatpush2.bf16.msra.mxu0 0
      %2240 = vmatprep.subr.bf16.mxu0 0
      %2241 = vmatpush2.bf16.msra.mxu0 0
      %2242 = vmatprep.mubr.bf16.mxu0 0
      %2243 = vmatmul.mubr.bf16.gmra.mxu0 %v2174
      %v2244 = vpop.f32.mrf.mxu0
      %v2245 = vadd.f32 %v2138, %v2244
      %v2246 = vpop.f32.mrf.mxu0
      %v2247 = vpop.f32.mrf.mxu0
      %v2248 = vadd.f32 %v2138, %v2247
      %v2249 = vpop.f32.mrf.mxu0
      %2250 = vmatprep.mubr.bf16.mxu0 0
      %2251 = vmatmul.mubr.bf16.gmra.mxu0 %v2176
      %v2252 = vpop.f32.mrf.mxu0
      %v2253 = vadd.f32 %v2138, %v2252
      %v2254 = vpop.f32.mrf.mxu0
      %v2255 = vpop.f32.mrf.mxu0
      %v2256 = vadd.f32 %v2138, %v2255
      %v2257 = vpop.f32.mrf.mxu0
      %2258 = vmatprep.mubr.bf16.mxu0 0
      %2259 = vmatmul.mubr.bf16.gmra.mxu0 %v2178
      %v2260 = vpop.f32.mrf.mxu0
      %v2261 = vadd.f32 %v2138, %v2260
      %v2262 = vpop.f32.mrf.mxu0
      %v2263 = vpop.f32.mrf.mxu0
      %v2264 = vadd.f32 %v2138, %v2263
      %v2265 = vpop.f32.mrf.mxu0
      %2266 = vmatprep.mubr.bf16.mxu0 0
      %2267 = vmatmul.mubr.bf16.gmra.mxu0 %v2180
      %v2268 = vpop.f32.mrf.mxu0
      %v2269 = vadd.f32 %v2138, %v2268
      %v2270 = vpop.f32.mrf.mxu0
      %v2271 = vpop.f32.mrf.mxu0
      %v2272 = vadd.f32 %v2138, %v2271
      %v2273 = vpop.f32.mrf.mxu0
      %2274 = vmatprep.mubr.bf16.mxu0 0
      %2275 = vmatmul.mubr.bf16.gmra.mxu0 %v2182
      %v2276 = vpop.f32.mrf.mxu0
      %v2277 = vadd.f32 %v2138, %v2276
      %v2278 = vpop.f32.mrf.mxu0
      %v2279 = vpop.f32.mrf.mxu0
      %v2280 = vadd.f32 %v2138, %v2279
      %v2281 = vpop.f32.mrf.mxu0
      %2282 = vmatprep.mubr.bf16.mxu0 0
      %2283 = vmatmul.mubr.bf16.gmra.mxu0 %v2184
      %v2284 = vpop.f32.mrf.mxu0
      %v2285 = vadd.f32 %v2138, %v2284
      %v2286 = vpop.f32.mrf.mxu0
      %v2287 = vpop.f32.mrf.mxu0
      %v2288 = vadd.f32 %v2138, %v2287
      %v2289 = vpop.f32.mrf.mxu0
      %2290 = vmatprep.mubr.bf16.mxu0 0
      %2291 = vmatmul.mubr.bf16.gmra.mxu0 %v2186
      %v2292 = vpop.f32.mrf.mxu0
      %v2293 = vadd.f32 %v2138, %v2292
      %v2294 = vpop.f32.mrf.mxu0
      %v2295 = vpop.f32.mrf.mxu0
      %v2296 = vadd.f32 %v2138, %v2295
      %v2297 = vpop.f32.mrf.mxu0
      %2298 = vmatprep.mubr.bf16.mxu0 0
      %2299 = vmatmul.mubr.bf16.gmra.mxu0 %v2188
      %v2300 = vpop.f32.mrf.mxu0
      %v2301 = vadd.f32 %v2138, %v2300
      %v2302 = vpop.f32.mrf.mxu0
      %v2303 = vpop.f32.mrf.mxu0
      %v2304 = vadd.f32 %v2138, %v2303
      %v2305 = vpop.f32.mrf.mxu0
      %2306 = vmatprep.mubr.bf16.mxu0 0
      %2307 = vmatmul.mubr.bf16.gmra.mxu0 %v2190
      %v2308 = vpop.f32.mrf.mxu0
      %v2309 = vadd.f32 %v2138, %v2308
      %v2310 = vpop.f32.mrf.mxu0
      %v2311 = vpop.f32.mrf.mxu0
      %v2312 = vadd.f32 %v2138, %v2311
      %v2313 = vpop.f32.mrf.mxu0
      %2314 = vmatprep.mubr.bf16.mxu0 0
      %2315 = vmatmul.mubr.bf16.gmra.mxu0 %v2192
      %v2316 = vpop.f32.mrf.mxu0
      %v2317 = vadd.f32 %v2138, %v2316
      %v2318 = vpop.f32.mrf.mxu0
      %v2319 = vpop.f32.mrf.mxu0
      %v2320 = vadd.f32 %v2138, %v2319
      %v2321 = vpop.f32.mrf.mxu0
      %2322 = vmatprep.mubr.bf16.mxu0 0
      %2323 = vmatmul.mubr.bf16.gmra.mxu0 %v2194
      %v2324 = vpop.f32.mrf.mxu0
      %v2325 = vadd.f32 %v2138, %v2324
      %v2326 = vpop.f32.mrf.mxu0
      %v2327 = vpop.f32.mrf.mxu0
      %v2328 = vadd.f32 %v2138, %v2327
      %v2329 = vpop.f32.mrf.mxu0
      %2330 = vmatprep.mubr.bf16.mxu0 0
      %2331 = vmatmul.mubr.bf16.gmra.mxu0 %v2196
      %v2332 = vpop.f32.mrf.mxu0
      %v2333 = vadd.f32 %v2138, %v2332
      %v2334 = vpop.f32.mrf.mxu0
      %v2335 = vpop.f32.mrf.mxu0
      %v2336 = vadd.f32 %v2138, %v2335
      %v2337 = vpop.f32.mrf.mxu0
      %2338 = vmatprep.mubr.bf16.mxu0 0
      %2339 = vmatmul.mubr.bf16.gmra.mxu0 %v2198
      %v2340 = vpop.f32.mrf.mxu0
      %v2341 = vadd.f32 %v2138, %v2340
      %v2342 = vpop.f32.mrf.mxu0
      %v2343 = vpop.f32.mrf.mxu0
      %v2344 = vadd.f32 %v2138, %v2343
      %v2345 = vpop.f32.mrf.mxu0
      %2346 = vmatprep.mubr.bf16.mxu0 0
      %2347 = vmatmul.mubr.bf16.gmra.mxu0 %v2200
      %v2348 = vpop.f32.mrf.mxu0
      %v2349 = vadd.f32 %v2138, %v2348
      %v2350 = vpop.f32.mrf.mxu0
      %v2351 = vpop.f32.mrf.mxu0
      %v2352 = vadd.f32 %v2138, %v2351
      %v2353 = vpop.f32.mrf.mxu0
      %2354 = vmatprep.mubr.bf16.mxu0 0
      %2355 = vmatmul.mubr.bf16.gmra.mxu0 %v2202
      %v2356 = vpop.f32.mrf.mxu0
      %v2357 = vadd.f32 %v2138, %v2356
      %v2358 = vpop.f32.mrf.mxu0
      %v2359 = vpop.f32.mrf.mxu0
      %v2360 = vadd.f32 %v2138, %v2359
      %v2361 = vpop.f32.mrf.mxu0
      %2362 = vmatprep.mubr.bf16.mxu0 0
      %2363 = vmatmul.mubr.bf16.gmra.mxu0 %v2204
      %v2364 = vpop.f32.mrf.mxu0
      %v2365 = vadd.f32 %v2138, %v2364
      %v2366 = vpop.f32.mrf.mxu0
      %v2367 = vpop.f32.mrf.mxu0
      %v2368 = vadd.f32 %v2138, %v2367
      %v2369 = vpop.f32.mrf.mxu0
      %2370 = vdwg.mxu0
      %v2371 = vmax.f32 %v2245, 0.0
      %v2372 = vmax.f32 %v2248, 0.0
      %v2373 = vmax.f32 %v2253, 0.0
      %v2374 = vmax.f32 %v2256, 0.0
      %v2375 = vmax.f32 %v2261, 0.0
      %v2376 = vmax.f32 %v2264, 0.0
      %v2377 = vmax.f32 %v2269, 0.0
      %v2378 = vmax.f32 %v2272, 0.0
      %v2379 = vmax.f32 %v2277, 0.0
      %v2380 = vmax.f32 %v2280, 0.0
      %v2381 = vmax.f32 %v2285, 0.0
      %v2382 = vmax.f32 %v2288, 0.0
      %v2383 = vmax.f32 %v2293, 0.0
      %v2384 = vmax.f32 %v2296, 0.0
      %v2385 = vmax.f32 %v2301, 0.0
      %v2386 = vmax.f32 %v2304, 0.0
      %v2387 = vmax.f32 %v2309, 0.0
      %v2388 = vmax.f32 %v2312, 0.0
      %v2389 = vmax.f32 %v2317, 0.0
      %v2390 = vmax.f32 %v2320, 0.0
      %v2391 = vmax.f32 %v2325, 0.0
      %v2392 = vmax.f32 %v2328, 0.0
      %v2393 = vmax.f32 %v2333, 0.0
      %v2394 = vmax.f32 %v2336, 0.0
      %v2395 = vmax.f32 %v2341, 0.0
      %v2396 = vmax.f32 %v2344, 0.0
      %v2397 = vmax.f32 %v2349, 0.0
      %v2398 = vmax.f32 %v2352, 0.0
      %v2399 = vmax.f32 %v2357, 0.0
      %v2400 = vmax.f32 %v2360, 0.0
      %v2401 = vmax.f32 %v2365, 0.0
      %v2402 = vmax.f32 %v2368, 0.0
      %2403 = vst.msk [vmem:[%s264] sm:$0xff] %vm1792, %v2371
      %2404 = vst.msk [vmem:[%s264 + $0x8] sm:$0xff] %vm1792, %v2372
      %2405 = vst.msk [vmem:[%s264 + $0x10] sm:$0xff] %vm1792, %v2373
      %2406 = vst.msk [vmem:[%s264 + $0x18] sm:$0xff] %vm1792, %v2374
      %2407 = vst.msk [vmem:[%s264 + $0x20] sm:$0xff] %vm1792, %v2375
      %2408 = vst.msk [vmem:[%s264 + $0x28] sm:$0xff] %vm1792, %v2376
      %2409 = vst.msk [vmem:[%s264 + $0x30] sm:$0xff] %vm1792, %v2377
      %2410 = vst.msk [vmem:[%s264 + $0x38] sm:$0xff] %vm1792, %v2378
      %2411 = vst.msk [vmem:[%s264 + $0x40] sm:$0xff] %vm1792, %v2379
      %2412 = vst.msk [vmem:[%s264 + $0x48] sm:$0xff] %vm1792, %v2380
      %2413 = vst.msk [vmem:[%s264 + $0x50] sm:$0xff] %vm1792, %v2381
      %2414 = vst.msk [vmem:[%s264 + $0x58] sm:$0xff] %vm1792, %v2382
      %2415 = vst.msk [vmem:[%s264 + $0x60] sm:$0xff] %vm1792, %v2383
      %2416 = vst.msk [vmem:[%s264 + $0x68] sm:$0xff] %vm1792, %v2384
      %2417 = vst.msk [vmem:[%s264 + $0x70] sm:$0xff] %vm1792, %v2385
      %2418 = vst.msk [vmem:[%s264 + $0x78] sm:$0xff] %vm1792, %v2386
      %2419 = vst.msk [vmem:[%s264 + $0x80] sm:$0xff] %vm1792, %v2387
      %2420 = vst.msk [vmem:[%s264 + $0x88] sm:$0xff] %vm1792, %v2388
      %2421 = vst.msk [vmem:[%s264 + $0x90] sm:$0xff] %vm1792, %v2389
      %2422 = vst.msk [vmem:[%s264 + $0x98] sm:$0xff] %vm1792, %v2390
      %2423 = vst.msk [vmem:[%s264 + $0xa0] sm:$0xff] %vm1792, %v2391
      %2424 = vst.msk [vmem:[%s264 + $0xa8] sm:$0xff] %vm1792, %v2392
      %2425 = vst.msk [vmem:[%s264 + $0xb0] sm:$0xff] %vm1792, %v2393
      %2426 = vst.msk [vmem:[%s264 + $0xb8] sm:$0xff] %vm1792, %v2394
      %2427 = vst.msk [vmem:[%s264 + $0xc0] sm:$0xff] %vm1792, %v2395
      %2428 = vst.msk [vmem:[%s264 + $0xc8] sm:$0xff] %vm1792, %v2396
      %2429 = vst.msk [vmem:[%s264 + $0xd0] sm:$0xff] %vm1792, %v2397
      %2430 = vst.msk [vmem:[%s264 + $0xd8] sm:$0xff] %vm1792, %v2398
      %2431 = vst.msk [vmem:[%s264 + $0xe0] sm:$0xff] %vm1792, %v2399
      %2432 = vst.msk [vmem:[%s264 + $0xe8] sm:$0xff] %vm1792, %v2400
      %2433 = vst.msk [vmem:[%s264 + $0xf0] sm:$0xff] %vm1792, %v2401
      %2434 = vst.msk [vmem:[%s264 + $0xf8] sm:$0xff] %vm1792, %v2402
      %p2435 = scmp.lt.s32.totalorder %s16, 1
      %s2436 = scalar_select %p2435, %s16, 1
      %s2437 = smul.addr %s2436, 32
      %s2438 = smul.addr %s2437, 8
      %s2439 = scalar_lea.vmem %s5, %s2438
      // Predicated region
      $region41: #{unet_upsample_forward.5} parent=39 // pred_check
        %p2440 = pneg %p154
      $region42: #{unet_upsample_forward.5} parent=39 // pred_check_branch
        %2442 = sbr.rel (%p2440) target = $region44
      $region43: #{unet_upsample_forward.5} parent=39 // pred_region
        _
      $region44: #{unet_upsample_forward.5} parent=39 // pred_fallthru
        _
    $region40: #{unet_upsample_forward.5} parent=5 // pred_fallthru
      _
    %p2443 = scmp.le.s32.totalorder 2, %s11
    // Predicated region
    $region45: #{unet_upsample_forward.5} parent=5 // pred_check
      %p2444 = pneg %p2443
    $region46: #{unet_upsample_forward.5} parent=5 // pred_check_branch
      %2446 = sbr.rel (%p2444) target = $region48
    $region47: #{unet_upsample_forward.5} parent=5 // pred_region
      %s2447 = ssub.s32 %s11, 2
      // Predicated region
      $region49: #{unet_upsample_forward.5} parent=47 // pred_check
        %p2448 = pneg %p160
      $region50: #{unet_upsample_forward.5} parent=47 // pred_check_branch
        %2450 = sbr.rel (%p2448) target = $region52
      $region51: #{unet_upsample_forward.5} parent=47 // pred_region
        %p2451 = scmp.lt.s32.totalorder %s17, 1
        %s2452 = scalar_select %p2451, %s17, 1
        %s2453 = smul.addr %s2452, 32
        %s2454 = smul.addr %s2453, 8
        %s2455 = scalar_lea.vmem %s5, %s2454
      $region52: #{unet_upsample_forward.5} parent=47 // pred_fallthru
        _
    $region48: #{unet_upsample_forward.5} parent=5 // pred_fallthru
      _
  $region6: #{unet_upsample_forward.5} parent=0 // loop_footer
    %s15 = sadd.s32 1, %s11
  $region7: #{unet_upsample_forward.5} parent=0 // loop_footer_branch
    %10 = sbr.rel target = $region3
  $region8: #{unet_upsample_forward.5} parent=0 // loop_exit
    _

// kernel: unet_upsample_forward.4
$region0: #{unet_upsample_forward.4}
  #allocation0 [shape = 'u32[]', space=smem, size = 0x4, offset = 0x4, fixed_abs, tag = 'smem constant byte address 0x4 - core index']
  #allocation1 [shape = 'u32[144,128]{1,0:T(1,128)}', space=vmem, size = 0x12000, scoped, tag = 'internal scratch']
  %s0 = inlined_call_operand.vmem [shape: bf16[2,18,18,8], index: 0, kind: input, shape index: {}]
  %s1 = inlined_call_operand.vmem [shape: bf16[2,18,18,8], index: 1, kind: input, shape index: {}]
  %s2 = inlined_call_operand.vmem [shape: bf16[144,8], index: 2, kind: input, shape index: {}]
  %s3 = inlined_call_operand.vmem [shape: f32[1,8], index: 3, kind: input, shape index: {}]
  %s4 = inlined_call_operand.vmem [shape: bf16[2,18,18,8], index: 4, kind: output, shape index: {}]
  %s5 = sld [smem:[#allocation0]]
  $region49: #{unet_upsample_forward.4} parent=0
    _
  %s7 = ssub.s32 1, %s5
  %s8 = scalar_select 0, %s7, %s5
  loop: start=0, step=1, limit=4
  $region2: #{unet_upsample_forward.4} parent=0 // loop_pre_header
    _
  $region3: #{unet_upsample_forward.4} parent=0 // loop_header
    %s10 = sphi 0, %s14
    %p11 = scmp.ge.s32.totalorder %s10, 4
    %s20 = sphi 0, %s22
    %s23 = sphi 0, %s20
    %s24 = sphi 0, %s23
    %s40 = sphi 0, %s24
    %s46 = sphi 0, %s48
    %s49 = sphi 0, %s46
    %s50 = sphi 0, %s49
    %s66 = sphi 0, %s50
    %s70 = sphi 0, %s70
    %s72 = sphi 0, %s70
    %s73 = sphi 0, %s72
    %s87 = sphi 0, %s73
    %s91 = sphi 0, %s91
    %s93 = sphi 0, %s91
    %s94 = sphi 0, %s93
    %s108 = sphi 0, %s94
    %s114 = sphi 0, %s116
    %s117 = sphi 0, %s114
    %s118 = sphi 0, %s117
    %s134 = sphi 0, %s118
  $region4: #{unet_upsample_forward.4} parent=0 // loop_header_branch
    %13 = sbr.rel (%p11) target = $region8
  $region5: #{unet_upsample_forward.4} parent=0 // loop_body
    %s15 = ssub.s32 %s10, 1
    %s16 = ssub.s32 %s10, 2
    %s17 = sadd.s32 %s10, 1
    %s18 = ssub.s32 %s10, %s17
    %p19 = scmp.eq.s32.totalorder %s18, 0
    %s21 = sadd.s32 %s20, 1
    %s22 = scalar_select %p19, %s20, %s21
    %p25 = pneg %p19
    %p26 = scmp.eq.s32.totalorder %s10, 1
    %p27 = por %p25, %p26
    %p28 = scmp.ne.s32.totalorder %s20, %s23
    %p29 = scmp.eq.s32.totalorder %s10, 0
    %p30 = por %p28, %p29
    %p31 = scmp.ne.s32.totalorder %s20, %s23
    %p32 = scmp.eq.s32.totalorder %s15, 1
    %p33 = por %p31, %p32
    %p34 = scmp.ne.s32.totalorder %s23, %s24
    %p35 = scmp.eq.s32.totalorder %s15, 0
    %p36 = por %p34, %p35
    %p37 = scmp.ne.s32.totalorder %s23, %s24
    %p38 = scmp.eq.s32.totalorder %s16, 1
    %p39 = por %p37, %p38
    %p41 = scmp.ne.s32.totalorder %s24, %s40
    %p42 = scmp.eq.s32.totalorder %s16, 0
    %p43 = por %p41, %p42
    %s44 = ssub.s32 %s10, %s17
    %p45 = scmp.eq.s32.totalorder %s44, 0
    %s47 = sadd.s32 %s46, 1
    %s48 = scalar_select %p45, %s46, %s47
    %p51 = pneg %p45
    %p52 = scmp.eq.s32.totalorder %s10, 1
    %p53 = por %p51, %p52
    %p54 = scmp.ne.s32.totalorder %s46, %s49
    %p55 = scmp.eq.s32.totalorder %s10, 0
    %p56 = por %p54, %p55
    %p57 = scmp.ne.s32.totalorder %s46, %s49
    %p58 = scmp.eq.s32.totalorder %s15, 1
    %p59 = por %p57, %p58
    %p60 = scmp.ne.s32.totalorder %s49, %s50
    %p61 = scmp.eq.s32.totalorder %s15, 0
    %p62 = por %p60, %p61
    %p63 = scmp.ne.s32.totalorder %s49, %s50
    %p64 = scmp.eq.s32.totalorder %s16, 1
    %p65 = por %p63, %p64
    %p67 = scmp.ne.s32.totalorder %s50, %s66
    %p68 = scmp.eq.s32.totalorder %s16, 0
    %p69 = por %p67, %p68
    %s71 = sadd.s32 %s70, 1
    %p74 = scmp.eq.s32.totalorder %s10, 1
    %p75 = scmp.ne.s32.totalorder %s70, %s72
    %p76 = scmp.eq.s32.totalorder %s10, 0
    %p77 = por %p75, %p76
    %p78 = scmp.ne.s32.totalorder %s70, %s72
    %p79 = scmp.eq.s32.totalorder %s15, 1
    %p80 = por %p78, %p79
    %p81 = scmp.ne.s32.totalorder %s72, %s73
    %p82 = scmp.eq.s32.totalorder %s15, 0
    %p83 = por %p81, %p82
    %p84 = scmp.ne.s32.totalorder %s72, %s73
    %p85 = scmp.eq.s32.totalorder %s16, 1
    %p86 = por %p84, %p85
    %p88 = scmp.ne.s32.totalorder %s73, %s87
    %p89 = scmp.eq.s32.totalorder %s16, 0
    %p90 = por %p88, %p89
    %s92 = sadd.s32 %s91, 1
    %p95 = scmp.eq.s32.totalorder %s10, 1
    %p96 = scmp.ne.s32.totalorder %s91, %s93
    %p97 = scmp.eq.s32.totalorder %s10, 0
    %p98 = por %p96, %p97
    %p99 = scmp.ne.s32.totalorder %s91, %s93
    %p100 = scmp.eq.s32.totalorder %s15, 1
    %p101 = por %p99, %p100
    %p102 = scmp.ne.s32.totalorder %s93, %s94
    %p103 = scmp.eq.s32.totalorder %s15, 0
    %p104 = por %p102, %p103
    %p105 = scmp.ne.s32.totalorder %s93, %s94
    %p106 = scmp.eq.s32.totalorder %s16, 1
    %p107 = por %p105, %p106
    %p109 = scmp.ne.s32.totalorder %s94, %s108
    %p110 = scmp.eq.s32.totalorder %s16, 0
    %p111 = por %p109, %p110
    %s112 = ssub.s32 %s10, %s17
    %p113 = scmp.eq.s32.totalorder %s112, 0
    %s115 = sadd.s32 %s114, 1
    %s116 = scalar_select %p113, %s114, %s115
    %p119 = pneg %p113
    %p120 = scmp.eq.s32.totalorder %s10, 1
    %p121 = por %p119, %p120
    %p122 = scmp.ne.s32.totalorder %s114, %s117
    %p123 = scmp.eq.s32.totalorder %s10, 0
    %p124 = por %p122, %p123
    %p125 = scmp.ne.s32.totalorder %s114, %s117
    %p126 = scmp.eq.s32.totalorder %s15, 1
    %p127 = por %p125, %p126
    %p128 = scmp.ne.s32.totalorder %s117, %s118
    %p129 = scmp.eq.s32.totalorder %s15, 0
    %p130 = por %p128, %p129
    %p131 = scmp.ne.s32.totalorder %s117, %s118
    %p132 = scmp.eq.s32.totalorder %s16, 1
    %p133 = por %p131, %p132
    %p135 = scmp.ne.s32.totalorder %s118, %s134
    %p136 = scmp.eq.s32.totalorder %s16, 0
    %p137 = por %p135, %p136
    %p138 = scmp.le.s32.totalorder 1, %s10
    %p139 = scmp.lt.s32.totalorder %s10, 3
    %p140 = pnand %p138, %p139
    %p141 = pneg %p140
    // Predicated region
    $region9: #{unet_upsample_forward.4} parent=5 // pred_check
      _
    $region10: #{unet_upsample_forward.4} parent=5 // pred_check_branch
      %143 = sbr.rel (%p140) target = $region12
    $region11: #{unet_upsample_forward.4} parent=5 // pred_region
      %s144 = ssub.s32 %s10, 1
      // Predicated region
      $region13: #{unet_upsample_forward.4} parent=11 // pred_check
        %p145 = pneg %p83
      $region14: #{unet_upsample_forward.4} parent=11 // pred_check_branch
        %147 = sbr.rel (%p145) target = $region16
      $region15: #{unet_upsample_forward.4} parent=11 // pred_region
        _
      $region16: #{unet_upsample_forward.4} parent=11 // pred_fallthru
        _
      // Predicated region
      $region17: #{unet_upsample_forward.4} parent=11 // pred_check
        %p148 = pneg %p104
      $region18: #{unet_upsample_forward.4} parent=11 // pred_check_branch
        %150 = sbr.rel (%p148) target = $region20
      $region19: #{unet_upsample_forward.4} parent=11 // pred_region
        _
      $region20: #{unet_upsample_forward.4} parent=11 // pred_fallthru
        _
    $region12: #{unet_upsample_forward.4} parent=5 // pred_fallthru
      _
    %p151 = scmp.lt.s32.totalorder %s10, 2
    // Predicated region
    $region21: #{unet_upsample_forward.4} parent=5 // pred_check
      %p152 = pneg %p151
    $region22: #{unet_upsample_forward.4} parent=5 // pred_check_branch
      %154 = sbr.rel (%p152) target = $region24
    $region23: #{unet_upsample_forward.4} parent=5 // pred_region
      // Predicated region
      $region25: #{unet_upsample_forward.4} parent=23 // pred_check
        %p155 = pneg %p30
      $region26: #{unet_upsample_forward.4} parent=23 // pred_check_branch
        %157 = sbr.rel (%p155) target = $region28
      $region27: #{unet_upsample_forward.4} parent=23 // pred_region
        %p158 = scmp.lt.s32.totalorder %s10, 1
        %s159 = scalar_select %p158, %s10, 1
        %s160 = smul.addr %s159, 54
        %s161 = smul.addr %s160, 4
        %s162 = scalar_lea.vmem %s0, %s161
      $region28: #{unet_upsample_forward.4} parent=23 // pred_fallthru
        _
      // Predicated region
      $region29: #{unet_upsample_forward.4} parent=23 // pred_check
        %p163 = pneg %p56
      $region30: #{unet_upsample_forward.4} parent=23 // pred_check_branch
        %165 = sbr.rel (%p163) target = $region32
      $region31: #{unet_upsample_forward.4} parent=23 // pred_region
        %p166 = scmp.lt.s32.totalorder %s10, 1
        %s167 = scalar_select %p166, %s10, 1
        %s168 = smul.addr %s167, 54
        %s169 = smul.addr %s168, 4
        %s170 = scalar_lea.vmem %s1, %s169
      $region32: #{unet_upsample_forward.4} parent=23 // pred_fallthru
        _
    $region24: #{unet_upsample_forward.4} parent=5 // pred_fallthru
      _
    %p171 = scmp.le.s32.totalorder 1, %s10
    %p172 = scmp.lt.s32.totalorder %s10, 3
    %p173 = pnand %p171, %p172
    %p174 = pneg %p173
    // Predicated region
    $region33: #{unet_upsample_forward.4} parent=5 // pred_check
      _
    $region34: #{unet_upsample_forward.4} parent=5 // pred_check_branch
      %176 = sbr.rel (%p173) target = $region36
    $region35: #{unet_upsample_forward.4} parent=5 // pred_region
      %s177 = ssub.s32 %s10, 1
      %p178 = scmp.lt.s32.totalorder %s15, 1
      %s179 = scalar_select %p178, %s15, 1
      %s180 = smul.addr %s179, 54
      %s181 = smul.addr %s180, 4
      %s182 = scalar_lea.vmem %s0, %s181
      %p183 = pneg %p36
      %p184 = pneg %p33
      %p185 = scmp.lt.s32.totalorder %s15, 1
      %s186 = scalar_select %p185, %s15, 1
      %s187 = smul.addr %s186, 54
      %s188 = smul.addr %s187, 4
      %s189 = scalar_lea.vmem %s1, %s188
      %p190 = pneg %p62
      %p191 = pneg %p59
      %p192 = pneg %p83
      %p193 = pneg %p80
      %p194 = pneg %p104
      %p195 = pneg %p101
      %p196 = pneg %p130
      %p197 = pneg %p127
      %p198 = scmp.lt.s32.totalorder %s15, 1
      %s199 = scalar_select %p198, %s15, 1
      %s200 = smul.addr %s199, 54
      %s201 = smul.addr %s200, 4
      %s202 = scalar_lea.vmem %s4, %s201
      %p203 = scmp.lt.s32.totalorder %s15, 1
      %s204 = scalar_select %p203, %s15, 1
      %s205 = smul.addr %s204, 54
      %s206 = smul.addr %s205, 4
      %s207 = scalar_lea.vmem %s0, %s206
      %p208 = scmp.lt.s32.totalorder %s15, 1
      %s209 = scalar_select %p208, %s15, 1
      %s210 = smul.addr %s209, 54
      %s211 = smul.addr %s210, 4
      %s212 = scalar_lea.vmem %s1, %s211
      %p213 = scmp.lt.s32.totalorder %s15, 1
      %s214 = scalar_select %p213, %s15, 1
      %s215 = smul.addr %s214, 54
      %s216 = smul.addr %s215, 4
      %s217 = scalar_lea.vmem %s4, %s216
      %v219 = vld [vmem:[%s207] sm:$0xf]
      %v220 = vld [vmem:[%s207 + $0x4] sm:$0xf]
      %v221 = vld [vmem:[%s207 + $0x8] sm:$0x1]
      %v222 = vld [vmem:[%s207 + $0xc] sm:$0xf]
      %v223 = vld [vmem:[%s207 + $0x10] sm:$0xf]
      %v224 = vld [vmem:[%s207 + $0x14] sm:$0x1]
      %v225 = vld [vmem:[%s207 + $0x18] sm:$0xf]
      %v226 = vld [vmem:[%s207 + $0x1c] sm:$0xf]
      %v227 = vld [vmem:[%s207 + $0x20] sm:$0x1]
      %v228 = vld [vmem:[%s207 + $0x24] sm:$0xf]
      %v229 = vld [vmem:[%s207 + $0x28] sm:$0xf]
      %v230 = vld [vmem:[%s207 + $0x2c] sm:$0x1]
      %v231 = vld [vmem:[%s207 + $0x30] sm:$0xf]
      %v232 = vld [vmem:[%s207 + $0x34] sm:$0xf]
      %v233 = vld [vmem:[%s207 + $0x38] sm:$0x1]
      %v234 = vld [vmem:[%s207 + $0x3c] sm:$0xf]
      %v235 = vld [vmem:[%s207 + $0x40] sm:$0xf]
      %v236 = vld [vmem:[%s207 + $0x44] sm:$0x1]
      %v237 = vld [vmem:[%s207 + $0x48] sm:$0xf]
      %v238 = vld [vmem:[%s207 + $0x4c] sm:$0xf]
      %v239 = vld [vmem:[%s207 + $0x50] sm:$0x1]
      %v240 = vld [vmem:[%s207 + $0x54] sm:$0xf]
      %v241 = vld [vmem:[%s207 + $0x58] sm:$0xf]
      %v242 = vld [vmem:[%s207 + $0x5c] sm:$0x1]
      %v243 = vld [vmem:[%s207 + $0x60] sm:$0xf]
      %v244 = vld [vmem:[%s207 + $0x64] sm:$0xf]
      %v245 = vld [vmem:[%s207 + $0x68] sm:$0x1]
      %v246 = vld [vmem:[%s207 + $0x6c] sm:$0xf]
      %v247 = vld [vmem:[%s207 + $0x70] sm:$0xf]
      %v248 = vld [vmem:[%s207 + $0x74] sm:$0x1]
      %v249 = vld [vmem:[%s207 + $0x78] sm:$0xf]
      %v250 = vld [vmem:[%s207 + $0x7c] sm:$0xf]
      %v251 = vld [vmem:[%s207 + $0x80] sm:$0x1]
      %v252 = vld [vmem:[%s207 + $0x84] sm:$0xf]
      %v253 = vld [vmem:[%s207 + $0x88] sm:$0xf]
      %v254 = vld [vmem:[%s207 + $0x8c] sm:$0x1]
      %v255 = vld [vmem:[%s207 + $0x90] sm:$0xf]
      %v256 = vld [vmem:[%s207 + $0x94] sm:$0xf]
      %v257 = vld [vmem:[%s207 + $0x98] sm:$0x1]
      %v258 = vld [vmem:[%s207 + $0x9c] sm:$0xf]
      %v259 = vld [vmem:[%s207 + $0xa0] sm:$0xf]
      %v260 = vld [vmem:[%s207 + $0xa4] sm:$0x1]
      %v261 = vld [vmem:[%s207 + $0xa8] sm:$0xf]
      %v262 = vld [vmem:[%s207 + $0xac] sm:$0xf]
      %v263 = vld [vmem:[%s207 + $0xb0] sm:$0x1]
      %v264 = vld [vmem:[%s207 + $0xb4] sm:$0xf]
      %v265 = vld [vmem:[%s207 + $0xb8] sm:$0xf]
      %v266 = vld [vmem:[%s207 + $0xbc] sm:$0x1]
      %v267 = vld [vmem:[%s207 + $0xc0] sm:$0xf]
      %v268 = vld [vmem:[%s207 + $0xc4] sm:$0xf]
      %v269 = vld [vmem:[%s207 + $0xc8] sm:$0x1]
      %v270 = vld [vmem:[%s207 + $0xcc] sm:$0xf]
      %v271 = vld [vmem:[%s207 + $0xd0] sm:$0xf]
      %v272 = vld [vmem:[%s207 + $0xd4] sm:$0x1]
      %v273 = vld [vmem:[%s212] sm:$0xf]
      %v274 = vld [vmem:[%s212 + $0x4] sm:$0xf]
      %v275 = vld [vmem:[%s212 + $0x8] sm:$0x1]
      %v276 = vld [vmem:[%s212 + $0xc] sm:$0xf]
      %v277 = vld [vmem:[%s212 + $0x10] sm:$0xf]
      %v278 = vld [vmem:[%s212 + $0x14] sm:$0x1]
      %v279 = vld [vmem:[%s212 + $0x18] sm:$0xf]
      %v280 = vld [vmem:[%s212 + $0x1c] sm:$0xf]
      %v281 = vld [vmem:[%s212 + $0x20] sm:$0x1]
      %v282 = vld [vmem:[%s212 + $0x24] sm:$0xf]
      %v283 = vld [vmem:[%s212 + $0x28] sm:$0xf]
      %v284 = vld [vmem:[%s212 + $0x2c] sm:$0x1]
      %v285 = vld [vmem:[%s212 + $0x30] sm:$0xf]
      %v286 = vld [vmem:[%s212 + $0x34] sm:$0xf]
      %v287 = vld [vmem:[%s212 + $0x38] sm:$0x1]
      %v288 = vld [vmem:[%s212 + $0x3c] sm:$0xf]
      %v289 = vld [vmem:[%s212 + $0x40] sm:$0xf]
      %v290 = vld [vmem:[%s212 + $0x44] sm:$0x1]
      %v291 = vld [vmem:[%s212 + $0x48] sm:$0xf]
      %v292 = vld [vmem:[%s212 + $0x4c] sm:$0xf]
      %v293 = vld [vmem:[%s212 + $0x50] sm:$0x1]
      %v294 = vld [vmem:[%s212 + $0x54] sm:$0xf]
      %v295 = vld [vmem:[%s212 + $0x58] sm:$0xf]
      %v296 = vld [vmem:[%s212 + $0x5c] sm:$0x1]
      %v297 = vld [vmem:[%s212 + $0x60] sm:$0xf]
      %v298 = vld [vmem:[%s212 + $0x64] sm:$0xf]
      %v299 = vld [vmem:[%s212 + $0x68] sm:$0x1]
      %v300 = vld [vmem:[%s212 + $0x6c] sm:$0xf]
      %v301 = vld [vmem:[%s212 + $0x70] sm:$0xf]
      %v302 = vld [vmem:[%s212 + $0x74] sm:$0x1]
      %v303 = vld [vmem:[%s212 + $0x78] sm:$0xf]
      %v304 = vld [vmem:[%s212 + $0x7c] sm:$0xf]
      %v305 = vld [vmem:[%s212 + $0x80] sm:$0x1]
      %v306 = vld [vmem:[%s212 + $0x84] sm:$0xf]
      %v307 = vld [vmem:[%s212 + $0x88] sm:$0xf]
      %v308 = vld [vmem:[%s212 + $0x8c] sm:$0x1]
      %v309 = vld [vmem:[%s212 + $0x90] sm:$0xf]
      %v310 = vld [vmem:[%s212 + $0x94] sm:$0xf]
      %v311 = vld [vmem:[%s212 + $0x98] sm:$0x1]
      %v312 = vld [vmem:[%s212 + $0x9c] sm:$0xf]
      %v313 = vld [vmem:[%s212 + $0xa0] sm:$0xf]
      %v314 = vld [vmem:[%s212 + $0xa4] sm:$0x1]
      %v315 = vld [vmem:[%s212 + $0xa8] sm:$0xf]
      %v316 = vld [vmem:[%s212 + $0xac] sm:$0xf]
      %v317 = vld [vmem:[%s212 + $0xb0] sm:$0x1]
      %v318 = vld [vmem:[%s212 + $0xb4] sm:$0xf]
      %v319 = vld [vmem:[%s212 + $0xb8] sm:$0xf]
      %v320 = vld [vmem:[%s212 + $0xbc] sm:$0x1]
      %v321 = vld [vmem:[%s212 + $0xc0] sm:$0xf]
      %v322 = vld [vmem:[%s212 + $0xc4] sm:$0xf]
      %v323 = vld [vmem:[%s212 + $0xc8] sm:$0x1]
      %v324 = vld [vmem:[%s212 + $0xcc] sm:$0xf]
      %v325 = vld [vmem:[%s212 + $0xd0] sm:$0xf]
      %v326 = vld [vmem:[%s212 + $0xd4] sm:$0x1]
      %v359 = vunpack.c.l.b16 %v219
      %v360 = vunpack.c.l.b16 %v220
      %v361 = vunpack.c.l.b16 %v222
      %v362 = vunpack.c.l.b16 %v223
      %v363 = vunpack.c.l.b16 %v225
      %v364 = vunpack.c.l.b16 %v226
      %v365 = vunpack.c.l.b16 %v228
      %v366 = vunpack.c.l.b16 %v229
      %v367 = vunpack.c.l.b16 %v231
      %v368 = vunpack.c.l.b16 %v232
      %v369 = vunpack.c.l.b16 %v234
      %v370 = vunpack.c.l.b16 %v235
      %v371 = vunpack.c.l.b16 %v237
      %v372 = vunpack.c.l.b16 %v238
      %v373 = vunpack.c.l.b16 %v240
      %v374 = vunpack.c.l.b16 %v241
      %v375 = vunpack.c.l.b16 %v243
      %v376 = vunpack.c.l.b16 %v244
      %v377 = vunpack.c.l.b16 %v246
      %v378 = vunpack.c.l.b16 %v247
      %v379 = vunpack.c.l.b16 %v249
      %v380 = vunpack.c.l.b16 %v250
      %v381 = vunpack.c.l.b16 %v252
      %v382 = vunpack.c.l.b16 %v253
      %v383 = vunpack.c.l.b16 %v255
      %v384 = vunpack.c.l.b16 %v256
      %v385 = vunpack.c.l.b16 %v258
      %v386 = vunpack.c.l.b16 %v259
      %v387 = vunpack.c.l.b16 %v261
      %v388 = vunpack.c.l.b16 %v262
      %v389 = vunpack.c.l.b16 %v264
      %v390 = vunpack.c.l.b16 %v265
      %v391 = vpack.c.b16 %v360, %v359
      %v392 = vpack.c.b16 %v362, %v361
      %v393 = vpack.c.b16 %v364, %v363
      %v394 = vpack.c.b16 %v366, %v365
      %v395 = vpack.c.b16 %v368, %v367
      %v396 = vpack.c.b16 %v370, %v369
      %v397 = vpack.c.b16 %v372, %v371
      %v398 = vpack.c.b16 %v374, %v373
      %v399 = vpack.c.b16 %v376, %v375
      %v400 = vpack.c.b16 %v378, %v377
      %v401 = vpack.c.b16 %v380, %v379
      %v402 = vpack.c.b16 %v382, %v381
      %v403 = vpack.c.b16 %v384, %v383
      %v404 = vpack.c.b16 %v386, %v385
      %v405 = vpack.c.b16 %v388, %v387
      %v406 = vpack.c.b16 %v390, %v389
      %v423 = vunpack.c.l.b16 %v221
      %v424 = vunpack.c.l.b16 %v224
      %v425 = vunpack.c.l.b16 %v227
      %v426 = vunpack.c.l.b16 %v230
      %v427 = vunpack.c.l.b16 %v233
      %v428 = vunpack.c.l.b16 %v236
      %v429 = vunpack.c.l.b16 %v239
      %v430 = vunpack.c.l.b16 %v242
      %v431 = vunpack.c.l.b16 %v245
      %v432 = vunpack.c.l.b16 %v248
      %v433 = vunpack.c.l.b16 %v251
      %v434 = vunpack.c.l.b16 %v254
      %v435 = vunpack.c.l.b16 %v257
      %v436 = vunpack.c.l.b16 %v260
      %v437 = vunpack.c.l.b16 %v263
      %v438 = vunpack.c.l.b16 %v266
      %v439 = vpack.c.b16 %v423, %v423
      %v440 = vpack.c.b16 %v424, %v424
      %v441 = vpack.c.b16 %v425, %v425
      %v442 = vpack.c.b16 %v426, %v426
      %v443 = vpack.c.b16 %v427, %v427
      %v444 = vpack.c.b16 %v428, %v428
      %v445 = vpack.c.b16 %v429, %v429
      %v446 = vpack.c.b16 %v430, %v430
      %v447 = vpack.c.b16 %v431, %v431
      %v448 = vpack.c.b16 %v432, %v432
      %v449 = vpack.c.b16 %v433, %v433
      %v450 = vpack.c.b16 %v434, %v434
      %v451 = vpack.c.b16 %v435, %v435
      %v452 = vpack.c.b16 %v436, %v436
      %v453 = vpack.c.b16 %v437, %v437
      %v454 = vpack.c.b16 %v438, %v438
      %vm455 = vsmask.f32 7424
      %v457 = vshrl.u32 %v391, 16
      %v459 = vshll.u32 %v391, 16
      %v461 = vrot.slane %v459, 1
      %v462 = vor.u32 %v457, %v461
      %v464 = vshll.u32 %v439, 16
      %v466 = vrot.slane %v464, 1
      %v467 = vsel %vm455, %v462, %v466
      %v469 = vshrl.u32 %v392, 16
      %v471 = vshll.u32 %v392, 16
      %v473 = vrot.slane %v471, 1
      %v474 = vor.u32 %v469, %v473
      %v476 = vshll.u32 %v440, 16
      %v478 = vrot.slane %v476, 1
      %v479 = vsel %vm455, %v474, %v478
      %v481 = vshrl.u32 %v393, 16
      %v483 = vshll.u32 %v393, 16
      %v485 = vrot.slane %v483, 1
      %v486 = vor.u32 %v481, %v485
      %v488 = vshll.u32 %v441, 16
      %v490 = vrot.slane %v488, 1
      %v491 = vsel %vm455, %v486, %v490
      %v493 = vshrl.u32 %v394, 16
      %v495 = vshll.u32 %v394, 16
      %v497 = vrot.slane %v495, 1
      %v498 = vor.u32 %v493, %v497
      %v500 = vshll.u32 %v442, 16
      %v502 = vrot.slane %v500, 1
      %v503 = vsel %vm455, %v498, %v502
      %v505 = vshrl.u32 %v395, 16
      %v507 = vshll.u32 %v395, 16
      %v509 = vrot.slane %v507, 1
      %v510 = vor.u32 %v505, %v509
      %v512 = vshll.u32 %v443, 16
      %v514 = vrot.slane %v512, 1
      %v515 = vsel %vm455, %v510, %v514
      %v517 = vshrl.u32 %v396, 16
      %v519 = vshll.u32 %v396, 16
      %v521 = vrot.slane %v519, 1
      %v522 = vor.u32 %v517, %v521
      %v524 = vshll.u32 %v444, 16
      %v526 = vrot.slane %v524, 1
      %v527 = vsel %vm455, %v522, %v526
      %v529 = vshrl.u32 %v397, 16
      %v531 = vshll.u32 %v397, 16
      %v533 = vrot.slane %v531, 1
      %v534 = vor.u32 %v529, %v533
      %v536 = vshll.u32 %v445, 16
      %v538 = vrot.slane %v536, 1
      %v539 = vsel %vm455, %v534, %v538
      %v541 = vshrl.u32 %v398, 16
      %v543 = vshll.u32 %v398, 16
      %v545 = vrot.slane %v543, 1
      %v546 = vor.u32 %v541, %v545
      %v548 = vshll.u32 %v446, 16
      %v550 = vrot.slane %v548, 1
      %v551 = vsel %vm455, %v546, %v550
      %v553 = vshrl.u32 %v399, 16
      %v555 = vshll.u32 %v399, 16
      %v557 = vrot.slane %v555, 1
      %v558 = vor.u32 %v553, %v557
      %v560 = vshll.u32 %v447, 16
      %v562 = vrot.slane %v560, 1
      %v563 = vsel %vm455, %v558, %v562
      %v565 = vshrl.u32 %v400, 16
      %v567 = vshll.u32 %v400, 16
      %v569 = vrot.slane %v567, 1
      %v570 = vor.u32 %v565, %v569
      %v572 = vshll.u32 %v448, 16
      %v574 = vrot.slane %v572, 1
      %v575 = vsel %vm455, %v570, %v574
      %v577 = vshrl.u32 %v401, 16
      %v579 = vshll.u32 %v401, 16
      %v581 = vrot.slane %v579, 1
      %v582 = vor.u32 %v577, %v581
      %v584 = vshll.u32 %v449, 16
      %v586 = vrot.slane %v584, 1
      %v587 = vsel %vm455, %v582, %v586
      %v589 = vshrl.u32 %v402, 16
      %v591 = vshll.u32 %v402, 16
      %v593 = vrot.slane %v591, 1
      %v594 = vor.u32 %v589, %v593
      %v596 = vshll.u32 %v450, 16
      %v598 = vrot.slane %v596, 1
      %v599 = vsel %vm455, %v594, %v598
      %v601 = vshrl.u32 %v403, 16
      %v603 = vshll.u32 %v403, 16
      %v605 = vrot.slane %v603, 1
      %v606 = vor.u32 %v601, %v605
      %v608 = vshll.u32 %v451, 16
      %v610 = vrot.slane %v608, 1
      %v611 = vsel %vm455, %v606, %v610
      %v613 = vshrl.u32 %v404, 16
      %v615 = vshll.u32 %v404, 16
      %v617 = vrot.slane %v615, 1
      %v618 = vor.u32 %v613, %v617
      %v620 = vshll.u32 %v452, 16
      %v622 = vrot.slane %v620, 1
      %v623 = vsel %vm455, %v618, %v622
      %v625 = vshrl.u32 %v405, 16
      %v627 = vshll.u32 %v405, 16
      %v629 = vrot.slane %v627, 1
      %v630 = vor.u32 %v625, %v629
      %v632 = vshll.u32 %v453, 16
      %v634 = vrot.slane %v632, 1
      %v635 = vsel %vm455, %v630, %v634
      %v637 = vshrl.u32 %v406, 16
      %v639 = vshll.u32 %v406, 16
      %v641 = vrot.slane %v639, 1
      %v642 = vor.u32 %v637, %v641
      %v644 = vshll.u32 %v454, 16
      %v646 = vrot.slane %v644, 1
      %v647 = vsel %vm455, %v642, %v646
      %648 = vrot.lane.b32.xlu0 %v467, 8
      %v649 = vpop.permute.xlu0 %648
      %650 = vrot.lane.b32.xlu0 %v479, 8
      %v651 = vpop.permute.xlu0 %650
      %652 = vrot.lane.b32.xlu0 %v491, 8
      %v653 = vpop.permute.xlu0 %652
      %654 = vrot.lane.b32.xlu0 %v503, 8
      %v655 = vpop.permute.xlu0 %654
      %656 = vrot.lane.b32.xlu0 %v515, 8
      %v657 = vpop.permute.xlu0 %656
      %658 = vrot.lane.b32.xlu0 %v527, 8
      %v659 = vpop.permute.xlu0 %658
      %660 = vrot.lane.b32.xlu0 %v539, 8
      %v661 = vpop.permute.xlu0 %660
      %662 = vrot.lane.b32.xlu0 %v551, 8
      %v663 = vpop.permute.xlu0 %662
      %664 = vrot.lane.b32.xlu0 %v563, 8
      %v665 = vpop.permute.xlu0 %664
      %666 = vrot.lane.b32.xlu0 %v575, 8
      %v667 = vpop.permute.xlu0 %666
      %668 = vrot.lane.b32.xlu0 %v587, 8
      %v669 = vpop.permute.xlu0 %668
      %670 = vrot.lane.b32.xlu0 %v599, 8
      %v671 = vpop.permute.xlu0 %670
      %672 = vrot.lane.b32.xlu0 %v611, 8
      %v673 = vpop.permute.xlu0 %672
      %674 = vrot.lane.b32.xlu0 %v623, 8
      %v675 = vpop.permute.xlu0 %674
      %676 = vrot.lane.b32.xlu0 %v635, 8
      %v677 = vpop.permute.xlu0 %676
      %678 = vrot.lane.b32.xlu0 %v647, 8
      %v679 = vpop.permute.xlu0 %678
      %vm680 = vcmask 1046528
      %v681 = vrot.slane %v391, 1
      %v682 = vrot.slane %v439, 1
      %v683 = vsel %vm680, %v681, %v682
      %v684 = vrot.slane %v392, 1
      %v685 = vrot.slane %v440, 1
      %v686 = vsel %vm680, %v684, %v685
      %v687 = vrot.slane %v393, 1
      %v688 = vrot.slane %v441, 1
      %v689 = vsel %vm680, %v687, %v688
      %v690 = vrot.slane %v394, 1
      %v691 = vrot.slane %v442, 1
      %v692 = vsel %vm680, %v690, %v691
      %v693 = vrot.slane %v395, 1
      %v694 = vrot.slane %v443, 1
      %v695 = vsel %vm680, %v693, %v694
      %v696 = vrot.slane %v396, 1
      %v697 = vrot.slane %v444, 1
      %v698 = vsel %vm680, %v696, %v697
      %v699 = vrot.slane %v397, 1
      %v700 = vrot.slane %v445, 1
      %v701 = vsel %vm680, %v699, %v700
      %v702 = vrot.slane %v398, 1
      %v703 = vrot.slane %v446, 1
      %v704 = vsel %vm680, %v702, %v703
      %v705 = vrot.slane %v399, 1
      %v706 = vrot.slane %v447, 1
      %v707 = vsel %vm680, %v705, %v706
      %v708 = vrot.slane %v400, 1
      %v709 = vrot.slane %v448, 1
      %v710 = vsel %vm680, %v708, %v709
      %v711 = vrot.slane %v401, 1
      %v712 = vrot.slane %v449, 1
      %v713 = vsel %vm680, %v711, %v712
      %v714 = vrot.slane %v402, 1
      %v715 = vrot.slane %v450, 1
      %v716 = vsel %vm680, %v714, %v715
      %v717 = vrot.slane %v403, 1
      %v718 = vrot.slane %v451, 1
      %v719 = vsel %vm680, %v717, %v718
      %v720 = vrot.slane %v404, 1
      %v721 = vrot.slane %v452, 1
      %v722 = vsel %vm680, %v720, %v721
      %v723 = vrot.slane %v405, 1
      %v724 = vrot.slane %v453, 1
      %v725 = vsel %vm680, %v723, %v724
      %v726 = vrot.slane %v406, 1
      %v727 = vrot.slane %v454, 1
      %v728 = vsel %vm680, %v726, %v727
      %729 = vrot.lane.b32.xlu0 %v683, 16
      %v730 = vpop.permute.xlu0 %729
      %731 = vrot.lane.b32.xlu0 %v686, 16
      %v732 = vpop.permute.xlu0 %731
      %733 = vrot.lane.b32.xlu0 %v689, 16
      %v734 = vpop.permute.xlu0 %733
      %735 = vrot.lane.b32.xlu0 %v692, 16
      %v736 = vpop.permute.xlu0 %735
      %737 = vrot.lane.b32.xlu0 %v695, 16
      %v738 = vpop.permute.xlu0 %737
      %739 = vrot.lane.b32.xlu0 %v698, 16
      %v740 = vpop.permute.xlu0 %739
      %741 = vrot.lane.b32.xlu0 %v701, 16
      %v742 = vpop.permute.xlu0 %741
      %743 = vrot.lane.b32.xlu0 %v704, 16
      %v744 = vpop.permute.xlu0 %743
      %745 = vrot.lane.b32.xlu0 %v707, 16
      %v746 = vpop.permute.xlu0 %745
      %747 = vrot.lane.b32.xlu0 %v710, 16
      %v748 = vpop.permute.xlu0 %747
      %749 = vrot.lane.b32.xlu0 %v713, 16
      %v750 = vpop.permute.xlu0 %749
      %751 = vrot.lane.b32.xlu0 %v716, 16
      %v752 = vpop.permute.xlu0 %751
      %753 = vrot.lane.b32.xlu0 %v719, 16
      %v754 = vpop.permute.xlu0 %753
      %755 = vrot.lane.b32.xlu0 %v722, 16
      %v756 = vpop.permute.xlu0 %755
      %757 = vrot.lane.b32.xlu0 %v725, 16
      %v758 = vpop.permute.xlu0 %757
      %759 = vrot.lane.b32.xlu0 %v728, 16
      %v760 = vpop.permute.xlu0 %759
      %v763 = vunpack.c.l.b16 %v267
      %v764 = vunpack.c.l.b16 %v268
      %v765 = vpack.c.b16 %v764, %v763
      %766 = vrot.lane.b32.xlu0 %v392, 24
      %v767 = vpop.permute.xlu0 %766
      %768 = vrot.lane.b32.xlu0 %v393, 24
      %v769 = vpop.permute.xlu0 %768
      %770 = vrot.lane.b32.xlu0 %v394, 24
      %v771 = vpop.permute.xlu0 %770
      %772 = vrot.lane.b32.xlu0 %v395, 24
      %v773 = vpop.permute.xlu0 %772
      %774 = vrot.lane.b32.xlu0 %v396, 24
      %v775 = vpop.permute.xlu0 %774
      %776 = vrot.lane.b32.xlu0 %v397, 24
      %v777 = vpop.permute.xlu0 %776
      %778 = vrot.lane.b32.xlu0 %v398, 24
      %v779 = vpop.permute.xlu0 %778
      %780 = vrot.lane.b32.xlu0 %v399, 24
      %v781 = vpop.permute.xlu0 %780
      %782 = vrot.lane.b32.xlu0 %v400, 24
      %v783 = vpop.permute.xlu0 %782
      %784 = vrot.lane.b32.xlu0 %v401, 24
      %v785 = vpop.permute.xlu0 %784
      %786 = vrot.lane.b32.xlu0 %v402, 24
      %v787 = vpop.permute.xlu0 %786
      %788 = vrot.lane.b32.xlu0 %v403, 24
      %v789 = vpop.permute.xlu0 %788
      %790 = vrot.lane.b32.xlu0 %v404, 24
      %v791 = vpop.permute.xlu0 %790
      %792 = vrot.lane.b32.xlu0 %v405, 24
      %v793 = vpop.permute.xlu0 %792
      %794 = vrot.lane.b32.xlu0 %v406, 24
      %v795 = vpop.permute.xlu0 %794
      %796 = vrot.lane.b32.xlu0 %v765, 24
      %v797 = vpop.permute.xlu0 %796
      %v799 = vunpack.c.l.b16 %v269
      %v800 = vpack.c.b16 %v799, %v799
      %v802 = vshrl.u32 %v765, 16
      %v804 = vshll.u32 %v765, 16
      %v806 = vrot.slane %v804, 1
      %v807 = vor.u32 %v802, %v806
      %v809 = vshll.u32 %v800, 16
      %v811 = vrot.slane %v809, 1
      %v812 = vsel %vm455, %v807, %v811
      %813 = vrot.lane.b32.xlu0 %v479, 32
      %v814 = vpop.permute.xlu0 %813
      %815 = vrot.lane.b32.xlu0 %v491, 32
      %v816 = vpop.permute.xlu0 %815
      %817 = vrot.lane.b32.xlu0 %v503, 32
      %v818 = vpop.permute.xlu0 %817
      %819 = vrot.lane.b32.xlu0 %v515, 32
      %v820 = vpop.permute.xlu0 %819
      %821 = vrot.lane.b32.xlu0 %v527, 32
      %v822 = vpop.permute.xlu0 %821
      %823 = vrot.lane.b32.xlu0 %v539, 32
      %v824 = vpop.permute.xlu0 %823
      %825 = vrot.lane.b32.xlu0 %v551, 32
      %v826 = vpop.permute.xlu0 %825
      %827 = vrot.lane.b32.xlu0 %v563, 32
      %v828 = vpop.permute.xlu0 %827
      %829 = vrot.lane.b32.xlu0 %v575, 32
      %v830 = vpop.permute.xlu0 %829
      %831 = vrot.lane.b32.xlu0 %v587, 32
      %v832 = vpop.permute.xlu0 %831
      %833 = vrot.lane.b32.xlu0 %v599, 32
      %v834 = vpop.permute.xlu0 %833
      %835 = vrot.lane.b32.xlu0 %v611, 32
      %v836 = vpop.permute.xlu0 %835
      %837 = vrot.lane.b32.xlu0 %v623, 32
      %v838 = vpop.permute.xlu0 %837
      %839 = vrot.lane.b32.xlu0 %v635, 32
      %v840 = vpop.permute.xlu0 %839
      %841 = vrot.lane.b32.xlu0 %v647, 32
      %v842 = vpop.permute.xlu0 %841
      %843 = vrot.lane.b32.xlu0 %v812, 32
      %v844 = vpop.permute.xlu0 %843
      %v845 = vrot.slane %v765, 1
      %v846 = vrot.slane %v800, 1
      %v847 = vsel %vm680, %v845, %v846
      %848 = vrot.lane.b32.xlu0 %v686, 40
      %v849 = vpop.permute.xlu0 %848
      %850 = vrot.lane.b32.xlu0 %v689, 40
      %v851 = vpop.permute.xlu0 %850
      %852 = vrot.lane.b32.xlu0 %v692, 40
      %v853 = vpop.permute.xlu0 %852
      %854 = vrot.lane.b32.xlu0 %v695, 40
      %v855 = vpop.permute.xlu0 %854
      %856 = vrot.lane.b32.xlu0 %v698, 40
      %v857 = vpop.permute.xlu0 %856
      %858 = vrot.lane.b32.xlu0 %v701, 40
      %v859 = vpop.permute.xlu0 %858
      %860 = vrot.lane.b32.xlu0 %v704, 40
      %v861 = vpop.permute.xlu0 %860
      %862 = vrot.lane.b32.xlu0 %v707, 40
      %v863 = vpop.permute.xlu0 %862
      %864 = vrot.lane.b32.xlu0 %v710, 40
      %v865 = vpop.permute.xlu0 %864
      %866 = vrot.lane.b32.xlu0 %v713, 40
      %v867 = vpop.permute.xlu0 %866
      %868 = vrot.lane.b32.xlu0 %v716, 40
      %v869 = vpop.permute.xlu0 %868
      %870 = vrot.lane.b32.xlu0 %v719, 40
      %v871 = vpop.permute.xlu0 %870
      %872 = vrot.lane.b32.xlu0 %v722, 40
      %v873 = vpop.permute.xlu0 %872
      %874 = vrot.lane.b32.xlu0 %v725, 40
      %v875 = vpop.permute.xlu0 %874
      %876 = vrot.lane.b32.xlu0 %v728, 40
      %v877 = vpop.permute.xlu0 %876
      %878 = vrot.lane.b32.xlu0 %v847, 40
      %v879 = vpop.permute.xlu0 %878
      %v882 = vunpack.c.l.b16 %v270
      %v883 = vunpack.c.l.b16 %v271
      %v884 = vpack.c.b16 %v883, %v882
      %885 = vrot.lane.b32.xlu0 %v393, 48
      %v886 = vpop.permute.xlu0 %885
      %887 = vrot.lane.b32.xlu0 %v394, 48
      %v888 = vpop.permute.xlu0 %887
      %889 = vrot.lane.b32.xlu0 %v395, 48
      %v890 = vpop.permute.xlu0 %889
      %891 = vrot.lane.b32.xlu0 %v396, 48
      %v892 = vpop.permute.xlu0 %891
      %893 = vrot.lane.b32.xlu0 %v397, 48
      %v894 = vpop.permute.xlu0 %893
      %895 = vrot.lane.b32.xlu0 %v398, 48
      %v896 = vpop.permute.xlu0 %895
      %897 = vrot.lane.b32.xlu0 %v399, 48
      %v898 = vpop.permute.xlu0 %897
      %899 = vrot.lane.b32.xlu0 %v400, 48
      %v900 = vpop.permute.xlu0 %899
      %901 = vrot.lane.b32.xlu0 %v401, 48
      %v902 = vpop.permute.xlu0 %901
      %903 = vrot.lane.b32.xlu0 %v402, 48
      %v904 = vpop.permute.xlu0 %903
      %905 = vrot.lane.b32.xlu0 %v403, 48
      %v906 = vpop.permute.xlu0 %905
      %907 = vrot.lane.b32.xlu0 %v404, 48
      %v908 = vpop.permute.xlu0 %907
      %909 = vrot.lane.b32.xlu0 %v405, 48
      %v910 = vpop.permute.xlu0 %909
      %911 = vrot.lane.b32.xlu0 %v406, 48
      %v912 = vpop.permute.xlu0 %911
      %913 = vrot.lane.b32.xlu0 %v765, 48
      %v914 = vpop.permute.xlu0 %913
      %915 = vrot.lane.b32.xlu0 %v884, 48
      %v916 = vpop.permute.xlu0 %915
      %v918 = vunpack.c.l.b16 %v272
      %v919 = vpack.c.b16 %v918, %v918
      %v921 = vshrl.u32 %v884, 16
      %v923 = vshll.u32 %v884, 16
      %v925 = vrot.slane %v923, 1
      %v926 = vor.u32 %v921, %v925
      %v928 = vshll.u32 %v919, 16
      %v930 = vrot.slane %v928, 1
      %v931 = vsel %vm455, %v926, %v930
      %932 = vrot.lane.b32.xlu0 %v491, 56
      %v933 = vpop.permute.xlu0 %932
      %934 = vrot.lane.b32.xlu0 %v503, 56
      %v935 = vpop.permute.xlu0 %934
      %936 = vrot.lane.b32.xlu0 %v515, 56
      %v937 = vpop.permute.xlu0 %936
      %938 = vrot.lane.b32.xlu0 %v527, 56
      %v939 = vpop.permute.xlu0 %938
      %940 = vrot.lane.b32.xlu0 %v539, 56
      %v941 = vpop.permute.xlu0 %940
      %942 = vrot.lane.b32.xlu0 %v551, 56
      %v943 = vpop.permute.xlu0 %942
      %944 = vrot.lane.b32.xlu0 %v563, 56
      %v945 = vpop.permute.xlu0 %944
      %946 = vrot.lane.b32.xlu0 %v575, 56
      %v947 = vpop.permute.xlu0 %946
      %948 = vrot.lane.b32.xlu0 %v587, 56
      %v949 = vpop.permute.xlu0 %948
      %950 = vrot.lane.b32.xlu0 %v599, 56
      %v951 = vpop.permute.xlu0 %950
      %952 = vrot.lane.b32.xlu0 %v611, 56
      %v953 = vpop.permute.xlu0 %952
      %954 = vrot.lane.b32.xlu0 %v623, 56
      %v955 = vpop.permute.xlu0 %954
      %956 = vrot.lane.b32.xlu0 %v635, 56
      %v957 = vpop.permute.xlu0 %956
      %958 = vrot.lane.b32.xlu0 %v647, 56
      %v959 = vpop.permute.xlu0 %958
      %960 = vrot.lane.b32.xlu0 %v812, 56
      %v961 = vpop.permute.xlu0 %960
      %962 = vrot.lane.b32.xlu0 %v931, 56
      %v963 = vpop.permute.xlu0 %962
      %v964 = vrot.slane %v884, 1
      %v965 = vrot.slane %v919, 1
      %v966 = vsel %vm680, %v964, %v965
      %967 = vrot.lane.b32.xlu0 %v689, 64
      %v968 = vpop.permute.xlu0 %967
      %969 = vrot.lane.b32.xlu0 %v692, 64
      %v970 = vpop.permute.xlu0 %969
      %971 = vrot.lane.b32.xlu0 %v695, 64
      %v972 = vpop.permute.xlu0 %971
      %973 = vrot.lane.b32.xlu0 %v698, 64
      %v974 = vpop.permute.xlu0 %973
      %975 = vrot.lane.b32.xlu0 %v701, 64
      %v976 = vpop.permute.xlu0 %975
      %977 = vrot.lane.b32.xlu0 %v704, 64
      %v978 = vpop.permute.xlu0 %977
      %979 = vrot.lane.b32.xlu0 %v707, 64
      %v980 = vpop.permute.xlu0 %979
      %981 = vrot.lane.b32.xlu0 %v710, 64
      %v982 = vpop.permute.xlu0 %981
      %983 = vrot.lane.b32.xlu0 %v713, 64
      %v984 = vpop.permute.xlu0 %983
      %985 = vrot.lane.b32.xlu0 %v716, 64
      %v986 = vpop.permute.xlu0 %985
      %987 = vrot.lane.b32.xlu0 %v719, 64
      %v988 = vpop.permute.xlu0 %987
      %989 = vrot.lane.b32.xlu0 %v722, 64
      %v990 = vpop.permute.xlu0 %989
      %991 = vrot.lane.b32.xlu0 %v725, 64
      %v992 = vpop.permute.xlu0 %991
      %993 = vrot.lane.b32.xlu0 %v728, 64
      %v994 = vpop.permute.xlu0 %993
      %995 = vrot.lane.b32.xlu0 %v847, 64
      %v996 = vpop.permute.xlu0 %995
      %997 = vrot.lane.b32.xlu0 %v966, 64
      %v998 = vpop.permute.xlu0 %997
      %v1031 = vunpack.c.l.b16 %v273
      %v1032 = vunpack.c.l.b16 %v274
      %v1033 = vunpack.c.l.b16 %v276
      %v1034 = vunpack.c.l.b16 %v277
      %v1035 = vunpack.c.l.b16 %v279
      %v1036 = vunpack.c.l.b16 %v280
      %v1037 = vunpack.c.l.b16 %v282
      %v1038 = vunpack.c.l.b16 %v283
      %v1039 = vunpack.c.l.b16 %v285
      %v1040 = vunpack.c.l.b16 %v286
      %v1041 = vunpack.c.l.b16 %v288
      %v1042 = vunpack.c.l.b16 %v289
      %v1043 = vunpack.c.l.b16 %v291
      %v1044 = vunpack.c.l.b16 %v292
      %v1045 = vunpack.c.l.b16 %v294
      %v1046 = vunpack.c.l.b16 %v295
      %v1047 = vunpack.c.l.b16 %v297
      %v1048 = vunpack.c.l.b16 %v298
      %v1049 = vunpack.c.l.b16 %v300
      %v1050 = vunpack.c.l.b16 %v301
      %v1051 = vunpack.c.l.b16 %v303
      %v1052 = vunpack.c.l.b16 %v304
      %v1053 = vunpack.c.l.b16 %v306
      %v1054 = vunpack.c.l.b16 %v307
      %v1055 = vunpack.c.l.b16 %v309
      %v1056 = vunpack.c.l.b16 %v310
      %v1057 = vunpack.c.l.b16 %v312
      %v1058 = vunpack.c.l.b16 %v313
      %v1059 = vunpack.c.l.b16 %v315
      %v1060 = vunpack.c.l.b16 %v316
      %v1061 = vunpack.c.l.b16 %v318
      %v1062 = vunpack.c.l.b16 %v319
      %v1063 = vpack.c.b16 %v1032, %v1031
      %v1064 = vpack.c.b16 %v1034, %v1033
      %v1065 = vpack.c.b16 %v1036, %v1035
      %v1066 = vpack.c.b16 %v1038, %v1037
      %v1067 = vpack.c.b16 %v1040, %v1039
      %v1068 = vpack.c.b16 %v1042, %v1041
      %v1069 = vpack.c.b16 %v1044, %v1043
      %v1070 = vpack.c.b16 %v1046, %v1045
      %v1071 = vpack.c.b16 %v1048, %v1047
      %v1072 = vpack.c.b16 %v1050, %v1049
      %v1073 = vpack.c.b16 %v1052, %v1051
      %v1074 = vpack.c.b16 %v1054, %v1053
      %v1075 = vpack.c.b16 %v1056, %v1055
      %v1076 = vpack.c.b16 %v1058, %v1057
      %v1077 = vpack.c.b16 %v1060, %v1059
      %v1078 = vpack.c.b16 %v1062, %v1061
      %1079 = vrot.lane.b32.xlu0 %v1063, 72
      %v1080 = vpop.permute.xlu0 %1079
      %1081 = vrot.lane.b32.xlu0 %v1064, 72
      %v1082 = vpop.permute.xlu0 %1081
      %1083 = vrot.lane.b32.xlu0 %v1065, 72
      %v1084 = vpop.permute.xlu0 %1083
      %1085 = vrot.lane.b32.xlu0 %v1066, 72
      %v1086 = vpop.permute.xlu0 %1085
      %1087 = vrot.lane.b32.xlu0 %v1067, 72
      %v1088 = vpop.permute.xlu0 %1087
      %1089 = vrot.lane.b32.xlu0 %v1068, 72
      %v1090 = vpop.permute.xlu0 %1089
      %1091 = vrot.lane.b32.xlu0 %v1069, 72
      %v1092 = vpop.permute.xlu0 %1091
      %1093 = vrot.lane.b32.xlu0 %v1070, 72
      %v1094 = vpop.permute.xlu0 %1093
      %1095 = vrot.lane.b32.xlu0 %v1071, 72
      %v1096 = vpop.permute.xlu0 %1095
      %1097 = vrot.lane.b32.xlu0 %v1072, 72
      %v1098 = vpop.permute.xlu0 %1097
      %1099 = vrot.lane.b32.xlu0 %v1073, 72
      %v1100 = vpop.permute.xlu0 %1099
      %1101 = vrot.lane.b32.xlu0 %v1074, 72
      %v1102 = vpop.permute.xlu0 %1101
      %1103 = vrot.lane.b32.xlu0 %v1075, 72
      %v1104 = vpop.permute.xlu0 %1103
      %1105 = vrot.lane.b32.xlu0 %v1076, 72
      %v1106 = vpop.permute.xlu0 %1105
      %1107 = vrot.lane.b32.xlu0 %v1077, 72
      %v1108 = vpop.permute.xlu0 %1107
      %1109 = vrot.lane.b32.xlu0 %v1078, 72
      %v1110 = vpop.permute.xlu0 %1109
      %v1127 = vunpack.c.l.b16 %v275
      %v1128 = vunpack.c.l.b16 %v278
      %v1129 = vunpack.c.l.b16 %v281
      %v1130 = vunpack.c.l.b16 %v284
      %v1131 = vunpack.c.l.b16 %v287
      %v1132 = vunpack.c.l.b16 %v290
      %v1133 = vunpack.c.l.b16 %v293
      %v1134 = vunpack.c.l.b16 %v296
      %v1135 = vunpack.c.l.b16 %v299
      %v1136 = vunpack.c.l.b16 %v302
      %v1137 = vunpack.c.l.b16 %v305
      %v1138 = vunpack.c.l.b16 %v308
      %v1139 = vunpack.c.l.b16 %v311
      %v1140 = vunpack.c.l.b16 %v314
      %v1141 = vunpack.c.l.b16 %v317
      %v1142 = vunpack.c.l.b16 %v320
      %v1143 = vpack.c.b16 %v1127, %v1127
      %v1144 = vpack.c.b16 %v1128, %v1128
      %v1145 = vpack.c.b16 %v1129, %v1129
      %v1146 = vpack.c.b16 %v1130, %v1130
      %v1147 = vpack.c.b16 %v1131, %v1131
      %v1148 = vpack.c.b16 %v1132, %v1132
      %v1149 = vpack.c.b16 %v1133, %v1133
      %v1150 = vpack.c.b16 %v1134, %v1134
      %v1151 = vpack.c.b16 %v1135, %v1135
      %v1152 = vpack.c.b16 %v1136, %v1136
      %v1153 = vpack.c.b16 %v1137, %v1137
      %v1154 = vpack.c.b16 %v1138, %v1138
      %v1155 = vpack.c.b16 %v1139, %v1139
      %v1156 = vpack.c.b16 %v1140, %v1140
      %v1157 = vpack.c.b16 %v1141, %v1141
      %v1158 = vpack.c.b16 %v1142, %v1142
      %v1160 = vshrl.u32 %v1063, 16
      %v1162 = vshll.u32 %v1063, 16
      %v1164 = vrot.slane %v1162, 1
      %v1165 = vor.u32 %v1160, %v1164
      %v1167 = vshll.u32 %v1143, 16
      %v1169 = vrot.slane %v1167, 1
      %v1170 = vsel %vm455, %v1165, %v1169
      %v1172 = vshrl.u32 %v1064, 16
      %v1174 = vshll.u32 %v1064, 16
      %v1176 = vrot.slane %v1174, 1
      %v1177 = vor.u32 %v1172, %v1176
      %v1179 = vshll.u32 %v1144, 16
      %v1181 = vrot.slane %v1179, 1
      %v1182 = vsel %vm455, %v1177, %v1181
      %v1184 = vshrl.u32 %v1065, 16
      %v1186 = vshll.u32 %v1065, 16
      %v1188 = vrot.slane %v1186, 1
      %v1189 = vor.u32 %v1184, %v1188
      %v1191 = vshll.u32 %v1145, 16
      %v1193 = vrot.slane %v1191, 1
      %v1194 = vsel %vm455, %v1189, %v1193
      %v1196 = vshrl.u32 %v1066, 16
      %v1198 = vshll.u32 %v1066, 16
      %v1200 = vrot.slane %v1198, 1
      %v1201 = vor.u32 %v1196, %v1200
      %v1203 = vshll.u32 %v1146, 16
      %v1205 = vrot.slane %v1203, 1
      %v1206 = vsel %vm455, %v1201, %v1205
      %v1208 = vshrl.u32 %v1067, 16
      %v1210 = vshll.u32 %v1067, 16
      %v1212 = vrot.slane %v1210, 1
      %v1213 = vor.u32 %v1208, %v1212
      %v1215 = vshll.u32 %v1147, 16
      %v1217 = vrot.slane %v1215, 1
      %v1218 = vsel %vm455, %v1213, %v1217
      %v1220 = vshrl.u32 %v1068, 16
      %v1222 = vshll.u32 %v1068, 16
      %v1224 = vrot.slane %v1222, 1
      %v1225 = vor.u32 %v1220, %v1224
      %v1227 = vshll.u32 %v1148, 16
      %v1229 = vrot.slane %v1227, 1
      %v1230 = vsel %vm455, %v1225, %v1229
      %v1232 = vshrl.u32 %v1069, 16
      %v1234 = vshll.u32 %v1069, 16
      %v1236 = vrot.slane %v1234, 1
      %v1237 = vor.u32 %v1232, %v1236
      %v1239 = vshll.u32 %v1149, 16
      %v1241 = vrot.slane %v1239, 1
      %v1242 = vsel %vm455, %v1237, %v1241
      %v1244 = vshrl.u32 %v1070, 16
      %v1246 = vshll.u32 %v1070, 16
      %v1248 = vrot.slane %v1246, 1
      %v1249 = vor.u32 %v1244, %v1248
      %v1251 = vshll.u32 %v1150, 16
      %v1253 = vrot.slane %v1251, 1
      %v1254 = vsel %vm455, %v1249, %v1253
      %v1256 = vshrl.u32 %v1071, 16
      %v1258 = vshll.u32 %v1071, 16
      %v1260 = vrot.slane %v1258, 1
      %v1261 = vor.u32 %v1256, %v1260
      %v1263 = vshll.u32 %v1151, 16
      %v1265 = vrot.slane %v1263, 1
      %v1266 = vsel %vm455, %v1261, %v1265
      %v1268 = vshrl.u32 %v1072, 16
      %v1270 = vshll.u32 %v1072, 16
      %v1272 = vrot.slane %v1270, 1
      %v1273 = vor.u32 %v1268, %v1272
      %v1275 = vshll.u32 %v1152, 16
      %v1277 = vrot.slane %v1275, 1
      %v1278 = vsel %vm455, %v1273, %v1277
      %v1280 = vshrl.u32 %v1073, 16
      %v1282 = vshll.u32 %v1073, 16
      %v1284 = vrot.slane %v1282, 1
      %v1285 = vor.u32 %v1280, %v1284
      %v1287 = vshll.u32 %v1153, 16
      %v1289 = vrot.slane %v1287, 1
      %v1290 = vsel %vm455, %v1285, %v1289
      %v1292 = vshrl.u32 %v1074, 16
      %v1294 = vshll.u32 %v1074, 16
      %v1296 = vrot.slane %v1294, 1
      %v1297 = vor.u32 %v1292, %v1296
      %v1299 = vshll.u32 %v1154, 16
      %v1301 = vrot.slane %v1299, 1
      %v1302 = vsel %vm455, %v1297, %v1301
      %v1304 = vshrl.u32 %v1075, 16
      %v1306 = vshll.u32 %v1075, 16
      %v1308 = vrot.slane %v1306, 1
      %v1309 = vor.u32 %v1304, %v1308
      %v1311 = vshll.u32 %v1155, 16
      %v1313 = vrot.slane %v1311, 1
      %v1314 = vsel %vm455, %v1309, %v1313
      %v1316 = vshrl.u32 %v1076, 16
      %v1318 = vshll.u32 %v1076, 16
      %v1320 = vrot.slane %v1318, 1
      %v1321 = vor.u32 %v1316, %v1320
      %v1323 = vshll.u32 %v1156, 16
      %v1325 = vrot.slane %v1323, 1
      %v1326 = vsel %vm455, %v1321, %v1325
      %v1328 = vshrl.u32 %v1077, 16
      %v1330 = vshll.u32 %v1077, 16
      %v1332 = vrot.slane %v1330, 1
      %v1333 = vor.u32 %v1328, %v1332
      %v1335 = vshll.u32 %v1157, 16
      %v1337 = vrot.slane %v1335, 1
      %v1338 = vsel %vm455, %v1333, %v1337
      %v1340 = vshrl.u32 %v1078, 16
      %v1342 = vshll.u32 %v1078, 16
      %v1344 = vrot.slane %v1342, 1
      %v1345 = vor.u32 %v1340, %v1344
      %v1347 = vshll.u32 %v1158, 16
      %v1349 = vrot.slane %v1347, 1
      %v1350 = vsel %vm455, %v1345, %v1349
      %1351 = vrot.lane.b32.xlu0 %v1170, 80
      %v1352 = vpop.permute.xlu0 %1351
      %1353 = vrot.lane.b32.xlu0 %v1182, 80
      %v1354 = vpop.permute.xlu0 %1353
      %1355 = vrot.lane.b32.xlu0 %v1194, 80
      %v1356 = vpop.permute.xlu0 %1355
      %1357 = vrot.lane.b32.xlu0 %v1206, 80
      %v1358 = vpop.permute.xlu0 %1357
      %1359 = vrot.lane.b32.xlu0 %v1218, 80
      %v1360 = vpop.permute.xlu0 %1359
      %1361 = vrot.lane.b32.xlu0 %v1230, 80
      %v1362 = vpop.permute.xlu0 %1361
      %1363 = vrot.lane.b32.xlu0 %v1242, 80
      %v1364 = vpop.permute.xlu0 %1363
      %1365 = vrot.lane.b32.xlu0 %v1254, 80
      %v1366 = vpop.permute.xlu0 %1365
      %1367 = vrot.lane.b32.xlu0 %v1266, 80
      %v1368 = vpop.permute.xlu0 %1367
      %1369 = vrot.lane.b32.xlu0 %v1278, 80
      %v1370 = vpop.permute.xlu0 %1369
      %1371 = vrot.lane.b32.xlu0 %v1290, 80
      %v1372 = vpop.permute.xlu0 %1371
      %1373 = vrot.lane.b32.xlu0 %v1302, 80
      %v1374 = vpop.permute.xlu0 %1373
      %1375 = vrot.lane.b32.xlu0 %v1314, 80
      %v1376 = vpop.permute.xlu0 %1375
      %1377 = vrot.lane.b32.xlu0 %v1326, 80
      %v1378 = vpop.permute.xlu0 %1377
      %1379 = vrot.lane.b32.xlu0 %v1338, 80
      %v1380 = vpop.permute.xlu0 %1379
      %1381 = vrot.lane.b32.xlu0 %v1350, 80
      %v1382 = vpop.permute.xlu0 %1381
      %v1383 = vrot.slane %v1063, 1
      %v1384 = vrot.slane %v1143, 1
      %v1385 = vsel %vm680, %v1383, %v1384
      %v1386 = vrot.slane %v1064, 1
      %v1387 = vrot.slane %v1144, 1
      %v1388 = vsel %vm680, %v1386, %v1387
      %v1389 = vrot.slane %v1065, 1
      %v1390 = vrot.slane %v1145, 1
      %v1391 = vsel %vm680, %v1389, %v1390
      %v1392 = vrot.slane %v1066, 1
      %v1393 = vrot.slane %v1146, 1
      %v1394 = vsel %vm680, %v1392, %v1393
      %v1395 = vrot.slane %v1067, 1
      %v1396 = vrot.slane %v1147, 1
      %v1397 = vsel %vm680, %v1395, %v1396
      %v1398 = vrot.slane %v1068, 1
      %v1399 = vrot.slane %v1148, 1
      %v1400 = vsel %vm680, %v1398, %v1399
      %v1401 = vrot.slane %v1069, 1
      %v1402 = vrot.slane %v1149, 1
      %v1403 = vsel %vm680, %v1401, %v1402
      %v1404 = vrot.slane %v1070, 1
      %v1405 = vrot.slane %v1150, 1
      %v1406 = vsel %vm680, %v1404, %v1405
      %v1407 = vrot.slane %v1071, 1
      %v1408 = vrot.slane %v1151, 1
      %v1409 = vsel %vm680, %v1407, %v1408
      %v1410 = vrot.slane %v1072, 1
      %v1411 = vrot.slane %v1152, 1
      %v1412 = vsel %vm680, %v1410, %v1411
      %v1413 = vrot.slane %v1073, 1
      %v1414 = vrot.slane %v1153, 1
      %v1415 = vsel %vm680, %v1413, %v1414
      %v1416 = vrot.slane %v1074, 1
      %v1417 = vrot.slane %v1154, 1
      %v1418 = vsel %vm680, %v1416, %v1417
      %v1419 = vrot.slane %v1075, 1
      %v1420 = vrot.slane %v1155, 1
      %v1421 = vsel %vm680, %v1419, %v1420
      %v1422 = vrot.slane %v1076, 1
      %v1423 = vrot.slane %v1156, 1
      %v1424 = vsel %vm680, %v1422, %v1423
      %v1425 = vrot.slane %v1077, 1
      %v1426 = vrot.slane %v1157, 1
      %v1427 = vsel %vm680, %v1425, %v1426
      %v1428 = vrot.slane %v1078, 1
      %v1429 = vrot.slane %v1158, 1
      %v1430 = vsel %vm680, %v1428, %v1429
      %1431 = vrot.lane.b32.xlu0 %v1385, 88
      %v1432 = vpop.permute.xlu0 %1431
      %1433 = vrot.lane.b32.xlu0 %v1388, 88
      %v1434 = vpop.permute.xlu0 %1433
      %1435 = vrot.lane.b32.xlu0 %v1391, 88
      %v1436 = vpop.permute.xlu0 %1435
      %1437 = vrot.lane.b32.xlu0 %v1394, 88
      %v1438 = vpop.permute.xlu0 %1437
      %1439 = vrot.lane.b32.xlu0 %v1397, 88
      %v1440 = vpop.permute.xlu0 %1439
      %1441 = vrot.lane.b32.xlu0 %v1400, 88
      %v1442 = vpop.permute.xlu0 %1441
      %1443 = vrot.lane.b32.xlu0 %v1403, 88
      %v1444 = vpop.permute.xlu0 %1443
      %1445 = vrot.lane.b32.xlu0 %v1406, 88
      %v1446 = vpop.permute.xlu0 %1445
      %1447 = vrot.lane.b32.xlu0 %v1409, 88
      %v1448 = vpop.permute.xlu0 %1447
      %1449 = vrot.lane.b32.xlu0 %v1412, 88
      %v1450 = vpop.permute.xlu0 %1449
      %1451 = vrot.lane.b32.xlu0 %v1415, 88
      %v1452 = vpop.permute.xlu0 %1451
      %1453 = vrot.lane.b32.xlu0 %v1418, 88
      %v1454 = vpop.permute.xlu0 %1453
      %1455 = vrot.lane.b32.xlu0 %v1421, 88
      %v1456 = vpop.permute.xlu0 %1455
      %1457 = vrot.lane.b32.xlu0 %v1424, 88
      %v1458 = vpop.permute.xlu0 %1457
      %1459 = vrot.lane.b32.xlu0 %v1427, 88
      %v1460 = vpop.permute.xlu0 %1459
      %1461 = vrot.lane.b32.xlu0 %v1430, 88
      %v1462 = vpop.permute.xlu0 %1461
      %v1465 = vunpack.c.l.b16 %v321
      %v1466 = vunpack.c.l.b16 %v322
      %v1467 = vpack.c.b16 %v1466, %v1465
      %1468 = vrot.lane.b32.xlu0 %v1064, 96
      %v1469 = vpop.permute.xlu0 %1468
      %1470 = vrot.lane.b32.xlu0 %v1065, 96
      %v1471 = vpop.permute.xlu0 %1470
      %1472 = vrot.lane.b32.xlu0 %v1066, 96
      %v1473 = vpop.permute.xlu0 %1472
      %1474 = vrot.lane.b32.xlu0 %v1067, 96
      %v1475 = vpop.permute.xlu0 %1474
      %1476 = vrot.lane.b32.xlu0 %v1068, 96
      %v1477 = vpop.permute.xlu0 %1476
      %1478 = vrot.lane.b32.xlu0 %v1069, 96
      %v1479 = vpop.permute.xlu0 %1478
      %1480 = vrot.lane.b32.xlu0 %v1070, 96
      %v1481 = vpop.permute.xlu0 %1480
      %1482 = vrot.lane.b32.xlu0 %v1071, 96
      %v1483 = vpop.permute.xlu0 %1482
      %1484 = vrot.lane.b32.xlu0 %v1072, 96
      %v1485 = vpop.permute.xlu0 %1484
      %1486 = vrot.lane.b32.xlu0 %v1073, 96
      %v1487 = vpop.permute.xlu0 %1486
      %1488 = vrot.lane.b32.xlu0 %v1074, 96
      %v1489 = vpop.permute.xlu0 %1488
      %1490 = vrot.lane.b32.xlu0 %v1075, 96
      %v1491 = vpop.permute.xlu0 %1490
      %1492 = vrot.lane.b32.xlu0 %v1076, 96
      %v1493 = vpop.permute.xlu0 %1492
      %1494 = vrot.lane.b32.xlu0 %v1077, 96
      %v1495 = vpop.permute.xlu0 %1494
      %1496 = vrot.lane.b32.xlu0 %v1078, 96
      %v1497 = vpop.permute.xlu0 %1496
      %1498 = vrot.lane.b32.xlu0 %v1467, 96
      %v1499 = vpop.permute.xlu0 %1498
      %v1501 = vunpack.c.l.b16 %v323
      %v1502 = vpack.c.b16 %v1501, %v1501
      %v1504 = vshrl.u32 %v1467, 16
      %v1506 = vshll.u32 %v1467, 16
      %v1508 = vrot.slane %v1506, 1
      %v1509 = vor.u32 %v1504, %v1508
      %v1511 = vshll.u32 %v1502, 16
      %v1513 = vrot.slane %v1511, 1
      %v1514 = vsel %vm455, %v1509, %v1513
      %1515 = vrot.lane.b32.xlu0 %v1182, 104
      %v1516 = vpop.permute.xlu0 %1515
      %1517 = vrot.lane.b32.xlu0 %v1194, 104
      %v1518 = vpop.permute.xlu0 %1517
      %1519 = vrot.lane.b32.xlu0 %v1206, 104
      %v1520 = vpop.permute.xlu0 %1519
      %1521 = vrot.lane.b32.xlu0 %v1218, 104
      %v1522 = vpop.permute.xlu0 %1521
      %1523 = vrot.lane.b32.xlu0 %v1230, 104
      %v1524 = vpop.permute.xlu0 %1523
      %1525 = vrot.lane.b32.xlu0 %v1242, 104
      %v1526 = vpop.permute.xlu0 %1525
      %1527 = vrot.lane.b32.xlu0 %v1254, 104
      %v1528 = vpop.permute.xlu0 %1527
      %1529 = vrot.lane.b32.xlu0 %v1266, 104
      %v1530 = vpop.permute.xlu0 %1529
      %1531 = vrot.lane.b32.xlu0 %v1278, 104
      %v1532 = vpop.permute.xlu0 %1531
      %1533 = vrot.lane.b32.xlu0 %v1290, 104
      %v1534 = vpop.permute.xlu0 %1533
      %1535 = vrot.lane.b32.xlu0 %v1302, 104
      %v1536 = vpop.permute.xlu0 %1535
      %1537 = vrot.lane.b32.xlu0 %v1314, 104
      %v1538 = vpop.permute.xlu0 %1537
      %1539 = vrot.lane.b32.xlu0 %v1326, 104
      %v1540 = vpop.permute.xlu0 %1539
      %1541 = vrot.lane.b32.xlu0 %v1338, 104
      %v1542 = vpop.permute.xlu0 %1541
      %1543 = vrot.lane.b32.xlu0 %v1350, 104
      %v1544 = vpop.permute.xlu0 %1543
      %1545 = vrot.lane.b32.xlu0 %v1514, 104
      %v1546 = vpop.permute.xlu0 %1545
      %v1547 = vrot.slane %v1467, 1
      %v1548 = vrot.slane %v1502, 1
      %v1549 = vsel %vm680, %v1547, %v1548
      %1550 = vrot.lane.b32.xlu0 %v1388, 112
      %v1551 = vpop.permute.xlu0 %1550
      %1552 = vrot.lane.b32.xlu0 %v1391, 112
      %v1553 = vpop.permute.xlu0 %1552
      %1554 = vrot.lane.b32.xlu0 %v1394, 112
      %v1555 = vpop.permute.xlu0 %1554
      %1556 = vrot.lane.b32.xlu0 %v1397, 112
      %v1557 = vpop.permute.xlu0 %1556
      %1558 = vrot.lane.b32.xlu0 %v1400, 112
      %v1559 = vpop.permute.xlu0 %1558
      %1560 = vrot.lane.b32.xlu0 %v1403, 112
      %v1561 = vpop.permute.xlu0 %1560
      %1562 = vrot.lane.b32.xlu0 %v1406, 112
      %v1563 = vpop.permute.xlu0 %1562
      %1564 = vrot.lane.b32.xlu0 %v1409, 112
      %v1565 = vpop.permute.xlu0 %1564
      %1566 = vrot.lane.b32.xlu0 %v1412, 112
      %v1567 = vpop.permute.xlu0 %1566
      %1568 = vrot.lane.b32.xlu0 %v1415, 112
      %v1569 = vpop.permute.xlu0 %1568
      %1570 = vrot.lane.b32.xlu0 %v1418, 112
      %v1571 = vpop.permute.xlu0 %1570
      %1572 = vrot.lane.b32.xlu0 %v1421, 112
      %v1573 = vpop.permute.xlu0 %1572
      %1574 = vrot.lane.b32.xlu0 %v1424, 112
      %v1575 = vpop.permute.xlu0 %1574
      %1576 = vrot.lane.b32.xlu0 %v1427, 112
      %v1577 = vpop.permute.xlu0 %1576
      %1578 = vrot.lane.b32.xlu0 %v1430, 112
      %v1579 = vpop.permute.xlu0 %1578
      %1580 = vrot.lane.b32.xlu0 %v1549, 112
      %v1581 = vpop.permute.xlu0 %1580
      %v1584 = vunpack.c.l.b16 %v324
      %v1585 = vunpack.c.l.b16 %v325
      %v1586 = vpack.c.b16 %v1585, %v1584
      %1587 = vrot.lane.b32.xlu0 %v1065, 120
      %v1588 = vpop.permute.xlu0 %1587
      %1589 = vrot.lane.b32.xlu0 %v1066, 120
      %v1590 = vpop.permute.xlu0 %1589
      %1591 = vrot.lane.b32.xlu0 %v1067, 120
      %v1592 = vpop.permute.xlu0 %1591
      %1593 = vrot.lane.b32.xlu0 %v1068, 120
      %v1594 = vpop.permute.xlu0 %1593
      %1595 = vrot.lane.b32.xlu0 %v1069, 120
      %v1596 = vpop.permute.xlu0 %1595
      %1597 = vrot.lane.b32.xlu0 %v1070, 120
      %v1598 = vpop.permute.xlu0 %1597
      %1599 = vrot.lane.b32.xlu0 %v1071, 120
      %v1600 = vpop.permute.xlu0 %1599
      %1601 = vrot.lane.b32.xlu0 %v1072, 120
      %v1602 = vpop.permute.xlu0 %1601
      %1603 = vrot.lane.b32.xlu0 %v1073, 120
      %v1604 = vpop.permute.xlu0 %1603
      %1605 = vrot.lane.b32.xlu0 %v1074, 120
      %v1606 = vpop.permute.xlu0 %1605
      %1607 = vrot.lane.b32.xlu0 %v1075, 120
      %v1608 = vpop.permute.xlu0 %1607
      %1609 = vrot.lane.b32.xlu0 %v1076, 120
      %v1610 = vpop.permute.xlu0 %1609
      %1611 = vrot.lane.b32.xlu0 %v1077, 120
      %v1612 = vpop.permute.xlu0 %1611
      %1613 = vrot.lane.b32.xlu0 %v1078, 120
      %v1614 = vpop.permute.xlu0 %1613
      %1615 = vrot.lane.b32.xlu0 %v1467, 120
      %v1616 = vpop.permute.xlu0 %1615
      %1617 = vrot.lane.b32.xlu0 %v1586, 120
      %v1618 = vpop.permute.xlu0 %1617
      %vm1619 = vcmask 64512
      %v1621 = vsel %vm1619, %v391, %v649
      %v1623 = vsel %vm1619, %v392, %v651
      %v1625 = vsel %vm1619, %v393, %v653
      %v1627 = vsel %vm1619, %v394, %v655
      %v1629 = vsel %vm1619, %v395, %v657
      %v1631 = vsel %vm1619, %v396, %v659
      %v1633 = vsel %vm1619, %v397, %v661
      %v1635 = vsel %vm1619, %v398, %v663
      %v1637 = vsel %vm1619, %v399, %v665
      %v1639 = vsel %vm1619, %v400, %v667
      %v1641 = vsel %vm1619, %v401, %v669
      %v1643 = vsel %vm1619, %v402, %v671
      %v1645 = vsel %vm1619, %v403, %v673
      %v1647 = vsel %vm1619, %v404, %v675
      %v1649 = vsel %vm1619, %v405, %v677
      %v1651 = vsel %vm1619, %v406, %v679
      %vm1652 = vcmask 130048
      %v1654 = vsel %vm1652, %v1621, %v730
      %v1656 = vsel %vm1652, %v1623, %v732
      %v1658 = vsel %vm1652, %v1625, %v734
      %v1660 = vsel %vm1652, %v1627, %v736
      %v1662 = vsel %vm1652, %v1629, %v738
      %v1664 = vsel %vm1652, %v1631, %v740
      %v1666 = vsel %vm1652, %v1633, %v742
      %v1668 = vsel %vm1652, %v1635, %v744
      %v1670 = vsel %vm1652, %v1637, %v746
      %v1672 = vsel %vm1652, %v1639, %v748
      %v1674 = vsel %vm1652, %v1641, %v750
      %v1676 = vsel %vm1652, %v1643, %v752
      %v1678 = vsel %vm1652, %v1645, %v754
      %v1680 = vsel %vm1652, %v1647, %v756
      %v1682 = vsel %vm1652, %v1649, %v758
      %v1684 = vsel %vm1652, %v1651, %v760
      %vm1685 = vcmask 195584
      %v1687 = vsel %vm1685, %v1654, %v767
      %v1689 = vsel %vm1685, %v1656, %v769
      %v1691 = vsel %vm1685, %v1658, %v771
      %v1693 = vsel %vm1685, %v1660, %v773
      %v1695 = vsel %vm1685, %v1662, %v775
      %v1697 = vsel %vm1685, %v1664, %v777
      %v1699 = vsel %vm1685, %v1666, %v779
      %v1701 = vsel %vm1685, %v1668, %v781
      %v1703 = vsel %vm1685, %v1670, %v783
      %v1705 = vsel %vm1685, %v1672, %v785
      %v1707 = vsel %vm1685, %v1674, %v787
      %v1709 = vsel %vm1685, %v1676, %v789
      %v1711 = vsel %vm1685, %v1678, %v791
      %v1713 = vsel %vm1685, %v1680, %v793
      %v1715 = vsel %vm1685, %v1682, %v795
      %v1717 = vsel %vm1685, %v1684, %v797
      %vm1718 = vcmask 261120
      %v1720 = vsel %vm1718, %v1687, %v814
      %v1722 = vsel %vm1718, %v1689, %v816
      %v1724 = vsel %vm1718, %v1691, %v818
      %v1726 = vsel %vm1718, %v1693, %v820
      %v1728 = vsel %vm1718, %v1695, %v822
      %v1730 = vsel %vm1718, %v1697, %v824
      %v1732 = vsel %vm1718, %v1699, %v826
      %v1734 = vsel %vm1718, %v1701, %v828
      %v1736 = vsel %vm1718, %v1703, %v830
      %v1738 = vsel %vm1718, %v1705, %v832
      %v1740 = vsel %vm1718, %v1707, %v834
      %v1742 = vsel %vm1718, %v1709, %v836
      %v1744 = vsel %vm1718, %v1711, %v838
      %v1746 = vsel %vm1718, %v1713, %v840
      %v1748 = vsel %vm1718, %v1715, %v842
      %v1750 = vsel %vm1718, %v1717, %v844
      %vm1751 = vcmask 326656
      %v1753 = vsel %vm1751, %v1720, %v849
      %v1755 = vsel %vm1751, %v1722, %v851
      %v1757 = vsel %vm1751, %v1724, %v853
      %v1759 = vsel %vm1751, %v1726, %v855
      %v1761 = vsel %vm1751, %v1728, %v857
      %v1763 = vsel %vm1751, %v1730, %v859
      %v1765 = vsel %vm1751, %v1732, %v861
      %v1767 = vsel %vm1751, %v1734, %v863
      %v1769 = vsel %vm1751, %v1736, %v865
      %v1771 = vsel %vm1751, %v1738, %v867
      %v1773 = vsel %vm1751, %v1740, %v869
      %v1775 = vsel %vm1751, %v1742, %v871
      %v1777 = vsel %vm1751, %v1744, %v873
      %v1779 = vsel %vm1751, %v1746, %v875
      %v1781 = vsel %vm1751, %v1748, %v877
      %v1783 = vsel %vm1751, %v1750, %v879
      %vm1784 = vcmask 392192
      %v1786 = vsel %vm1784, %v1753, %v886
      %v1788 = vsel %vm1784, %v1755, %v888
      %v1790 = vsel %vm1784, %v1757, %v890
      %v1792 = vsel %vm1784, %v1759, %v892
      %v1794 = vsel %vm1784, %v1761, %v894
      %v1796 = vsel %vm1784, %v1763, %v896
      %v1798 = vsel %vm1784, %v1765, %v898
      %v1800 = vsel %vm1784, %v1767, %v900
      %v1802 = vsel %vm1784, %v1769, %v902
      %v1804 = vsel %vm1784, %v1771, %v904
      %v1806 = vsel %vm1784, %v1773, %v906
      %v1808 = vsel %vm1784, %v1775, %v908
      %v1810 = vsel %vm1784, %v1777, %v910
      %v1812 = vsel %vm1784, %v1779, %v912
      %v1814 = vsel %vm1784, %v1781, %v914
      %v1816 = vsel %vm1784, %v1783, %v916
      %vm1817 = vcmask 457728
      %v1819 = vsel %vm1817, %v1786, %v933
      %v1821 = vsel %vm1817, %v1788, %v935
      %v1823 = vsel %vm1817, %v1790, %v937
      %v1825 = vsel %vm1817, %v1792, %v939
      %v1827 = vsel %vm1817, %v1794, %v941
      %v1829 = vsel %vm1817, %v1796, %v943
      %v1831 = vsel %vm1817, %v1798, %v945
      %v1833 = vsel %vm1817, %v1800, %v947
      %v1835 = vsel %vm1817, %v1802, %v949
      %v1837 = vsel %vm1817, %v1804, %v951
      %v1839 = vsel %vm1817, %v1806, %v953
      %v1841 = vsel %vm1817, %v1808, %v955
      %v1843 = vsel %vm1817, %v1810, %v957
      %v1845 = vsel %vm1817, %v1812, %v959
      %v1847 = vsel %vm1817, %v1814, %v961
      %v1849 = vsel %vm1817, %v1816, %v963
      %vm1850 = vcmask 523264
      %v1852 = vsel %vm1850, %v1819, %v968
      %v1854 = vsel %vm1850, %v1821, %v970
      %v1856 = vsel %vm1850, %v1823, %v972
      %v1858 = vsel %vm1850, %v1825, %v974
      %v1860 = vsel %vm1850, %v1827, %v976
      %v1862 = vsel %vm1850, %v1829, %v978
      %v1864 = vsel %vm1850, %v1831, %v980
      %v1866 = vsel %vm1850, %v1833, %v982
      %v1868 = vsel %vm1850, %v1835, %v984
      %v1870 = vsel %vm1850, %v1837, %v986
      %v1872 = vsel %vm1850, %v1839, %v988
      %v1874 = vsel %vm1850, %v1841, %v990
      %v1876 = vsel %vm1850, %v1843, %v992
      %v1878 = vsel %vm1850, %v1845, %v994
      %v1880 = vsel %vm1850, %v1847, %v996
      %v1882 = vsel %vm1850, %v1849, %v998
      %vm1883 = vcmask 588800
      %v1885 = vsel %vm1883, %v1852, %v1080
      %v1887 = vsel %vm1883, %v1854, %v1082
      %v1889 = vsel %vm1883, %v1856, %v1084
      %v1891 = vsel %vm1883, %v1858, %v1086
      %v1893 = vsel %vm1883, %v1860, %v1088
      %v1895 = vsel %vm1883, %v1862, %v1090
      %v1897 = vsel %vm1883, %v1864, %v1092
      %v1899 = vsel %vm1883, %v1866, %v1094
      %v1901 = vsel %vm1883, %v1868, %v1096
      %v1903 = vsel %vm1883, %v1870, %v1098
      %v1905 = vsel %vm1883, %v1872, %v1100
      %v1907 = vsel %vm1883, %v1874, %v1102
      %v1909 = vsel %vm1883, %v1876, %v1104
      %v1911 = vsel %vm1883, %v1878, %v1106
      %v1913 = vsel %vm1883, %v1880, %v1108
      %v1915 = vsel %vm1883, %v1882, %v1110
      %vm1916 = vcmask 654336
      %v1918 = vsel %vm1916, %v1885, %v1352
      %v1920 = vsel %vm1916, %v1887, %v1354
      %v1922 = vsel %vm1916, %v1889, %v1356
      %v1924 = vsel %vm1916, %v1891, %v1358
      %v1926 = vsel %vm1916, %v1893, %v1360
      %v1928 = vsel %vm1916, %v1895, %v1362
      %v1930 = vsel %vm1916, %v1897, %v1364
      %v1932 = vsel %vm1916, %v1899, %v1366
      %v1934 = vsel %vm1916, %v1901, %v1368
      %v1936 = vsel %vm1916, %v1903, %v1370
      %v1938 = vsel %vm1916, %v1905, %v1372
      %v1940 = vsel %vm1916, %v1907, %v1374
      %v1942 = vsel %vm1916, %v1909, %v1376
      %v1944 = vsel %vm1916, %v1911, %v1378
      %v1946 = vsel %vm1916, %v1913, %v1380
      %v1948 = vsel %vm1916, %v1915, %v1382
      %vm1949 = vcmask 719872
      %v1951 = vsel %vm1949, %v1918, %v1432
      %v1953 = vsel %vm1949, %v1920, %v1434
      %v1955 = vsel %vm1949, %v1922, %v1436
      %v1957 = vsel %vm1949, %v1924, %v1438
      %v1959 = vsel %vm1949, %v1926, %v1440
      %v1961 = vsel %vm1949, %v1928, %v1442
      %v1963 = vsel %vm1949, %v1930, %v1444
      %v1965 = vsel %vm1949, %v1932, %v1446
      %v1967 = vsel %vm1949, %v1934, %v1448
      %v1969 = vsel %vm1949, %v1936, %v1450
      %v1971 = vsel %vm1949, %v1938, %v1452
      %v1973 = vsel %vm1949, %v1940, %v1454
      %v1975 = vsel %vm1949, %v1942, %v1456
      %v1977 = vsel %vm1949, %v1944, %v1458
      %v1979 = vsel %vm1949, %v1946, %v1460
      %v1981 = vsel %vm1949, %v1948, %v1462
      %vm1982 = vcmask 785408
      %v1984 = vsel %vm1982, %v1951, %v1469
      %v1986 = vsel %vm1982, %v1953, %v1471
      %v1988 = vsel %vm1982, %v1955, %v1473
      %v1990 = vsel %vm1982, %v1957, %v1475
      %v1992 = vsel %vm1982, %v1959, %v1477
      %v1994 = vsel %vm1982, %v1961, %v1479
      %v1996 = vsel %vm1982, %v1963, %v1481
      %v1998 = vsel %vm1982, %v1965, %v1483
      %v2000 = vsel %vm1982, %v1967, %v1485
      %v2002 = vsel %vm1982, %v1969, %v1487
      %v2004 = vsel %vm1982, %v1971, %v1489
      %v2006 = vsel %vm1982, %v1973, %v1491
      %v2008 = vsel %vm1982, %v1975, %v1493
      %v2010 = vsel %vm1982, %v1977, %v1495
      %v2012 = vsel %vm1982, %v1979, %v1497
      %v2014 = vsel %vm1982, %v1981, %v1499
      %vm2015 = vcmask 850944
      %v2017 = vsel %vm2015, %v1984, %v1516
      %v2019 = vsel %vm2015, %v1986, %v1518
      %v2021 = vsel %vm2015, %v1988, %v1520
      %v2023 = vsel %vm2015, %v1990, %v1522
      %v2025 = vsel %vm2015, %v1992, %v1524
      %v2027 = vsel %vm2015, %v1994, %v1526
      %v2029 = vsel %vm2015, %v1996, %v1528
      %v2031 = vsel %vm2015, %v1998, %v1530
      %v2033 = vsel %vm2015, %v2000, %v1532
      %v2035 = vsel %vm2015, %v2002, %v1534
      %v2037 = vsel %vm2015, %v2004, %v1536
      %v2039 = vsel %vm2015, %v2006, %v1538
      %v2041 = vsel %vm2015, %v2008, %v1540
      %v2043 = vsel %vm2015, %v2010, %v1542
      %v2045 = vsel %vm2015, %v2012, %v1544
      %v2047 = vsel %vm2015, %v2014, %v1546
      %vm2048 = vcmask 916480
      %v2050 = vsel %vm2048, %v2017, %v1551
      %v2052 = vsel %vm2048, %v2019, %v1553
      %v2054 = vsel %vm2048, %v2021, %v1555
      %v2056 = vsel %vm2048, %v2023, %v1557
      %v2058 = vsel %vm2048, %v2025, %v1559
      %v2060 = vsel %vm2048, %v2027, %v1561
      %v2062 = vsel %vm2048, %v2029, %v1563
      %v2064 = vsel %vm2048, %v2031, %v1565
      %v2066 = vsel %vm2048, %v2033, %v1567
      %v2068 = vsel %vm2048, %v2035, %v1569
      %v2070 = vsel %vm2048, %v2037, %v1571
      %v2072 = vsel %vm2048, %v2039, %v1573
      %v2074 = vsel %vm2048, %v2041, %v1575
      %v2076 = vsel %vm2048, %v2043, %v1577
      %v2078 = vsel %vm2048, %v2045, %v1579
      %v2080 = vsel %vm2048, %v2047, %v1581
      %vm2081 = vcmask 982016
      %v2083 = vsel %vm2081, %v2050, %v1588
      %v2086 = vsel %vm2081, %v2052, %v1590
      %v2089 = vsel %vm2081, %v2054, %v1592
      %v2092 = vsel %vm2081, %v2056, %v1594
      %v2095 = vsel %vm2081, %v2058, %v1596
      %v2098 = vsel %vm2081, %v2060, %v1598
      %v2101 = vsel %vm2081, %v2062, %v1600
      %v2104 = vsel %vm2081, %v2064, %v1602
      %v2107 = vsel %vm2081, %v2066, %v1604
      %v2110 = vsel %vm2081, %v2068, %v1606
      %v2113 = vsel %vm2081, %v2070, %v1608
      %v2116 = vsel %vm2081, %v2072, %v1610
      %v2119 = vsel %vm2081, %v2074, %v1612
      %v2122 = vsel %vm2081, %v2076, %v1614
      %v2125 = vsel %vm2081, %v2078, %v1616
      %v2128 = vsel %vm2081, %v2080, %v1618
      %v2131 = vunpack.c.l.b16 %v326
      %v2132 = vpack.c.b16 %v2131, %v2131
      %v2133 = vshrl.u32 %v1145, 16
      %v2135 = vshrl.u32 %v1146, 16
      %v2137 = vshrl.u32 %v1147, 16
      %v2139 = vshrl.u32 %v1148, 16
      %v2141 = vshrl.u32 %v1149, 16
      %v2143 = vshrl.u32 %v1150, 16
      %v2145 = vshrl.u32 %v1151, 16
      %v2147 = vshrl.u32 %v1152, 16
      %v2149 = vshrl.u32 %v1153, 16
      %v2151 = vshrl.u32 %v1154, 16
      %v2153 = vshrl.u32 %v1155, 16
      %v2155 = vshrl.u32 %v1156, 16
      %v2157 = vshrl.u32 %v1157, 16
      %v2159 = vshrl.u32 %v1158, 16
      %v2161 = vshrl.u32 %v1502, 16
      %v2164 = vshrl.u32 %v1586, 16
      %v2166 = vshll.u32 %v1586, 16
      %v2168 = vrot.slane %v2166, 1
      %v2169 = vor.u32 %v2164, %v2168
      %v2171 = vshll.u32 %v2132, 16
      %v2173 = vrot.slane %v2171, 1
      %v2174 = vsel %vm455, %v2169, %v2173
      %v2175 = vshrl.u32 %v2132, 16
      %2177 = vrot.lane.b32.xlu0 %v1194, 8
      %v2178 = vpop.permute.xlu0 %2177
      %2179 = vrot.lane.b32.xlu0 %v2133, 8
      %v2180 = vpop.permute.xlu0 %2179
      %2181 = vrot.lane.b32.xlu0 %v1206, 8
      %v2182 = vpop.permute.xlu0 %2181
      %2183 = vrot.lane.b32.xlu0 %v2135, 8
      %v2184 = vpop.permute.xlu0 %2183
      %2185 = vrot.lane.b32.xlu0 %v1218, 8
      %v2186 = vpop.permute.xlu0 %2185
      %2187 = vrot.lane.b32.xlu0 %v2137, 8
      %v2188 = vpop.permute.xlu0 %2187
      %2189 = vrot.lane.b32.xlu0 %v1230, 8
      %v2190 = vpop.permute.xlu0 %2189
      %2191 = vrot.lane.b32.xlu0 %v2139, 8
      %v2192 = vpop.permute.xlu0 %2191
      %2193 = vrot.lane.b32.xlu0 %v1242, 8
      %v2194 = vpop.permute.xlu0 %2193
      %2195 = vrot.lane.b32.xlu0 %v2141, 8
      %v2196 = vpop.permute.xlu0 %2195
      %2197 = vrot.lane.b32.xlu0 %v1254, 8
      %v2198 = vpop.permute.xlu0 %2197
      %2199 = vrot.lane.b32.xlu0 %v2143, 8
      %v2200 = vpop.permute.xlu0 %2199
      %2201 = vrot.lane.b32.xlu0 %v1266, 8
      %v2202 = vpop.permute.xlu0 %2201
      %2203 = vrot.lane.b32.xlu0 %v2145, 8
      %v2204 = vpop.permute.xlu0 %2203
      %2205 = vrot.lane.b32.xlu0 %v1278, 8
      %v2206 = vpop.permute.xlu0 %2205
      %2207 = vrot.lane.b32.xlu0 %v2147, 8
      %v2208 = vpop.permute.xlu0 %2207
      %2209 = vrot.lane.b32.xlu0 %v1290, 8
      %v2210 = vpop.permute.xlu0 %2209
      %2211 = vrot.lane.b32.xlu0 %v2149, 8
      %v2212 = vpop.permute.xlu0 %2211
      %2213 = vrot.lane.b32.xlu0 %v1302, 8
      %v2214 = vpop.permute.xlu0 %2213
      %2215 = vrot.lane.b32.xlu0 %v2151, 8
      %v2216 = vpop.permute.xlu0 %2215
      %2217 = vrot.lane.b32.xlu0 %v1314, 8
      %v2218 = vpop.permute.xlu0 %2217
      %2219 = vrot.lane.b32.xlu0 %v2153, 8
      %v2220 = vpop.permute.xlu0 %2219
      %2221 = vrot.lane.b32.xlu0 %v1326, 8
      %v2222 = vpop.permute.xlu0 %2221
      %2223 = vrot.lane.b32.xlu0 %v2155, 8
      %v2224 = vpop.permute.xlu0 %2223
      %2225 = vrot.lane.b32.xlu0 %v1338, 8
      %v2226 = vpop.permute.xlu0 %2225
      %2227 = vrot.lane.b32.xlu0 %v2157, 8
      %v2228 = vpop.permute.xlu0 %2227
      %2229 = vrot.lane.b32.xlu0 %v1350, 8
      %v2230 = vpop.permute.xlu0 %2229
      %2231 = vrot.lane.b32.xlu0 %v2159, 8
      %v2232 = vpop.permute.xlu0 %2231
      %2233 = vrot.lane.b32.xlu0 %v1514, 8
      %v2234 = vpop.permute.xlu0 %2233
      %2235 = vrot.lane.b32.xlu0 %v2161, 8
      %v2236 = vpop.permute.xlu0 %2235
      %2237 = vrot.lane.b32.xlu0 %v2174, 8
      %v2238 = vpop.permute.xlu0 %2237
      %2239 = vrot.lane.b32.xlu0 %v2175, 8
      %v2240 = vpop.permute.xlu0 %2239
      %v2242 = vsel %vm1619, %v1065, %v2178
      %v2244 = vsel %vm1619, %v1145, %v2180
      %v2246 = vsel %vm1619, %v1066, %v2182
      %v2248 = vsel %vm1619, %v1146, %v2184
      %v2250 = vsel %vm1619, %v1067, %v2186
      %v2252 = vsel %vm1619, %v1147, %v2188
      %v2254 = vsel %vm1619, %v1068, %v2190
      %v2256 = vsel %vm1619, %v1148, %v2192
      %v2258 = vsel %vm1619, %v1069, %v2194
      %v2260 = vsel %vm1619, %v1149, %v2196
      %v2262 = vsel %vm1619, %v1070, %v2198
      %v2264 = vsel %vm1619, %v1150, %v2200
      %v2266 = vsel %vm1619, %v1071, %v2202
      %v2268 = vsel %vm1619, %v1151, %v2204
      %v2270 = vsel %vm1619, %v1072, %v2206
      %v2272 = vsel %vm1619, %v1152, %v2208
      %v2274 = vsel %vm1619, %v1073, %v2210
      %v2276 = vsel %vm1619, %v1153, %v2212
      %v2278 = vsel %vm1619, %v1074, %v2214
      %v2280 = vsel %vm1619, %v1154, %v2216
      %v2282 = vsel %vm1619, %v1075, %v2218
      %v2284 = vsel %vm1619, %v1155, %v2220
      %v2286 = vsel %vm1619, %v1076, %v2222
      %v2288 = vsel %vm1619, %v1156, %v2224
      %v2290 = vsel %vm1619, %v1077, %v2226
      %v2292 = vsel %vm1619, %v1157, %v2228
      %v2294 = vsel %vm1619, %v1078, %v2230
      %v2296 = vsel %vm1619, %v1158, %v2232
      %v2298 = vsel %vm1619, %v1467, %v2234
      %v2300 = vsel %vm1619, %v1502, %v2236
      %v2302 = vsel %vm1619, %v1586, %v2238
      %v2304 = vsel %vm1619, %v2132, %v2240
      %v2305 = vshrl.u32 %v2242, 16
      %v2307 = vshll.u32 %v2242, 16
      %v2309 = vrot.slane %v2307, 1
      %v2310 = vor.u32 %v2305, %v2309
      %v2311 = vshll.u32 %v2244, 16
      %v2313 = vrot.slane %v2311, 1
      %v2314 = vsel %vm455, %v2310, %v2313
      %v2315 = vshrl.u32 %v2246, 16
      %v2317 = vshll.u32 %v2246, 16
      %v2319 = vrot.slane %v2317, 1
      %v2320 = vor.u32 %v2315, %v2319
      %v2321 = vshll.u32 %v2248, 16
      %v2323 = vrot.slane %v2321, 1
      %v2324 = vsel %vm455, %v2320, %v2323
      %v2325 = vshrl.u32 %v2250, 16
      %v2327 = vshll.u32 %v2250, 16
      %v2329 = vrot.slane %v2327, 1
      %v2330 = vor.u32 %v2325, %v2329
      %v2331 = vshll.u32 %v2252, 16
      %v2333 = vrot.slane %v2331, 1
      %v2334 = vsel %vm455, %v2330, %v2333
      %v2335 = vshrl.u32 %v2254, 16
      %v2337 = vshll.u32 %v2254, 16
      %v2339 = vrot.slane %v2337, 1
      %v2340 = vor.u32 %v2335, %v2339
      %v2341 = vshll.u32 %v2256, 16
      %v2343 = vrot.slane %v2341, 1
      %v2344 = vsel %vm455, %v2340, %v2343
      %v2345 = vshrl.u32 %v2258, 16
      %v2347 = vshll.u32 %v2258, 16
      %v2349 = vrot.slane %v2347, 1
      %v2350 = vor.u32 %v2345, %v2349
      %v2351 = vshll.u32 %v2260, 16
      %v2353 = vrot.slane %v2351, 1
      %v2354 = vsel %vm455, %v2350, %v2353
      %v2355 = vshrl.u32 %v2262, 16
      %v2357 = vshll.u32 %v2262, 16
      %v2359 = vrot.slane %v2357, 1
      %v2360 = vor.u32 %v2355, %v2359
      %v2361 = vshll.u32 %v2264, 16
      %v2363 = vrot.slane %v2361, 1
      %v2364 = vsel %vm455, %v2360, %v2363
      %v2365 = vshrl.u32 %v2266, 16
      %v2367 = vshll.u32 %v2266, 16
      %v2369 = vrot.slane %v2367, 1
      %v2370 = vor.u32 %v2365, %v2369
      %v2371 = vshll.u32 %v2268, 16
      %v2373 = vrot.slane %v2371, 1
      %v2374 = vsel %vm455, %v2370, %v2373
      %v2375 = vshrl.u32 %v2270, 16
      %v2377 = vshll.u32 %v2270, 16
      %v2379 = vrot.slane %v2377, 1
      %v2380 = vor.u32 %v2375, %v2379
      %v2381 = vshll.u32 %v2272, 16
      %v2383 = vrot.slane %v2381, 1
      %v2384 = vsel %vm455, %v2380, %v2383
      %v2385 = vshrl.u32 %v2274, 16
      %v2387 = vshll.u32 %v2274, 16
      %v2389 = vrot.slane %v2387, 1
      %v2390 = vor.u32 %v2385, %v2389
      %v2391 = vshll.u32 %v2276, 16
      %v2393 = vrot.slane %v2391, 1
      %v2394 = vsel %vm455, %v2390, %v2393
      %v2395 = vshrl.u32 %v2278, 16
      %v2397 = vshll.u32 %v2278, 16
      %v2399 = vrot.slane %v2397, 1
      %v2400 = vor.u32 %v2395, %v2399
      %v2401 = vshll.u32 %v2280, 16
      %v2403 = vrot.slane %v2401, 1
      %v2404 = vsel %vm455, %v2400, %v2403
      %v2405 = vshrl.u32 %v2282, 16
      %v2407 = vshll.u32 %v2282, 16
      %v2409 = vrot.slane %v2407, 1
      %v2410 = vor.u32 %v2405, %v2409
      %v2411 = vshll.u32 %v2284, 16
      %v2413 = vrot.slane %v2411, 1
      %v2414 = vsel %vm455, %v2410, %v2413
      %v2415 = vshrl.u32 %v2286, 16
      %v2417 = vshll.u32 %v2286, 16
      %v2419 = vrot.slane %v2417, 1
      %v2420 = vor.u32 %v2415, %v2419
      %v2421 = vshll.u32 %v2288, 16
      %v2423 = vrot.slane %v2421, 1
      %v2424 = vsel %vm455, %v2420, %v2423
      %v2425 = vshrl.u32 %v2290, 16
      %v2427 = vshll.u32 %v2290, 16
      %v2429 = vrot.slane %v2427, 1
      %v2430 = vor.u32 %v2425, %v2429
      %v2431 = vshll.u32 %v2292, 16
      %v2433 = vrot.slane %v2431, 1
      %v2434 = vsel %vm455, %v2430, %v2433
      %v2435 = vshrl.u32 %v2294, 16
      %v2437 = vshll.u32 %v2294, 16
      %v2439 = vrot.slane %v2437, 1
      %v2440 = vor.u32 %v2435, %v2439
      %v2441 = vshll.u32 %v2296, 16
      %v2443 = vrot.slane %v2441, 1
      %v2444 = vsel %vm455, %v2440, %v2443
      %v2445 = vshrl.u32 %v2298, 16
      %v2447 = vshll.u32 %v2298, 16
      %v2449 = vrot.slane %v2447, 1
      %v2450 = vor.u32 %v2445, %v2449
      %v2451 = vshll.u32 %v2300, 16
      %v2453 = vrot.slane %v2451, 1
      %v2454 = vsel %vm455, %v2450, %v2453
      %v2455 = vshrl.u32 %v2302, 16
      %v2457 = vshll.u32 %v2302, 16
      %v2459 = vrot.slane %v2457, 1
      %v2460 = vor.u32 %v2455, %v2459
      %v2461 = vshll.u32 %v2304, 16
      %v2463 = vrot.slane %v2461, 1
      %v2464 = vsel %vm455, %v2460, %v2463
      %v2465 = vld [vmem:[%s2] sm:$0xf]
      %v2466 = vld [vmem:[%s2 + $0x4] sm:$0xf]
      %v2467 = vld [vmem:[%s2 + $0x8] sm:$0xf]
      %v2468 = vld [vmem:[%s2 + $0xc] sm:$0xf]
      %v2469 = vld [vmem:[%s2 + $0x10] sm:$0xf]
      %v2470 = vld [vmem:[%s2 + $0x14] sm:$0xf]
      %v2471 = vld [vmem:[%s2 + $0x18] sm:$0xf]
      %v2472 = vld [vmem:[%s2 + $0x1c] sm:$0xf]
      %v2473 = vld [vmem:[%s2 + $0x20] sm:$0xf]
      %v2474 = vld [vmem:[%s2 + $0x24] sm:$0xf]
      %v2475 = vld [vmem:[%s2 + $0x28] sm:$0xf]
      %v2476 = vld [vmem:[%s2 + $0x2c] sm:$0xf]
      %v2477 = vld [vmem:[%s2 + $0x30] sm:$0xf]
      %v2478 = vld [vmem:[%s2 + $0x34] sm:$0xf]
      %v2479 = vld [vmem:[%s2 + $0x38] sm:$0xf]
      %v2480 = vld [vmem:[%s2 + $0x3c] sm:$0xf]
      %v2481 = vld [vmem:[%s2 + $0x40] sm:$0xf]
      %v2482 = vld [vmem:[%s2 + $0x44] sm:$0xf]
      %v2483 = vld [vmem:[%s3] sm:$0x1]
      %v2485 = vlaneseq
      %v2486 = vshrl.u32 %v2485, 7
      %v2487 = vsub.s32 0, %v2486
      %v2488 = vrot.slane %v2483, %v2487
      %v2508 = vunpack.c.l.b16 %v2465
      %v2509 = vunpack.c.l.b16 %v2466
      %v2510 = vunpack.c.l.b16 %v2467
      %v2511 = vunpack.c.l.b16 %v2468
      %v2512 = vunpack.c.l.b16 %v2469
      %v2513 = vunpack.c.l.b16 %v2470
      %v2514 = vunpack.c.l.b16 %v2471
      %v2515 = vunpack.c.l.b16 %v2472
      %v2516 = vunpack.c.l.b16 %v2473
      %v2517 = vunpack.c.l.b16 %v2474
      %v2518 = vunpack.c.l.b16 %v2475
      %v2519 = vunpack.c.l.b16 %v2476
      %v2520 = vunpack.c.l.b16 %v2477
      %v2521 = vunpack.c.l.b16 %v2478
      %v2522 = vunpack.c.l.b16 %v2479
      %v2523 = vunpack.c.l.b16 %v2480
      %v2524 = vunpack.c.l.b16 %v2481
      %v2525 = vunpack.c.l.b16 %v2482
      %v2526 = vpack.c.b16 %v2509, %v2508
      %v2527 = vpack.c.b16 %v2511, %v2510
      %v2528 = vpack.c.b16 %v2513, %v2512
      %v2529 = vpack.c.b16 %v2515, %v2514
      %v2530 = vpack.c.b16 %v2517, %v2516
      %v2531 = vpack.c.b16 %v2519, %v2518
      %v2532 = vpack.c.b16 %v2521, %v2520
      %v2533 = vpack.c.b16 %v2523, %v2522
      %v2534 = vpack.c.b16 %v2525, %v2524
      %v2545 = vsel %vm1652, %v2314, 0
      %v2548 = vsel %vm1652, %v2324, 0
      %v2551 = vsel %vm1652, %v2334, 0
      %v2554 = vsel %vm1652, %v2344, 0
      %v2557 = vsel %vm1652, %v2354, 0
      %v2560 = vsel %vm1652, %v2364, 0
      %v2563 = vsel %vm1652, %v2374, 0
      %v2566 = vsel %vm1652, %v2384, 0
      %v2569 = vsel %vm1652, %v2394, 0
      %v2572 = vsel %vm1652, %v2404, 0
      %v2575 = vsel %vm1652, %v2414, 0
      %v2578 = vsel %vm1652, %v2424, 0
      %v2581 = vsel %vm1652, %v2434, 0
      %v2584 = vsel %vm1652, %v2444, 0
      %v2587 = vsel %vm1652, %v2454, 0
      %v2590 = vsel %vm1652, %v2464, 0
      %2592 = vmatprep.subr.bf16.mxu0 0
      %2593 = vmatpush1.bf16.msra.mxu0 %v2533
      %2594 = vmatprep.subr.bf16.mxu0 0
      %2595 = vmatpush1.bf16.msra.mxu0 %v2532
      %2596 = vmatprep.subr.bf16.mxu0 0
      %2597 = vmatpush1.bf16.msra.mxu0 %v2531
      %2598 = vmatprep.subr.bf16.mxu0 0
      %2599 = vmatpush1.bf16.msra.mxu0 %v2530
      %2600 = vmatprep.subr.bf16.mxu0 0
      %2601 = vmatpush1.bf16.msra.mxu0 %v2529
      %2602 = vmatprep.subr.bf16.mxu0 0
      %2603 = vmatpush1.bf16.msra.mxu0 %v2528
      %2604 = vmatprep.subr.bf16.mxu0 0
      %2605 = vmatpush1.bf16.msra.mxu0 %v2527
      %2606 = vmatprep.subr.bf16.mxu0 0
      %2607 = vmatpush1.bf16.msra.mxu0 %v2526
      %2608 = vmatprep.subr.bf16.mxu0 0
      %2609 = vmatpush2.bf16.msra.mxu0 0
      %2610 = vmatprep.subr.bf16.mxu0 0
      %2611 = vmatpush2.bf16.msra.mxu0 0
      %2612 = vmatprep.subr.bf16.mxu0 0
      %2613 = vmatpush2.bf16.msra.mxu0 0
      %2614 = vmatprep.subr.bf16.mxu0 0
      %2615 = vmatpush2.bf16.msra.mxu0 0
      %2616 = vmatprep.subr.bf16.mxu0 0
      %2617 = vmatpush2.bf16.msra.mxu0 0
      %2618 = vmatprep.subr.bf16.mxu0 0
      %2619 = vmatpush2.bf16.msra.mxu0 0
      %2620 = vmatprep.subr.bf16.mxu0 0
      %2621 = vmatpush2.bf16.msra.mxu0 0
      %2622 = vmatprep.subr.bf16.mxu0 0
      %2623 = vmatpush2.bf16.msra.mxu0 %v2534
      %2624 = vmatprep.mubr.bf16.mxu0 %v2545
      %2625 = vmatmul.mubr.bf16.gmra.mxu0 %v2083
      %v2626 = vpop.f32.mrf.mxu0
      %v2627 = vadd.f32 %v2488, %v2626
      %v2628 = vpop.f32.mrf.mxu0
      %v2629 = vpop.f32.mrf.mxu0
      %v2630 = vadd.f32 %v2488, %v2629
      %v2631 = vpop.f32.mrf.mxu0
      %2632 = vmatprep.mubr.bf16.mxu0 %v2548
      %2633 = vmatmul.mubr.bf16.gmra.mxu0 %v2086
      %v2634 = vpop.f32.mrf.mxu0
      %v2635 = vadd.f32 %v2488, %v2634
      %v2636 = vpop.f32.mrf.mxu0
      %v2637 = vpop.f32.mrf.mxu0
      %v2638 = vadd.f32 %v2488, %v2637
      %v2639 = vpop.f32.mrf.mxu0
      %2640 = vmatprep.mubr.bf16.mxu0 %v2551
      %2641 = vmatmul.mubr.bf16.gmra.mxu0 %v2089
      %v2642 = vpop.f32.mrf.mxu0
      %v2643 = vadd.f32 %v2488, %v2642
      %v2644 = vpop.f32.mrf.mxu0
      %v2645 = vpop.f32.mrf.mxu0
      %v2646 = vadd.f32 %v2488, %v2645
      %v2647 = vpop.f32.mrf.mxu0
      %2648 = vmatprep.mubr.bf16.mxu0 %v2554
      %2649 = vmatmul.mubr.bf16.gmra.mxu0 %v2092
      %v2650 = vpop.f32.mrf.mxu0
      %v2651 = vadd.f32 %v2488, %v2650
      %v2652 = vpop.f32.mrf.mxu0
      %v2653 = vpop.f32.mrf.mxu0
      %v2654 = vadd.f32 %v2488, %v2653
      %v2655 = vpop.f32.mrf.mxu0
      %2656 = vmatprep.mubr.bf16.mxu0 %v2557
      %2657 = vmatmul.mubr.bf16.gmra.mxu0 %v2095
      %v2658 = vpop.f32.mrf.mxu0
      %v2659 = vadd.f32 %v2488, %v2658
      %v2660 = vpop.f32.mrf.mxu0
      %v2661 = vpop.f32.mrf.mxu0
      %v2662 = vadd.f32 %v2488, %v2661
      %v2663 = vpop.f32.mrf.mxu0
      %2664 = vmatprep.mubr.bf16.mxu0 %v2560
      %2665 = vmatmul.mubr.bf16.gmra.mxu0 %v2098
      %v2666 = vpop.f32.mrf.mxu0
      %v2667 = vadd.f32 %v2488, %v2666
      %v2668 = vpop.f32.mrf.mxu0
      %v2669 = vpop.f32.mrf.mxu0
      %v2670 = vadd.f32 %v2488, %v2669
      %v2671 = vpop.f32.mrf.mxu0
      %2672 = vmatprep.mubr.bf16.mxu0 %v2563
      %2673 = vmatmul.mubr.bf16.gmra.mxu0 %v2101
      %v2674 = vpop.f32.mrf.mxu0
      %v2675 = vadd.f32 %v2488, %v2674
      %v2676 = vpop.f32.mrf.mxu0
      %v2677 = vpop.f32.mrf.mxu0
      %v2678 = vadd.f32 %v2488, %v2677
      %v2679 = vpop.f32.mrf.mxu0
      %2680 = vmatprep.mubr.bf16.mxu0 %v2566
      %2681 = vmatmul.mubr.bf16.gmra.mxu0 %v2104
      %v2682 = vpop.f32.mrf.mxu0
      %v2683 = vadd.f32 %v2488, %v2682
      %v2684 = vpop.f32.mrf.mxu0
      %v2685 = vpop.f32.mrf.mxu0
      %v2686 = vadd.f32 %v2488, %v2685
      %v2687 = vpop.f32.mrf.mxu0
      %2688 = vmatprep.mubr.bf16.mxu0 %v2569
      %2689 = vmatmul.mubr.bf16.gmra.mxu0 %v2107
      %v2690 = vpop.f32.mrf.mxu0
      %v2691 = vadd.f32 %v2488, %v2690
      %v2692 = vpop.f32.mrf.mxu0
      %v2693 = vpop.f32.mrf.mxu0
      %v2694 = vadd.f32 %v2488, %v2693
      %v2695 = vpop.f32.mrf.mxu0
      %2696 = vmatprep.mubr.bf16.mxu0 %v2572
      %2697 = vmatmul.mubr.bf16.gmra.mxu0 %v2110
      %v2698 = vpop.f32.mrf.mxu0
      %v2699 = vadd.f32 %v2488, %v2698
      %v2700 = vpop.f32.mrf.mxu0
      %v2701 = vpop.f32.mrf.mxu0
      %v2702 = vadd.f32 %v2488, %v2701
      %v2703 = vpop.f32.mrf.mxu0
      %2704 = vmatprep.mubr.bf16.mxu0 %v2575
      %2705 = vmatmul.mubr.bf16.gmra.mxu0 %v2113
      %v2706 = vpop.f32.mrf.mxu0
      %v2707 = vadd.f32 %v2488, %v2706
      %v2708 = vpop.f32.mrf.mxu0
      %v2709 = vpop.f32.mrf.mxu0
      %v2710 = vadd.f32 %v2488, %v2709
      %v2711 = vpop.f32.mrf.mxu0
      %2712 = vmatprep.mubr.bf16.mxu0 %v2578
      %2713 = vmatmul.mubr.bf16.gmra.mxu0 %v2116
      %v2714 = vpop.f32.mrf.mxu0
      %v2715 = vadd.f32 %v2488, %v2714
      %v2716 = vpop.f32.mrf.mxu0
      %v2717 = vpop.f32.mrf.mxu0
      %v2718 = vadd.f32 %v2488, %v2717
      %v2719 = vpop.f32.mrf.mxu0
      %2720 = vmatprep.mubr.bf16.mxu0 %v2581
      %2721 = vmatmul.mubr.bf16.gmra.mxu0 %v2119
      %v2722 = vpop.f32.mrf.mxu0
      %v2723 = vadd.f32 %v2488, %v2722
      %v2724 = vpop.f32.mrf.mxu0
      %v2725 = vpop.f32.mrf.mxu0
      %v2726 = vadd.f32 %v2488, %v2725
      %v2727 = vpop.f32.mrf.mxu0
      %2728 = vmatprep.mubr.bf16.mxu0 %v2584
      %2729 = vmatmul.mubr.bf16.gmra.mxu0 %v2122
      %v2730 = vpop.f32.mrf.mxu0
      %v2731 = vadd.f32 %v2488, %v2730
      %v2732 = vpop.f32.mrf.mxu0
      %v2733 = vpop.f32.mrf.mxu0
      %v2734 = vadd.f32 %v2488, %v2733
      %v2735 = vpop.f32.mrf.mxu0
      %2736 = vmatprep.mubr.bf16.mxu0 %v2587
      %2737 = vmatmul.mubr.bf16.gmra.mxu0 %v2125
      %v2738 = vpop.f32.mrf.mxu0
      %v2739 = vadd.f32 %v2488, %v2738
      %v2740 = vpop.f32.mrf.mxu0
      %v2741 = vpop.f32.mrf.mxu0
      %v2742 = vadd.f32 %v2488, %v2741
      %v2743 = vpop.f32.mrf.mxu0
      %2744 = vmatprep.mubr.bf16.mxu0 %v2590
      %2745 = vmatmul.mubr.bf16.gmra.mxu0 %v2128
      %v2746 = vpop.f32.mrf.mxu0
      %v2747 = vadd.f32 %v2488, %v2746
      %v2748 = vpop.f32.mrf.mxu0
      %v2749 = vpop.f32.mrf.mxu0
      %v2750 = vadd.f32 %v2488, %v2749
      %v2751 = vpop.f32.mrf.mxu0
      %2752 = vdwg.mxu0
      %v2753 = vmax.f32 %v2627, 0.0
      %v2754 = vmax.f32 %v2630, 0.0
      %v2755 = vmax.f32 %v2635, 0.0
      %v2756 = vmax.f32 %v2638, 0.0
      %v2757 = vmax.f32 %v2643, 0.0
      %v2758 = vmax.f32 %v2646, 0.0
      %v2759 = vmax.f32 %v2651, 0.0
      %v2760 = vmax.f32 %v2654, 0.0
      %v2761 = vmax.f32 %v2659, 0.0
      %v2762 = vmax.f32 %v2662, 0.0
      %v2763 = vmax.f32 %v2667, 0.0
      %v2764 = vmax.f32 %v2670, 0.0
      %v2765 = vmax.f32 %v2675, 0.0
      %v2766 = vmax.f32 %v2678, 0.0
      %v2767 = vmax.f32 %v2683, 0.0
      %v2768 = vmax.f32 %v2686, 0.0
      %v2769 = vmax.f32 %v2691, 0.0
      %v2770 = vmax.f32 %v2694, 0.0
      %v2771 = vmax.f32 %v2699, 0.0
      %v2772 = vmax.f32 %v2702, 0.0
      %v2773 = vmax.f32 %v2707, 0.0
      %v2774 = vmax.f32 %v2710, 0.0
      %v2775 = vmax.f32 %v2715, 0.0
      %v2776 = vmax.f32 %v2718, 0.0
      %v2777 = vmax.f32 %v2723, 0.0
      %v2778 = vmax.f32 %v2726, 0.0
      %v2779 = vmax.f32 %v2731, 0.0
      %v2780 = vmax.f32 %v2734, 0.0
      %v2781 = vmax.f32 %v2739, 0.0
      %v2782 = vmax.f32 %v2742, 0.0
      %v2783 = vmax.f32 %v2747, 0.0
      %v2784 = vmax.f32 %v2750, 0.0
      %v2785 = vpack.c.bf16 %v2754, %v2753
      %v2786 = vpack.c.bf16 %v2756, %v2755
      %v2787 = vpack.c.bf16 %v2758, %v2757
      %v2788 = vpack.c.bf16 %v2760, %v2759
      %v2789 = vpack.c.bf16 %v2762, %v2761
      %v2790 = vpack.c.bf16 %v2764, %v2763
      %v2791 = vpack.c.bf16 %v2766, %v2765
      %v2792 = vpack.c.bf16 %v2768, %v2767
      %v2793 = vpack.c.bf16 %v2770, %v2769
      %v2794 = vpack.c.bf16 %v2772, %v2771
      %v2795 = vpack.c.bf16 %v2774, %v2773
      %v2796 = vpack.c.bf16 %v2776, %v2775
      %v2797 = vpack.c.bf16 %v2778, %v2777
      %v2798 = vpack.c.bf16 %v2780, %v2779
      %v2799 = vpack.c.bf16 %v2782, %v2781
      %v2800 = vpack.c.bf16 %v2784, %v2783
      %vm2801 = vcmask 60416
      %2802 = vst.msk [vmem:[%s217] sm:$0xf] %vm2801, 0
      %2803 = vst.msk [vmem:[%s217 + $0x4] sm:$0xf] %vm2801, 0
      %vm2804 = vcmask 57344
      %2805 = vst.msk [vmem:[%s217 + $0x8] sm:$0x1] %vm2804, 0
      %2806 = vst.msk [vmem:[%s217 + $0xc] sm:$0xf] %vm2801, 0
      %2807 = vst.msk [vmem:[%s217 + $0x10] sm:$0xf] %vm2801, 0
      %2808 = vst.msk [vmem:[%s217 + $0x14] sm:$0x1] %vm2804, 0
      %2809 = vst.msk [vmem:[%s217 + $0x18] sm:$0xf] %vm2801, 0
      %2810 = vst.msk [vmem:[%s217 + $0x1c] sm:$0xf] %vm2801, 0
      %2811 = vst.msk [vmem:[%s217 + $0x20] sm:$0x1] %vm2804, 0
      %2812 = vst.msk [vmem:[%s217 + $0x24] sm:$0xf] %vm2801, 0
      %2813 = vst.msk [vmem:[%s217 + $0x28] sm:$0xf] %vm2801, 0
      %2814 = vst.msk [vmem:[%s217 + $0x2c] sm:$0x1] %vm2804, 0
      %2815 = vst.msk [vmem:[%s217 + $0x30] sm:$0xf] %vm2801, 0
      %2816 = vst.msk [vmem:[%s217 + $0x34] sm:$0xf] %vm2801, 0
      %2817 = vst.msk [vmem:[%s217 + $0x38] sm:$0x1] %vm2804, 0
      %2818 = vst.msk [vmem:[%s217 + $0x3c] sm:$0xf] %vm2801, 0
      %2819 = vst.msk [vmem:[%s217 + $0x40] sm:$0xf] %vm2801, 0
      %2820 = vst.msk [vmem:[%s217 + $0x44] sm:$0x1] %vm2804, 0
      %2821 = vst.msk [vmem:[%s217 + $0x48] sm:$0xf] %vm2801, 0
      %2822 = vst.msk [vmem:[%s217 + $0x4c] sm:$0xf] %vm2801, 0
      %2823 = vst.msk [vmem:[%s217 + $0x50] sm:$0x1] %vm2804, 0
      %2824 = vst.msk [vmem:[%s217 + $0x54] sm:$0xf] %vm2801, 0
      %2825 = vst.msk [vmem:[%s217 + $0x58] sm:$0xf] %vm2801, 0
      %2826 = vst.msk [vmem:[%s217 + $0x5c] sm:$0x1] %vm2804, 0
      %2827 = vst.msk [vmem:[%s217 + $0x60] sm:$0xf] %vm2801, 0
      %2828 = vst.msk [vmem:[%s217 + $0x64] sm:$0xf] %vm2801, 0
      %2829 = vst.msk [vmem:[%s217 + $0x68] sm:$0x1] %vm2804, 0
      %2830 = vst.msk [vmem:[%s217 + $0x6c] sm:$0xf] %vm2801, 0
      %2831 = vst.msk [vmem:[%s217 + $0x70] sm:$0xf] %vm2801, 0
      %2832 = vst.msk [vmem:[%s217 + $0x74] sm:$0x1] %vm2804, 0
      %2833 = vst.msk [vmem:[%s217 + $0x78] sm:$0xf] %vm2801, 0
      %2834 = vst.msk [vmem:[%s217 + $0x7c] sm:$0xf] %vm2801, 0
      %2835 = vst.msk [vmem:[%s217 + $0x80] sm:$0x1] %vm2804, 0
      %2836 = vst.msk [vmem:[%s217 + $0x84] sm:$0xf] %vm2801, 0
      %2837 = vst.msk [vmem:[%s217 + $0x88] sm:$0xf] %vm2801, 0
      %2838 = vst.msk [vmem:[%s217 + $0x8c] sm:$0x1] %vm2804, 0
      %2839 = vst.msk [vmem:[%s217 + $0x90] sm:$0xf] %vm2801, 0
      %2840 = vst.msk [vmem:[%s217 + $0x94] sm:$0xf] %vm2801, 0
      %2841 = vst.msk [vmem:[%s217 + $0x98] sm:$0x1] %vm2804, 0
      %2842 = vst.msk [vmem:[%s217 + $0x9c] sm:$0xf] %vm2801, 0
      %2843 = vst.msk [vmem:[%s217 + $0xa0] sm:$0xf] %vm2801, 0
      %2844 = vst.msk [vmem:[%s217 + $0xa4] sm:$0x1] %vm2804, 0
      %2845 = vst.msk [vmem:[%s217 + $0xa8] sm:$0xf] %vm2801, 0
      %2846 = vst.msk [vmem:[%s217 + $0xac] sm:$0xf] %vm2801, 0
      %2847 = vst.msk [vmem:[%s217 + $0xb0] sm:$0x1] %vm2804, 0
      %2848 = vst.msk [vmem:[%s217 + $0xb4] sm:$0xf] %vm2801, 0
      %2849 = vst.msk [vmem:[%s217 + $0xb8] sm:$0xf] %vm2801, 0
      %2850 = vst.msk [vmem:[%s217 + $0xbc] sm:$0x1] %vm2804, 0
      %2851 = vst.msk [vmem:[%s217 + $0xc0] sm:$0xf] %vm2801, 0
      %2852 = vst.msk [vmem:[%s217 + $0xc4] sm:$0xf] %vm2801, 0
      %2853 = vst.msk [vmem:[%s217 + $0xc8] sm:$0x1] %vm2804, 0
      %2854 = vst.msk [vmem:[%s217 + $0xcc] sm:$0xf] %vm2801, 0
      %2855 = vst.msk [vmem:[%s217 + $0xd0] sm:$0xf] %vm2801, 0
      %2856 = vst.msk [vmem:[%s217 + $0xd4] sm:$0x1] %vm2804, 0
      %v2873 = vunpack.c.l.b16 %v2785
      %v2874 = vunpack.c.h.b16 %v2785
      %v2875 = vunpack.c.l.b16 %v2786
      %v2876 = vunpack.c.h.b16 %v2786
      %v2877 = vunpack.c.l.b16 %v2787
      %v2878 = vunpack.c.h.b16 %v2787
      %v2879 = vunpack.c.l.b16 %v2788
      %v2880 = vunpack.c.h.b16 %v2788
      %v2881 = vunpack.c.l.b16 %v2789
      %v2882 = vunpack.c.h.b16 %v2789
      %v2883 = vunpack.c.l.b16 %v2790
      %v2884 = vunpack.c.h.b16 %v2790
      %v2885 = vunpack.c.l.b16 %v2791
      %v2886 = vunpack.c.h.b16 %v2791
      %v2887 = vunpack.c.l.b16 %v2792
      %v2888 = vunpack.c.h.b16 %v2792
      %v2889 = vunpack.c.l.b16 %v2793
      %v2890 = vunpack.c.h.b16 %v2793
      %v2891 = vunpack.c.l.b16 %v2794
      %v2892 = vunpack.c.h.b16 %v2794
      %v2893 = vunpack.c.l.b16 %v2795
      %v2894 = vunpack.c.h.b16 %v2795
      %v2895 = vunpack.c.l.b16 %v2796
      %v2896 = vunpack.c.h.b16 %v2796
      %v2897 = vunpack.c.l.b16 %v2797
      %v2898 = vunpack.c.h.b16 %v2797
      %v2899 = vunpack.c.l.b16 %v2798
      %v2900 = vunpack.c.h.b16 %v2798
      %v2901 = vunpack.c.l.b16 %v2799
      %v2902 = vunpack.c.h.b16 %v2799
      %v2903 = vunpack.c.l.b16 %v2800
      %v2904 = vunpack.c.h.b16 %v2800
      %v2905 = vpack.c.b16 %v2873, %v2873
      %v2906 = vpack.c.b16 %v2874, %v2874
      %v2907 = vpack.c.b16 %v2875, %v2875
      %v2908 = vpack.c.b16 %v2876, %v2876
      %v2909 = vpack.c.b16 %v2877, %v2877
      %v2910 = vpack.c.b16 %v2878, %v2878
      %v2911 = vpack.c.b16 %v2879, %v2879
      %v2912 = vpack.c.b16 %v2880, %v2880
      %v2913 = vpack.c.b16 %v2881, %v2881
      %v2914 = vpack.c.b16 %v2882, %v2882
      %v2915 = vpack.c.b16 %v2883, %v2883
      %v2916 = vpack.c.b16 %v2884, %v2884
      %v2917 = vpack.c.b16 %v2885, %v2885
      %v2918 = vpack.c.b16 %v2886, %v2886
      %v2919 = vpack.c.b16 %v2887, %v2887
      %v2920 = vpack.c.b16 %v2888, %v2888
      %v2921 = vpack.c.b16 %v2889, %v2889
      %v2922 = vpack.c.b16 %v2890, %v2890
      %v2923 = vpack.c.b16 %v2891, %v2891
      %v2924 = vpack.c.b16 %v2892, %v2892
      %v2925 = vpack.c.b16 %v2893, %v2893
      %v2926 = vpack.c.b16 %v2894, %v2894
      %v2927 = vpack.c.b16 %v2895, %v2895
      %v2928 = vpack.c.b16 %v2896, %v2896
      %v2929 = vpack.c.b16 %v2897, %v2897
      %v2930 = vpack.c.b16 %v2898, %v2898
      %v2931 = vpack.c.b16 %v2899, %v2899
      %v2932 = vpack.c.b16 %v2900, %v2900
      %v2933 = vpack.c.b16 %v2901, %v2901
      %v2934 = vpack.c.b16 %v2902, %v2902
      %v2935 = vpack.c.b16 %v2903, %v2903
      %v2936 = vpack.c.b16 %v2904, %v2904
      %vm2937 = vsmask.f32 256
      %vm2938 = vsmask.f32 4368
      %vm2939 = vmor %vm2937, %vm2938
      %v2941 = vshrl.u32 %v2905, 16
      %v2943 = vrot.slane %v2941, 7
      %v2944 = vshll.u32 %v2905, 16
      %v2946 = vor.u32 %v2943, %v2944
      %v2947 = vrot.slane %v2943, 4
      %v2949 = vshrl.u32 %v2906, 16
      %v2951 = vrot.slane %v2949, 7
      %v2952 = vshll.u32 %v2906, 16
      %v2954 = vor.u32 %v2951, %v2952
      %v2955 = vsel %vm2939, %v2947, %v2954
      %v2956 = vrot.slane %v2951, 4
      %v2958 = vshrl.u32 %v2907, 16
      %v2960 = vrot.slane %v2958, 7
      %v2961 = vshll.u32 %v2907, 16
      %v2963 = vor.u32 %v2960, %v2961
      %v2964 = vrot.slane %v2960, 4
      %v2966 = vshrl.u32 %v2908, 16
      %v2968 = vrot.slane %v2966, 7
      %v2969 = vshll.u32 %v2908, 16
      %v2971 = vor.u32 %v2968, %v2969
      %v2972 = vsel %vm2939, %v2964, %v2971
      %v2973 = vrot.slane %v2968, 4
      %v2975 = vshrl.u32 %v2909, 16
      %v2977 = vrot.slane %v2975, 7
      %v2978 = vshll.u32 %v2909, 16
      %v2980 = vor.u32 %v2977, %v2978
      %v2981 = vrot.slane %v2977, 4
      %v2983 = vshrl.u32 %v2910, 16
      %v2985 = vrot.slane %v2983, 7
      %v2986 = vshll.u32 %v2910, 16
      %v2988 = vor.u32 %v2985, %v2986
      %v2989 = vsel %vm2939, %v2981, %v2988
      %v2990 = vrot.slane %v2985, 4
      %v2992 = vshrl.u32 %v2911, 16
      %v2994 = vrot.slane %v2992, 7
      %v2995 = vshll.u32 %v2911, 16
      %v2997 = vor.u32 %v2994, %v2995
      %v2998 = vrot.slane %v2994, 4
      %v3000 = vshrl.u32 %v2912, 16
      %v3002 = vrot.slane %v3000, 7
      %v3003 = vshll.u32 %v2912, 16
      %v3005 = vor.u32 %v3002, %v3003
      %v3006 = vsel %vm2939, %v2998, %v3005
      %v3007 = vrot.slane %v3002, 4
      %v3009 = vshrl.u32 %v2913, 16
      %v3011 = vrot.slane %v3009, 7
      %v3012 = vshll.u32 %v2913, 16
      %v3014 = vor.u32 %v3011, %v3012
      %v3015 = vrot.slane %v3011, 4
      %v3017 = vshrl.u32 %v2914, 16
      %v3019 = vrot.slane %v3017, 7
      %v3020 = vshll.u32 %v2914, 16
      %v3022 = vor.u32 %v3019, %v3020
      %v3023 = vsel %vm2939, %v3015, %v3022
      %v3024 = vrot.slane %v3019, 4
      %v3026 = vshrl.u32 %v2915, 16
      %v3028 = vrot.slane %v3026, 7
      %v3029 = vshll.u32 %v2915, 16
      %v3031 = vor.u32 %v3028, %v3029
      %v3032 = vrot.slane %v3028, 4
      %v3034 = vshrl.u32 %v2916, 16
      %v3036 = vrot.slane %v3034, 7
      %v3037 = vshll.u32 %v2916, 16
      %v3039 = vor.u32 %v3036, %v3037
      %v3040 = vsel %vm2939, %v3032, %v3039
      %v3041 = vrot.slane %v3036, 4
      %v3043 = vshrl.u32 %v2917, 16
      %v3045 = vrot.slane %v3043, 7
      %v3046 = vshll.u32 %v2917, 16
      %v3048 = vor.u32 %v3045, %v3046
      %v3049 = vrot.slane %v3045, 4
      %v3051 = vshrl.u32 %v2918, 16
      %v3053 = vrot.slane %v3051, 7
      %v3054 = vshll.u32 %v2918, 16
      %v3056 = vor.u32 %v3053, %v3054
      %v3057 = vsel %vm2939, %v3049, %v3056
      %v3058 = vrot.slane %v3053, 4
      %v3060 = vshrl.u32 %v2919, 16
      %v3062 = vrot.slane %v3060, 7
      %v3063 = vshll.u32 %v2919, 16
      %v3065 = vor.u32 %v3062, %v3063
      %v3066 = vrot.slane %v3062, 4
      %v3068 = vshrl.u32 %v2920, 16
      %v3070 = vrot.slane %v3068, 7
      %v3071 = vshll.u32 %v2920, 16
      %v3073 = vor.u32 %v3070, %v3071
      %v3074 = vsel %vm2939, %v3066, %v3073
      %v3075 = vrot.slane %v3070, 4
      %v3077 = vshrl.u32 %v2921, 16
      %v3079 = vrot.slane %v3077, 7
      %v3080 = vshll.u32 %v2921, 16
      %v3082 = vor.u32 %v3079, %v3080
      %v3083 = vrot.slane %v3079, 4
      %v3085 = vshrl.u32 %v2922, 16
      %v3087 = vrot.slane %v3085, 7
      %v3088 = vshll.u32 %v2922, 16
      %v3090 = vor.u32 %v3087, %v3088
      %v3091 = vsel %vm2939, %v3083, %v3090
      %v3092 = vrot.slane %v3087, 4
      %v3094 = vshrl.u32 %v2923, 16
      %v3096 = vrot.slane %v3094, 7
      %v3097 = vshll.u32 %v2923, 16
      %v3099 = vor.u32 %v3096, %v3097
      %v3100 = vrot.slane %v3096, 4
      %v3102 = vshrl.u32 %v2924, 16
      %v3104 = vrot.slane %v3102, 7
      %v3105 = vshll.u32 %v2924, 16
      %v3107 = vor.u32 %v3104, %v3105
      %v3108 = vsel %vm2939, %v3100, %v3107
      %v3109 = vrot.slane %v3104, 4
      %v3111 = vshrl.u32 %v2925, 16
      %v3113 = vrot.slane %v3111, 7
      %v3114 = vshll.u32 %v2925, 16
      %v3116 = vor.u32 %v3113, %v3114
      %v3117 = vrot.slane %v3113, 4
      %v3119 = vshrl.u32 %v2926, 16
      %v3121 = vrot.slane %v3119, 7
      %v3122 = vshll.u32 %v2926, 16
      %v3124 = vor.u32 %v3121, %v3122
      %v3125 = vsel %vm2939, %v3117, %v3124
      %v3126 = vrot.slane %v3121, 4
      %v3128 = vshrl.u32 %v2927, 16
      %v3130 = vrot.slane %v3128, 7
      %v3131 = vshll.u32 %v2927, 16
      %v3133 = vor.u32 %v3130, %v3131
      %v3134 = vrot.slane %v3130, 4
      %v3136 = vshrl.u32 %v2928, 16
      %v3138 = vrot.slane %v3136, 7
      %v3139 = vshll.u32 %v2928, 16
      %v3141 = vor.u32 %v3138, %v3139
      %v3142 = vsel %vm2939, %v3134, %v3141
      %v3143 = vrot.slane %v3138, 4
      %v3145 = vshrl.u32 %v2929, 16
      %v3147 = vrot.slane %v3145, 7
      %v3148 = vshll.u32 %v2929, 16
      %v3150 = vor.u32 %v3147, %v3148
      %v3151 = vrot.slane %v3147, 4
      %v3153 = vshrl.u32 %v2930, 16
      %v3155 = vrot.slane %v3153, 7
      %v3156 = vshll.u32 %v2930, 16
      %v3158 = vor.u32 %v3155, %v3156
      %v3159 = vsel %vm2939, %v3151, %v3158
      %v3160 = vrot.slane %v3155, 4
      %v3162 = vshrl.u32 %v2931, 16
      %v3164 = vrot.slane %v3162, 7
      %v3165 = vshll.u32 %v2931, 16
      %v3167 = vor.u32 %v3164, %v3165
      %v3168 = vrot.slane %v3164, 4
      %v3170 = vshrl.u32 %v2932, 16
      %v3172 = vrot.slane %v3170, 7
      %v3173 = vshll.u32 %v2932, 16
      %v3175 = vor.u32 %v3172, %v3173
      %v3176 = vsel %vm2939, %v3168, %v3175
      %v3177 = vrot.slane %v3172, 4
      %v3179 = vshrl.u32 %v2933, 16
      %v3181 = vrot.slane %v3179, 7
      %v3182 = vshll.u32 %v2933, 16
      %v3184 = vor.u32 %v3181, %v3182
      %v3185 = vrot.slane %v3181, 4
      %v3187 = vshrl.u32 %v2934, 16
      %v3189 = vrot.slane %v3187, 7
      %v3190 = vshll.u32 %v2934, 16
      %v3192 = vor.u32 %v3189, %v3190
      %v3193 = vsel %vm2939, %v3185, %v3192
      %v3194 = vrot.slane %v3189, 4
      %v3196 = vshrl.u32 %v2935, 16
      %v3198 = vrot.slane %v3196, 7
      %v3199 = vshll.u32 %v2935, 16
      %v3201 = vor.u32 %v3198, %v3199
      %v3202 = vrot.slane %v3198, 4
      %v3204 = vshrl.u32 %v2936, 16
      %v3206 = vrot.slane %v3204, 7
      %v3207 = vshll.u32 %v2936, 16
      %v3209 = vor.u32 %v3206, %v3207
      %v3210 = vsel %vm2939, %v3202, %v3209
      %v3211 = vrot.slane %v3206, 4
      %s3260 = scalar_lea.vmem %s217, 12
      %vm3261 = vcmask 60416
      %vm3262 = vsmask.f32 7938
      %vm3263 = vmand %vm3261, %vm3262
      %v3264 = vld [vmem:[%s3260] sm:$0xf]
      %v3265 = vsel %vm3263, %v2946, %v3264
      %3266 = vst [vmem:[%s3260] sm:$0xf] %v3265
      %3267 = vst.msk [vmem:[%s3260 + $0x4] sm:$0xf] %vm2801, %v2955
      %vm3268 = vcmask 57344
      %vm3269 = vmand %vm3268, %vm2937
      %v3270 = vld [vmem:[%s3260 + $0x8] sm:$0x1]
      %v3271 = vsel %vm3269, %v2956, %v3270
      %3272 = vst [vmem:[%s3260 + $0x8] sm:$0x1] %v3271
      %v3273 = vld [vmem:[%s3260 + $0xc] sm:$0xf]
      %v3274 = vsel %vm3263, %v2963, %v3273
      %3275 = vst [vmem:[%s3260 + $0xc] sm:$0xf] %v3274
      %3276 = vst.msk [vmem:[%s3260 + $0x10] sm:$0xf] %vm2801, %v2972
      %v3277 = vld [vmem:[%s3260 + $0x14] sm:$0x1]
      %v3278 = vsel %vm3269, %v2973, %v3277
      %3279 = vst [vmem:[%s3260 + $0x14] sm:$0x1] %v3278
      %v3280 = vld [vmem:[%s3260 + $0x18] sm:$0xf]
      %v3281 = vsel %vm3263, %v2980, %v3280
      %3282 = vst [vmem:[%s3260 + $0x18] sm:$0xf] %v3281
      %3283 = vst.msk [vmem:[%s3260 + $0x1c] sm:$0xf] %vm2801, %v2989
      %v3284 = vld [vmem:[%s3260 + $0x20] sm:$0x1]
      %v3285 = vsel %vm3269, %v2990, %v3284
      %3286 = vst [vmem:[%s3260 + $0x20] sm:$0x1] %v3285
      %v3287 = vld [vmem:[%s3260 + $0x24] sm:$0xf]
      %v3288 = vsel %vm3263, %v2997, %v3287
      %3289 = vst [vmem:[%s3260 + $0x24] sm:$0xf] %v3288
      %3290 = vst.msk [vmem:[%s3260 + $0x28] sm:$0xf] %vm2801, %v3006
      %v3291 = vld [vmem:[%s3260 + $0x2c] sm:$0x1]
      %v3292 = vsel %vm3269, %v3007, %v3291
      %3293 = vst [vmem:[%s3260 + $0x2c] sm:$0x1] %v3292
      %v3294 = vld [vmem:[%s3260 + $0x30] sm:$0xf]
      %v3295 = vsel %vm3263, %v3014, %v3294
      %3296 = vst [vmem:[%s3260 + $0x30] sm:$0xf] %v3295
      %3297 = vst.msk [vmem:[%s3260 + $0x34] sm:$0xf] %vm2801, %v3023
      %v3298 = vld [vmem:[%s3260 + $0x38] sm:$0x1]
      %v3299 = vsel %vm3269, %v3024, %v3298
      %3300 = vst [vmem:[%s3260 + $0x38] sm:$0x1] %v3299
      %v3301 = vld [vmem:[%s3260 + $0x3c] sm:$0xf]
      %v3302 = vsel %vm3263, %v3031, %v3301
      %3303 = vst [vmem:[%s3260 + $0x3c] sm:$0xf] %v3302
      %3304 = vst.msk [vmem:[%s3260 + $0x40] sm:$0xf] %vm2801, %v3040
      %v3305 = vld [vmem:[%s3260 + $0x44] sm:$0x1]
      %v3306 = vsel %vm3269, %v3041, %v3305
      %3307 = vst [vmem:[%s3260 + $0x44] sm:$0x1] %v3306
      %v3308 = vld [vmem:[%s3260 + $0x48] sm:$0xf]
      %v3309 = vsel %vm3263, %v3048, %v3308
      %3310 = vst [vmem:[%s3260 + $0x48] sm:$0xf] %v3309
      %3311 = vst.msk [vmem:[%s3260 + $0x4c] sm:$0xf] %vm2801, %v3057
      %v3312 = vld [vmem:[%s3260 + $0x50] sm:$0x1]
      %v3313 = vsel %vm3269, %v3058, %v3312
      %3314 = vst [vmem:[%s3260 + $0x50] sm:$0x1] %v3313
      %v3315 = vld [vmem:[%s3260 + $0x54] sm:$0xf]
      %v3316 = vsel %vm3263, %v3065, %v3315
      %3317 = vst [vmem:[%s3260 + $0x54] sm:$0xf] %v3316
      %3318 = vst.msk [vmem:[%s3260 + $0x58] sm:$0xf] %vm2801, %v3074
      %v3319 = vld [vmem:[%s3260 + $0x5c] sm:$0x1]
      %v3320 = vsel %vm3269, %v3075, %v3319
      %3321 = vst [vmem:[%s3260 + $0x5c] sm:$0x1] %v3320
      %v3322 = vld [vmem:[%s3260 + $0x60] sm:$0xf]
      %v3323 = vsel %vm3263, %v3082, %v3322
      %3324 = vst [vmem:[%s3260 + $0x60] sm:$0xf] %v3323
      %3325 = vst.msk [vmem:[%s3260 + $0x64] sm:$0xf] %vm2801, %v3091
      %v3326 = vld [vmem:[%s3260 + $0x68] sm:$0x1]
      %v3327 = vsel %vm3269, %v3092, %v3326
      %3328 = vst [vmem:[%s3260 + $0x68] sm:$0x1] %v3327
      %v3329 = vld [vmem:[%s3260 + $0x6c] sm:$0xf]
      %v3330 = vsel %vm3263, %v3099, %v3329
      %3331 = vst [vmem:[%s3260 + $0x6c] sm:$0xf] %v3330
      %3332 = vst.msk [vmem:[%s3260 + $0x70] sm:$0xf] %vm2801, %v3108
      %v3333 = vld [vmem:[%s3260 + $0x74] sm:$0x1]
      %v3334 = vsel %vm3269, %v3109, %v3333
      %3335 = vst [vmem:[%s3260 + $0x74] sm:$0x1] %v3334
      %v3336 = vld [vmem:[%s3260 + $0x78] sm:$0xf]
      %v3337 = vsel %vm3263, %v3116, %v3336
      %3338 = vst [vmem:[%s3260 + $0x78] sm:$0xf] %v3337
      %3339 = vst.msk [vmem:[%s3260 + $0x7c] sm:$0xf] %vm2801, %v3125
      %v3340 = vld [vmem:[%s3260 + $0x80] sm:$0x1]
      %v3341 = vsel %vm3269, %v3126, %v3340
      %3342 = vst [vmem:[%s3260 + $0x80] sm:$0x1] %v3341
      %v3343 = vld [vmem:[%s3260 + $0x84] sm:$0xf]
      %v3344 = vsel %vm3263, %v3133, %v3343
      %3345 = vst [vmem:[%s3260 + $0x84] sm:$0xf] %v3344
      %3346 = vst.msk [vmem:[%s3260 + $0x88] sm:$0xf] %vm2801, %v3142
      %v3347 = vld [vmem:[%s3260 + $0x8c] sm:$0x1]
      %v3348 = vsel %vm3269, %v3143, %v3347
      %3349 = vst [vmem:[%s3260 + $0x8c] sm:$0x1] %v3348
      %v3350 = vld [vmem:[%s3260 + $0x90] sm:$0xf]
      %v3351 = vsel %vm3263, %v3150, %v3350
      %3352 = vst [vmem:[%s3260 + $0x90] sm:$0xf] %v3351
      %3353 = vst.msk [vmem:[%s3260 + $0x94] sm:$0xf] %vm2801, %v3159
      %v3354 = vld [vmem:[%s3260 + $0x98] sm:$0x1]
      %v3355 = vsel %vm3269, %v3160, %v3354
      %3356 = vst [vmem:[%s3260 + $0x98] sm:$0x1] %v3355
      %v3357 = vld [vmem:[%s3260 + $0x9c] sm:$0xf]
      %v3358 = vsel %vm3263, %v3167, %v3357
      %3359 = vst [vmem:[%s3260 + $0x9c] sm:$0xf] %v3358
      %3360 = vst.msk [vmem:[%s3260 + $0xa0] sm:$0xf] %vm2801, %v3176
      %v3361 = vld [vmem:[%s3260 + $0xa4] sm:$0x1]
      %v3362 = vsel %vm3269, %v3177, %v3361
      %3363 = vst [vmem:[%s3260 + $0xa4] sm:$0x1] %v3362
      %v3364 = vld [vmem:[%s3260 + $0xa8] sm:$0xf]
      %v3365 = vsel %vm3263, %v3184, %v3364
      %3366 = vst [vmem:[%s3260 + $0xa8] sm:$0xf] %v3365
      %3367 = vst.msk [vmem:[%s3260 + $0xac] sm:$0xf] %vm2801, %v3193
      %v3368 = vld [vmem:[%s3260 + $0xb0] sm:$0x1]
      %v3369 = vsel %vm3269, %v3194, %v3368
      %3370 = vst [vmem:[%s3260 + $0xb0] sm:$0x1] %v3369
      %v3371 = vld [vmem:[%s3260 + $0xb4] sm:$0xf]
      %v3372 = vsel %vm3263, %v3201, %v3371
      %3373 = vst [vmem:[%s3260 + $0xb4] sm:$0xf] %v3372
      %3374 = vst.msk [vmem:[%s3260 + $0xb8] sm:$0xf] %vm2801, %v3210
      %v3375 = vld [vmem:[%s3260 + $0xbc] sm:$0x1]
      %v3376 = vsel %vm3269, %v3211, %v3375
      %3377 = vst [vmem:[%s3260 + $0xbc] sm:$0x1] %v3376
      %p3378 = scmp.lt.s32.totalorder %s15, 1
      %s3379 = scalar_select %p3378, %s15, 1
      %s3380 = smul.addr %s3379, 54
      %s3381 = smul.addr %s3380, 4
      %s3382 = scalar_lea.vmem %s4, %s3381
      // Predicated region
      $region37: #{unet_upsample_forward.4} parent=35 // pred_check
        %p3383 = pneg %p127
      $region38: #{unet_upsample_forward.4} parent=35 // pred_check_branch
        %3385 = sbr.rel (%p3383) target = $region40
      $region39: #{unet_upsample_forward.4} parent=35 // pred_region
        _
      $region40: #{unet_upsample_forward.4} parent=35 // pred_fallthru
        _
    $region36: #{unet_upsample_forward.4} parent=5 // pred_fallthru
      _
    %p3386 = scmp.le.s32.totalorder 2, %s10
    // Predicated region
    $region41: #{unet_upsample_forward.4} parent=5 // pred_check
      %p3387 = pneg %p3386
    $region42: #{unet_upsample_forward.4} parent=5 // pred_check_branch
      %3389 = sbr.rel (%p3387) target = $region44
    $region43: #{unet_upsample_forward.4} parent=5 // pred_region
      %s3390 = ssub.s32 %s10, 2
      // Predicated region
      $region45: #{unet_upsample_forward.4} parent=43 // pred_check
        %p3391 = pneg %p133
      $region46: #{unet_upsample_forward.4} parent=43 // pred_check_branch
        %3393 = sbr.rel (%p3391) target = $region48
      $region47: #{unet_upsample_forward.4} parent=43 // pred_region
        %p3394 = scmp.lt.s32.totalorder %s16, 1
        %s3395 = scalar_select %p3394, %s16, 1
        %s3396 = smul.addr %s3395, 54
        %s3397 = smul.addr %s3396, 4
        %s3398 = scalar_lea.vmem %s4, %s3397
      $region48: #{unet_upsample_forward.4} parent=43 // pred_fallthru
        _
    $region44: #{unet_upsample_forward.4} parent=5 // pred_fallthru
      _
  $region6: #{unet_upsample_forward.4} parent=0 // loop_footer
    %s14 = sadd.s32 1, %s10
  $region7: #{unet_upsample_forward.4} parent=0 // loop_footer_branch
    %9 = sbr.rel target = $region3
  $region8: #{unet_upsample_forward.4} parent=0 // loop_exit
    _

</llo_original>
